<compile_context>
chip_gen: v6e
topology: v6e:2x2x1
jax: 0.10.0
libtpu: 0.0.40
codegen_flags: <defaults>
</compile_context>

<pallas_src>
import math

import jax
import jax.numpy as jnp
from jax import lax
from jax.experimental import pallas as pl
from jax.experimental.pallas import tpu as pltpu


# ----------------------------------------------------------------------------
# shared math
# ----------------------------------------------------------------------------
def _leaky_relu(z):
    return jnp.where(z > 0, z, 0.01 * z)


def _lstm_cell_ref(x_t, h, c, w_ih, w_hh, b, mm):
    """Reference LSTM cell (PyTorch gate order i, f, g, o)."""
    H = h.shape[-1]
    gates = mm(x_t, w_ih) + mm(h, w_hh) + b
    i = jax.nn.sigmoid(gates[:, 0:H])
    f = jax.nn.sigmoid(gates[:, H:2 * H])
    g = jnp.tanh(gates[:, 2 * H:3 * H])
    o = jax.nn.sigmoid(gates[:, 3 * H:4 * H])
    c_new = f * c + i * g
    h_new = o * jnp.tanh(c_new)
    return h_new, c_new


# ----------------------------------------------------------------------------
# fused Pallas kernel (whole MultiTaskLSTM forward, one instance per grid step)
# ----------------------------------------------------------------------------
def _make_kernel(*, num_layers, seq_len, out_seq_len, hidden, batch, use_bf16):
    L, H, S, B = num_layers, hidden, seq_len, batch

    def mm(a, b):
        if use_bf16:
            if a.dtype != jnp.bfloat16:
                a = a.astype(jnp.bfloat16)
            if b.dtype != jnp.bfloat16:
                b = b.astype(jnp.bfloat16)
        return jnp.dot(a, b, preferred_element_type=jnp.float32)

    def mm_nt(a, b):  # a @ b.T without materializing the transpose
        if use_bf16:
            a = a.astype(jnp.bfloat16)
            b = b.astype(jnp.bfloat16)
        return lax.dot_general(a, b, (((1,), (1,)), ((), ())),
                               preferred_element_type=jnp.float32)

    def cell(gates, c):
        # one sigmoid + one tanh over the whole [B, 4H] vreg, then slice lanes
        sig = jax.nn.sigmoid(gates)
        th = jnp.tanh(gates)
        i = sig[:, 0:H]
        f = sig[:, H:2 * H]
        o = sig[:, 3 * H:4 * H]
        g = th[:, 2 * H:3 * H]
        c_new = f * c + i * g
        h_new = o * jnp.tanh(c_new)
        return h_new, c_new

    def kernel(*refs):
        x_ref = refs[0]                                   # [S*B, In] (time-major)
        idx = 1
        enc_refs = [(refs[idx + 3 * l], refs[idx + 3 * l + 1], refs[idx + 3 * l + 2])
                    for l in range(L)]
        idx += 3 * L
        dec_refs = [(refs[idx + 2 * l], refs[idx + 2 * l + 1]) for l in range(L)]
        idx += 2 * L
        # hoist: every weight / bias is loaded exactly once
        (fc1_w, fc1_b, wqkv, bqkv, wo, bo,
         w1, b1, w2, b2, w3, b3) = (r[...] for r in refs[idx:idx + 12])
        out_ref = refs[idx + 12]                          # [B, out_seq*T]

        enc_w = [(w[...], u[...], b[...]) for (w, u, b) in enc_refs]
        dec_w = [(w[...], b[...]) for (w, b) in dec_refs]

        # ----------------- encoder: layer-major stacked LSTM ------------------
        x_all = x_ref[...]                                # [S*B, In]
        layer_in = x_all
        h = [None] * L
        c = [None] * L
        for l in range(L):
            w_ih, w_hh, b = enc_w[l]
            # input-to-hidden projection for ALL timesteps in one matmul
            xproj = mm(layer_in, w_ih) + b                # [S*B, 4H]
            h_l = jnp.zeros((B, H), jnp.float32)
            c_l = jnp.zeros((B, H), jnp.float32)
            outs = []
            for t in range(S):
                gates = xproj[t * B:(t + 1) * B, :] + mm(h_l, w_hh)
                h_l, c_l = cell(gates, c_l)
                outs.append(h_l)
            h[l], c[l] = h_l, c_l
            layer_in = jnp.concatenate(outs, axis=0)      # [S*B, H] -> next layer

        # decoder state = encoder final state; first decoder input = last x step
        dec_in = x_all[(S - 1) * B:S * B, :]              # [B, In]

        # ----------------- decoder: out_seq_len fused steps -------------------
        step_outs = []
        for step in range(out_seq_len):
            inp = dec_in
            for l in range(L):
                wcat, b = dec_w[l]                        # [in_l + H, 4H]
                gates = mm(jnp.concatenate([inp, h[l]], axis=1), wcat) + b
                h[l], c[l] = cell(gates, c[l])
                inp = h[l]

            # q = k = v = LeakyReLU(fc1(h_top))
            qkv = _leaky_relu(mm(inp, fc1_w) + fc1_b)

            # fused q|k|v projection (1/sqrt(H) already folded into the q columns)
            proj = mm(qkv, wqkv) + bqkv                   # [B, 3H]
            q = proj[:, 0:H]
            k = proj[:, H:2 * H]
            v = proj[:, 2 * H:3 * H]

            # single-head attention (mixes across the batch axis, see header)
            scores = mm_nt(q, k)                          # [B, B]
            scores = scores - jnp.max(scores, axis=-1, keepdims=True)
            e = jnp.exp(scores)
            attn = e * pl.reciprocal(jnp.sum(e, axis=-1, keepdims=True), approx=True)
            a_out = mm(mm(attn, v), wo) + bo

            # all task heads batched into three matmuls (concat / block-diag)
            h1 = jnp.maximum(mm(a_out, w1) + b1, 0.0)
            h2 = jnp.maximum(mm(h1, w2) + b2, 0.0)
            h3 = jnp.maximum(mm(h2, w3) + b3, 0.0)        # [B, n_tasks]

            step_outs.append(h3)
            dec_in = h3                                   # fed back as next input

        # one coalesced store instead of out_seq masked partial stores
        out_ref[...] = jnp.concatenate(step_outs, axis=1).astype(out_ref.dtype)

    return kernel


def multitask_lstm_forward(x, params, *, output_seq_len, use_bf16_matmul=False):
    """Full MultiTaskLSTM forward as a single fused Pallas TPU kernel.

    x: [B, S, In] float32, or [N, B, S, In] for N independent instances
       (instances are tiled across a ("parallel",) grid axis -> both v7x TCs).
    Returns [B, output_seq_len, T] (or [N, B, output_seq_len, T]).
    """
    single = (x.ndim == 3)
    if single:
        x = x[None]
    N, B, S, In = x.shape
    H = params["fc1_w"].shape[0]
    L = len(params["enc"])
    T = params["b3"].shape[-1]
    assert T == In, "the PyTorch module requires output_size == input_size"

    wdt = jnp.bfloat16 if use_bf16_matmul else jnp.float32

    def wcast(w):
        return w.astype(wdt)

    # ---- host-side weight packing (done once, outside the kernel) ----
    args = []
    for (w_ih, w_hh, b) in params["enc"]:
        args += [wcast(w_ih), wcast(w_hh), b]
    for (w_ih, w_hh, b) in params["dec"]:
        # fused decoder cell weight: [x | h] @ [w_ih ; w_hh]
        args += [wcast(jnp.concatenate([w_ih, w_hh], axis=0)), b]

    s = 1.0 / math.sqrt(H)
    wqkv = jnp.concatenate([params["wq"] * s, params["wk"], params["wv"]], axis=1)
    bqkv = jnp.concatenate([params["bq"] * s, params["bk"], params["bv"]], axis=1)

    args += [wcast(params["fc1_w"]), params["fc1_b"],
             wcast(wqkv), bqkv,
             wcast(params["wo"]), params["bo"],
             wcast(params["w1"]), params["b1"],
             wcast(params["w2"]), params["b2"],
             wcast(params["w3"]), params["b3"]]

    # time-major, flattened to [N, S*B, In] so all kernel accesses are 2-D slices
    x_tm = jnp.transpose(x, (0, 2, 1, 3)).reshape(N, S * B, In).astype(jnp.float32)
    args = [x_tm] + args

    kernel = _make_kernel(num_layers=L, seq_len=S, out_seq_len=output_seq_len,
                          hidden=H, batch=B, use_bf16=use_bf16_matmul)

    def resident(a):
        # full-array block; block index constant across the grid -> stays in VMEM
        return pl.BlockSpec(a.shape, lambda n, _nd=a.ndim: (0,) * _nd)

    in_specs = [pl.BlockSpec((pl.Squeezed(), S * B, In), lambda n: (n, 0, 0))]
    in_specs += [resident(a) for a in args[1:]]

    out = pl.pallas_call(
        kernel,
        out_shape=jax.ShapeDtypeStruct((N, B, output_seq_len * T), jnp.float32),
        grid=(N,),
        in_specs=in_specs,
        out_specs=pl.BlockSpec((pl.Squeezed(), B, output_seq_len * T),
                               lambda n: (n, 0, 0)),
        compiler_params=pltpu.CompilerParams(
            dimension_semantics=("parallel",)),
    )(*args)

    out = out.reshape(N, B, output_seq_len, T)
    return out[0] if single else out


# ----------------------------------------------------------------------------
# parameters (deterministic, PyTorch-style init)
# ----------------------------------------------------------------------------
def init_params(key, *, input_size, hidden_size, num_layers, n_tasks):
    """Weights stored transposed ([in, out]) so y = x@W + b; LSTM biases are
    pre-combined (b_ih + b_hh); the per-task FC heads are packed: w1 [H, 16*T]
    (heads concatenated), w2 [16*T, 8*T] block-diagonal, w3 [8*T, T]
    block-structured -- so every decoder step runs ALL heads as three matmuls."""
    H = hidden_size
    keys = iter(jax.random.split(key, 256))

    def uni(shape, fan_in):
        bound = 1.0 / math.sqrt(fan_in)
        return jax.random.uniform(next(keys), shape, jnp.float32, -bound, bound)

    def lstm_stack(in0):
        layers = []
        for l in range(num_layers):
            fan = in0 if l == 0 else H
            w_ih = uni((fan, 4 * H), H)
            w_hh = uni((H, 4 * H), H)
            b = uni((1, 4 * H), H) + uni((1, 4 * H), H)      # b_ih + b_hh
            layers.append((w_ih, w_hh, b))
        return layers

    p = {"enc": lstm_stack(input_size), "dec": lstm_stack(input_size)}
    p["fc1_w"], p["fc1_b"] = uni((H, H), H), uni((1, H), H)
    for n in ("q", "k", "v", "o"):
        p[f"w{n}"], p[f"b{n}"] = uni((H, H), H), uni((1, H), H)

    p["w1"] = jnp.concatenate([uni((H, 16), H) for _ in range(n_tasks)], axis=1)
    p["b1"] = jnp.concatenate([uni((1, 16), H) for _ in range(n_tasks)], axis=1)
    w2 = jnp.zeros((16 * n_tasks, 8 * n_tasks), jnp.float32)
    w3 = jnp.zeros((8 * n_tasks, n_tasks), jnp.float32)
    b2_parts, b3_parts = [], []
    for t in range(n_tasks):
        w2 = w2.at[16 * t:16 * (t + 1), 8 * t:8 * (t + 1)].set(uni((16, 8), 16))
        b2_parts.append(uni((1, 8), 16))
        w3 = w3.at[8 * t:8 * (t + 1), t:t + 1].set(uni((8, 1), 8))
        b3_parts.append(uni((1, 1), 8))
    p["w2"], p["b2"] = w2, jnp.concatenate(b2_parts, axis=1)
    p["w3"], p["b3"] = w3, jnp.concatenate(b3_parts, axis=1)
    return p


# ----------------------------------------------------------------------------
# pure-JAX reference (original unfused formulation, high-precision matmuls)
# ----------------------------------------------------------------------------
def _reference_forward(x, params, *, output_seq_len):
    B, S, In = x.shape
    H = params["fc1_w"].shape[0]
    L = len(params["enc"])

    def mm(a, b):
        return jnp.dot(a, b, precision=lax.Precision.HIGHEST)

    h = [jnp.zeros((B, H), jnp.float32) for _ in range(L)]
    c = [jnp.zeros((B, H), jnp.float32) for _ in range(L)]
    for t in range(S):
        inp = x[:, t, :]
        for l in range(L):
            w_ih, w_hh, b = params["enc"][l]
            h[l], c[l] = _lstm_cell_ref(inp, h[l], c[l], w_ih, w_hh, b, mm)
            inp = h[l]

    dec_in = x[:, S - 1, :]
    outs = []
    for _ in range(output_seq_len):
        inp = dec_in
        for l in range(L):
            w_ih, w_hh, b = params["dec"][l]
            h[l], c[l] = _lstm_cell_ref(inp, h[l], c[l], w_ih, w_hh, b, mm)
            inp = h[l]
        qkv = _leaky_relu(mm(inp, params["fc1_w"]) + params["fc1_b"])
        q = mm(qkv, params["wq"]) + params["bq"]
        k = mm(qkv, params["wk"]) + params["bk"]
        v = mm(qkv, params["wv"]) + params["bv"]
        scores = mm(q, k.T) / math.sqrt(H)
        attn = jax.nn.softmax(scores, axis=-1)
        a_out = mm(mm(attn, v), params["wo"]) + params["bo"]
        h1 = jnp.maximum(mm(a_out, params["w1"]) + params["b1"], 0.0)
        h2 = jnp.maximum(mm(h1, params["w2"]) + params["b2"], 0.0)
        h3 = jnp.maximum(mm(h2, params["w3"]) + params["b3"], 0.0)
        outs.append(h3)
        dec_in = h3
    return jnp.stack(outs, axis=1)


if __name__ == "__main__":
    B = 2
    input_seq_len = 8
    output_seq_len = 3
    input_size = 4            # == number of task heads
    output_size = 4           # PyTorch module requires output_size == input_size
    hidden_size = 32
    num_layers = 2

    key = jax.random.PRNGKey(0)
    key, kx = jax.random.split(key)
    x = jax.random.normal(kx, (B, input_seq_len, input_size), jnp.float32)
    params = init_params(key, input_size=input_size, hidden_size=hidden_size,
                         num_layers=num_layers, n_tasks=output_size)

    ref = _reference_forward(x, params, output_seq_len=output_seq_len)

    # f32 path (tight check)
    out = multitask_lstm_forward(x, params, output_seq_len=output_seq_len)
    out = jax.block_until_ready(out)
    assert out.shape == (B, output_seq_len, output_size), out.shape
    err = float(jnp.max(jnp.abs(out - ref)))
    assert jnp.allclose(out, ref, atol=5e-3, rtol=5e-3), f"f32 mismatch: {err}"

    # bf16-weight MXU path (rounding compounds over the recurrence -> looser tol)
    out_bf16 = jax.block_until_ready(
        multitask_lstm_forward(x, params, output_seq_len=output_seq_len,
                               use_bf16_matmul=True))
    err_bf16 = float(jnp.max(jnp.abs(out_bf16 - ref)))
    assert jnp.allclose(out_bf16, ref, atol=5e-2, rtol=5e-2), f"bf16 mismatch: {err_bf16}"

    # batched-instances path exercising the ("parallel",) grid axis (v7x 2nd TC)
    x2 = jnp.stack([x, 0.5 * x + 0.1], axis=0)            # [2, B, S, In]
    out2 = jax.block_until_ready(
        multitask_lstm_forward(x2, params, output_seq_len=output_seq_len))
    ref2 = jnp.stack([_reference_forward(x2[i], params, output_seq_len=output_seq_len)
                      for i in range(2)], axis=0)
    err2 = float(jnp.max(jnp.abs(out2 - ref2)))
    assert jnp.allclose(out2, ref2, atol=5e-3, rtol=5e-3), f"grid mismatch: {err2}"

    print("KERNEL_OK")
</pallas_src>

<mosaic_0001>
module attributes {stable_mosaic.version = 11 : i64} {
  func.func @kernel(%arg0: i32, %arg1: memref<1x16x4xf32, #tpu.memory_space<vmem>>, %arg2: memref<4x128xf32, #tpu.memory_space<vmem>>, %arg3: memref<32x128xf32, #tpu.memory_space<vmem>>, %arg4: memref<1x128xf32, #tpu.memory_space<vmem>>, %arg5: memref<32x128xf32, #tpu.memory_space<vmem>>, %arg6: memref<32x128xf32, #tpu.memory_space<vmem>>, %arg7: memref<1x128xf32, #tpu.memory_space<vmem>>, %arg8: memref<36x128xf32, #tpu.memory_space<vmem>>, %arg9: memref<1x128xf32, #tpu.memory_space<vmem>>, %arg10: memref<64x128xf32, #tpu.memory_space<vmem>>, %arg11: memref<1x128xf32, #tpu.memory_space<vmem>>, %arg12: memref<32x32xf32, #tpu.memory_space<vmem>>, %arg13: memref<1x32xf32, #tpu.memory_space<vmem>>, %arg14: memref<32x96xf32, #tpu.memory_space<vmem>>, %arg15: memref<1x96xf32, #tpu.memory_space<vmem>>, %arg16: memref<32x32xf32, #tpu.memory_space<vmem>>, %arg17: memref<1x32xf32, #tpu.memory_space<vmem>>, %arg18: memref<32x64xf32, #tpu.memory_space<vmem>>, %arg19: memref<1x64xf32, #tpu.memory_space<vmem>>, %arg20: memref<64x32xf32, #tpu.memory_space<vmem>>, %arg21: memref<1x32xf32, #tpu.memory_space<vmem>>, %arg22: memref<32x4xf32, #tpu.memory_space<vmem>>, %arg23: memref<1x4xf32, #tpu.memory_space<vmem>>, %arg24: memref<1x2x12xf32, #tpu.memory_space<vmem>>) attributes {dimension_semantics = [#tpu.dimension_semantics<parallel>], iteration_bounds = array<i64: 1>, scalar_prefetch = 0 : i64, scratch_operands = 0 : i64, tpu.core_type = #tpu.core_type<tc>, window_params = [{transform_indices = @transform_0, window_bounds = array<i64: 1, 16, 4>}, {pipeline_mode = #tpu.pipeline_mode<synchronous>, transform_indices = @transform_1, window_bounds = array<i64: 4, 128>}, {pipeline_mode = #tpu.pipeline_mode<synchronous>, transform_indices = @transform_2, window_bounds = array<i64: 32, 128>}, {pipeline_mode = #tpu.pipeline_mode<synchronous>, transform_indices = @transform_3, window_bounds = array<i64: 1, 128>}, {pipeline_mode = #tpu.pipeline_mode<synchronous>, transform_indices = @transform_4, window_bounds = array<i64: 32, 128>}, {pipeline_mode = #tpu.pipeline_mode<synchronous>, transform_indices = @transform_5, window_bounds = array<i64: 32, 128>}, {pipeline_mode = #tpu.pipeline_mode<synchronous>, transform_indices = @transform_6, window_bounds = array<i64: 1, 128>}, {pipeline_mode = #tpu.pipeline_mode<synchronous>, transform_indices = @transform_7, window_bounds = array<i64: 36, 128>}, {pipeline_mode = #tpu.pipeline_mode<synchronous>, transform_indices = @transform_8, window_bounds = array<i64: 1, 128>}, {pipeline_mode = #tpu.pipeline_mode<synchronous>, transform_indices = @transform_9, window_bounds = array<i64: 64, 128>}, {pipeline_mode = #tpu.pipeline_mode<synchronous>, transform_indices = @transform_10, window_bounds = array<i64: 1, 128>}, {pipeline_mode = #tpu.pipeline_mode<synchronous>, transform_indices = @transform_11, window_bounds = array<i64: 32, 32>}, {pipeline_mode = #tpu.pipeline_mode<synchronous>, transform_indices = @transform_12, window_bounds = array<i64: 1, 32>}, {pipeline_mode = #tpu.pipeline_mode<synchronous>, transform_indices = @transform_13, window_bounds = array<i64: 32, 96>}, {pipeline_mode = #tpu.pipeline_mode<synchronous>, transform_indices = @transform_14, window_bounds = array<i64: 1, 96>}, {pipeline_mode = #tpu.pipeline_mode<synchronous>, transform_indices = @transform_15, window_bounds = array<i64: 32, 32>}, {pipeline_mode = #tpu.pipeline_mode<synchronous>, transform_indices = @transform_16, window_bounds = array<i64: 1, 32>}, {pipeline_mode = #tpu.pipeline_mode<synchronous>, transform_indices = @transform_17, window_bounds = array<i64: 32, 64>}, {pipeline_mode = #tpu.pipeline_mode<synchronous>, transform_indices = @transform_18, window_bounds = array<i64: 1, 64>}, {pipeline_mode = #tpu.pipeline_mode<synchronous>, transform_indices = @transform_19, window_bounds = array<i64: 64, 32>}, {pipeline_mode = #tpu.pipeline_mode<synchronous>, transform_indices = @transform_20, window_bounds = array<i64: 1, 32>}, {pipeline_mode = #tpu.pipeline_mode<synchronous>, transform_indices = @transform_21, window_bounds = array<i64: 32, 4>}, {pipeline_mode = #tpu.pipeline_mode<synchronous>, transform_indices = @transform_22, window_bounds = array<i64: 1, 4>}, {transform_indices = @transform_23, window_bounds = array<i64: 1, 2, 12>}]} {
    %c0 = arith.constant 0 : index
    %c0_0 = arith.constant 0 : index
    %0 = vector.load %arg12[%c0, %c0_0] : memref<32x32xf32, #tpu.memory_space<vmem>>, vector<32x32xf32>
    %c0_1 = arith.constant 0 : index
    %c0_2 = arith.constant 0 : index
    %1 = vector.load %arg13[%c0_1, %c0_2] : memref<1x32xf32, #tpu.memory_space<vmem>>, vector<1x32xf32>
    %c0_3 = arith.constant 0 : index
    %c0_4 = arith.constant 0 : index
    %2 = vector.load %arg14[%c0_3, %c0_4] : memref<32x96xf32, #tpu.memory_space<vmem>>, vector<32x96xf32>
    %c0_5 = arith.constant 0 : index
    %c0_6 = arith.constant 0 : index
    %3 = vector.load %arg15[%c0_5, %c0_6] : memref<1x96xf32, #tpu.memory_space<vmem>>, vector<1x96xf32>
    %c0_7 = arith.constant 0 : index
    %c0_8 = arith.constant 0 : index
    %4 = vector.load %arg16[%c0_7, %c0_8] : memref<32x32xf32, #tpu.memory_space<vmem>>, vector<32x32xf32>
    %c0_9 = arith.constant 0 : index
    %c0_10 = arith.constant 0 : index
    %5 = vector.load %arg17[%c0_9, %c0_10] : memref<1x32xf32, #tpu.memory_space<vmem>>, vector<1x32xf32>
    %c0_11 = arith.constant 0 : index
    %c0_12 = arith.constant 0 : index
    %6 = vector.load %arg18[%c0_11, %c0_12] : memref<32x64xf32, #tpu.memory_space<vmem>>, vector<32x64xf32>
    %c0_13 = arith.constant 0 : index
    %c0_14 = arith.constant 0 : index
    %7 = vector.load %arg19[%c0_13, %c0_14] : memref<1x64xf32, #tpu.memory_space<vmem>>, vector<1x64xf32>
    %c0_15 = arith.constant 0 : index
    %c0_16 = arith.constant 0 : index
    %8 = vector.load %arg20[%c0_15, %c0_16] : memref<64x32xf32, #tpu.memory_space<vmem>>, vector<64x32xf32>
    %c0_17 = arith.constant 0 : index
    %c0_18 = arith.constant 0 : index
    %9 = vector.load %arg21[%c0_17, %c0_18] : memref<1x32xf32, #tpu.memory_space<vmem>>, vector<1x32xf32>
    %c0_19 = arith.constant 0 : index
    %c0_20 = arith.constant 0 : index
    %10 = vector.load %arg22[%c0_19, %c0_20] : memref<32x4xf32, #tpu.memory_space<vmem>>, vector<32x4xf32>
    %c0_21 = arith.constant 0 : index
    %c0_22 = arith.constant 0 : index
    %11 = vector.load %arg23[%c0_21, %c0_22] : memref<1x4xf32, #tpu.memory_space<vmem>>, vector<1x4xf32>
    %c0_23 = arith.constant 0 : index
    %c0_24 = arith.constant 0 : index
    %12 = vector.load %arg2[%c0_23, %c0_24] : memref<4x128xf32, #tpu.memory_space<vmem>>, vector<4x128xf32>
    %c0_25 = arith.constant 0 : index
    %c0_26 = arith.constant 0 : index
    %13 = vector.load %arg3[%c0_25, %c0_26] : memref<32x128xf32, #tpu.memory_space<vmem>>, vector<32x128xf32>
    %c0_27 = arith.constant 0 : index
    %c0_28 = arith.constant 0 : index
    %14 = vector.load %arg4[%c0_27, %c0_28] : memref<1x128xf32, #tpu.memory_space<vmem>>, vector<1x128xf32>
    %c0_29 = arith.constant 0 : index
    %c0_30 = arith.constant 0 : index
    %15 = vector.load %arg5[%c0_29, %c0_30] : memref<32x128xf32, #tpu.memory_space<vmem>>, vector<32x128xf32>
    %c0_31 = arith.constant 0 : index
    %c0_32 = arith.constant 0 : index
    %16 = vector.load %arg6[%c0_31, %c0_32] : memref<32x128xf32, #tpu.memory_space<vmem>>, vector<32x128xf32>
    %c0_33 = arith.constant 0 : index
    %c0_34 = arith.constant 0 : index
    %17 = vector.load %arg7[%c0_33, %c0_34] : memref<1x128xf32, #tpu.memory_space<vmem>>, vector<1x128xf32>
    %c0_35 = arith.constant 0 : index
    %c0_36 = arith.constant 0 : index
    %18 = vector.load %arg8[%c0_35, %c0_36] : memref<36x128xf32, #tpu.memory_space<vmem>>, vector<36x128xf32>
    %c0_37 = arith.constant 0 : index
    %c0_38 = arith.constant 0 : index
    %19 = vector.load %arg9[%c0_37, %c0_38] : memref<1x128xf32, #tpu.memory_space<vmem>>, vector<1x128xf32>
    %c0_39 = arith.constant 0 : index
    %c0_40 = arith.constant 0 : index
    %20 = vector.load %arg10[%c0_39, %c0_40] : memref<64x128xf32, #tpu.memory_space<vmem>>, vector<64x128xf32>
    %c0_41 = arith.constant 0 : index
    %c0_42 = arith.constant 0 : index
    %21 = vector.load %arg11[%c0_41, %c0_42] : memref<1x128xf32, #tpu.memory_space<vmem>>, vector<1x128xf32>
    %c0_43 = arith.constant 0 : index
    %c0_44 = arith.constant 0 : index
    %c0_45 = arith.constant 0 : index
    %22 = vector.load %arg1[%c0_43, %c0_44, %c0_45] : memref<1x16x4xf32, #tpu.memory_space<vmem>>, vector<1x16x4xf32>
    %23 = vector.shape_cast %22 : vector<1x16x4xf32> to vector<16x4xf32>
    %cst = arith.constant dense<0.000000e+00> : vector<16x128xf32>
    %24 = tpu.matmul %23, %12, %cst {dimension_numbers = #tpu.dot_dimension_numbers<[1], [0], [0], [1], [0, 0, 1, 1], [], []>} : vector<16x4xf32>, vector<4x128xf32>, vector<16x128xf32> -> vector<16x128xf32>
    %25 = vector.broadcast %14 : vector<1x128xf32> to vector<16x128xf32>
    %26 = arith.addf %24, %25 : vector<16x128xf32>
    %cst_46 = arith.constant 0.000000e+00 : f32
    %27 = vector.broadcast %cst_46 : f32 to vector<2x32xf32>
    %cst_47 = arith.constant 0.000000e+00 : f32
    %28 = vector.broadcast %cst_47 : f32 to vector<2x32xf32>
    %29 = vector.extract_strided_slice %26 {offsets = [0, 0], sizes = [2, 128], strides = [1, 1]} : vector<16x128xf32> to vector<2x128xf32>
    %cst_48 = arith.constant dense<0.000000e+00> : vector<2x128xf32>
    %30 = tpu.matmul %27, %13, %cst_48 {dimension_numbers = #tpu.dot_dimension_numbers<[1], [0], [0], [1], [0, 0, 1, 1], [], []>} : vector<2x32xf32>, vector<32x128xf32>, vector<2x128xf32> -> vector<2x128xf32>
    %31 = arith.addf %29, %30 : vector<2x128xf32>
    %32 = arith.negf %31 : vector<2x128xf32>
    %33 = math.exp %32 : vector<2x128xf32>
    %cst_49 = arith.constant 1.000000e+00 : f32
    %34 = vector.broadcast %cst_49 : f32 to vector<2x128xf32>
    %35 = arith.addf %34, %33 : vector<2x128xf32>
    %36 = arith.divf %34, %35 : vector<2x128xf32>
    %37 = math.tanh %31 : vector<2x128xf32>
    %38 = vector.extract_strided_slice %36 {offsets = [0, 0], sizes = [2, 32], strides = [1, 1]} : vector<2x128xf32> to vector<2x32xf32>
    %39 = vector.extract_strided_slice %36 {offsets = [0, 32], sizes = [2, 32], strides = [1, 1]} : vector<2x128xf32> to vector<2x32xf32>
    %40 = vector.extract_strided_slice %36 {offsets = [0, 96], sizes = [2, 32], strides = [1, 1]} : vector<2x128xf32> to vector<2x32xf32>
    %41 = vector.extract_strided_slice %37 {offsets = [0, 64], sizes = [2, 32], strides = [1, 1]} : vector<2x128xf32> to vector<2x32xf32>
    %42 = arith.mulf %39, %28 : vector<2x32xf32>
    %43 = arith.mulf %38, %41 : vector<2x32xf32>
    %44 = arith.addf %42, %43 : vector<2x32xf32>
    %45 = math.tanh %44 : vector<2x32xf32>
    %46 = arith.mulf %40, %45 : vector<2x32xf32>
    %47 = vector.extract_strided_slice %26 {offsets = [2, 0], sizes = [2, 128], strides = [1, 1]} : vector<16x128xf32> to vector<2x128xf32>
    %cst_50 = arith.constant dense<0.000000e+00> : vector<2x128xf32>
    %48 = tpu.matmul %46, %13, %cst_50 {dimension_numbers = #tpu.dot_dimension_numbers<[1], [0], [0], [1], [0, 0, 1, 1], [], []>} : vector<2x32xf32>, vector<32x128xf32>, vector<2x128xf32> -> vector<2x128xf32>
    %49 = arith.addf %47, %48 : vector<2x128xf32>
    %50 = arith.negf %49 : vector<2x128xf32>
    %51 = math.exp %50 : vector<2x128xf32>
    %cst_51 = arith.constant 1.000000e+00 : f32
    %52 = vector.broadcast %cst_51 : f32 to vector<2x128xf32>
    %53 = arith.addf %52, %51 : vector<2x128xf32>
    %54 = arith.divf %52, %53 : vector<2x128xf32>
    %55 = math.tanh %49 : vector<2x128xf32>
    %56 = vector.extract_strided_slice %54 {offsets = [0, 0], sizes = [2, 32], strides = [1, 1]} : vector<2x128xf32> to vector<2x32xf32>
    %57 = vector.extract_strided_slice %54 {offsets = [0, 32], sizes = [2, 32], strides = [1, 1]} : vector<2x128xf32> to vector<2x32xf32>
    %58 = vector.extract_strided_slice %54 {offsets = [0, 96], sizes = [2, 32], strides = [1, 1]} : vector<2x128xf32> to vector<2x32xf32>
    %59 = vector.extract_strided_slice %55 {offsets = [0, 64], sizes = [2, 32], strides = [1, 1]} : vector<2x128xf32> to vector<2x32xf32>
    %60 = arith.mulf %57, %44 : vector<2x32xf32>
    %61 = arith.mulf %56, %59 : vector<2x32xf32>
    %62 = arith.addf %60, %61 : vector<2x32xf32>
    %63 = math.tanh %62 : vector<2x32xf32>
    %64 = arith.mulf %58, %63 : vector<2x32xf32>
    %65 = vector.extract_strided_slice %26 {offsets = [4, 0], sizes = [2, 128], strides = [1, 1]} : vector<16x128xf32> to vector<2x128xf32>
    %cst_52 = arith.constant dense<0.000000e+00> : vector<2x128xf32>
    %66 = tpu.matmul %64, %13, %cst_52 {dimension_numbers = #tpu.dot_dimension_numbers<[1], [0], [0], [1], [0, 0, 1, 1], [], []>} : vector<2x32xf32>, vector<32x128xf32>, vector<2x128xf32> -> vector<2x128xf32>
    %67 = arith.addf %65, %66 : vector<2x128xf32>
    %68 = arith.negf %67 : vector<2x128xf32>
    %69 = math.exp %68 : vector<2x128xf32>
    %cst_53 = arith.constant 1.000000e+00 : f32
    %70 = vector.broadcast %cst_53 : f32 to vector<2x128xf32>
    %71 = arith.addf %70, %69 : vector<2x128xf32>
    %72 = arith.divf %70, %71 : vector<2x128xf32>
    %73 = math.tanh %67 : vector<2x128xf32>
    %74 = vector.extract_strided_slice %72 {offsets = [0, 0], sizes = [2, 32], strides = [1, 1]} : vector<2x128xf32> to vector<2x32xf32>
    %75 = vector.extract_strided_slice %72 {offsets = [0, 32], sizes = [2, 32], strides = [1, 1]} : vector<2x128xf32> to vector<2x32xf32>
    %76 = vector.extract_strided_slice %72 {offsets = [0, 96], sizes = [2, 32], strides = [1, 1]} : vector<2x128xf32> to vector<2x32xf32>
    %77 = vector.extract_strided_slice %73 {offsets = [0, 64], sizes = [2, 32], strides = [1, 1]} : vector<2x128xf32> to vector<2x32xf32>
    %78 = arith.mulf %75, %62 : vector<2x32xf32>
    %79 = arith.mulf %74, %77 : vector<2x32xf32>
    %80 = arith.addf %78, %79 : vector<2x32xf32>
    %81 = math.tanh %80 : vector<2x32xf32>
    %82 = arith.mulf %76, %81 : vector<2x32xf32>
    %83 = vector.extract_strided_slice %26 {offsets = [6, 0], sizes = [2, 128], strides = [1, 1]} : vector<16x128xf32> to vector<2x128xf32>
    %cst_54 = arith.constant dense<0.000000e+00> : vector<2x128xf32>
    %84 = tpu.matmul %82, %13, %cst_54 {dimension_numbers = #tpu.dot_dimension_numbers<[1], [0], [0], [1], [0, 0, 1, 1], [], []>} : vector<2x32xf32>, vector<32x128xf32>, vector<2x128xf32> -> vector<2x128xf32>
    %85 = arith.addf %83, %84 : vector<2x128xf32>
    %86 = arith.negf %85 : vector<2x128xf32>
    %87 = math.exp %86 : vector<2x128xf32>
    %cst_55 = arith.constant 1.000000e+00 : f32
    %88 = vector.broadcast %cst_55 : f32 to vector<2x128xf32>
    %89 = arith.addf %88, %87 : vector<2x128xf32>
    %90 = arith.divf %88, %89 : vector<2x128xf32>
    %91 = math.tanh %85 : vector<2x128xf32>
    %92 = vector.extract_strided_slice %90 {offsets = [0, 0], sizes = [2, 32], strides = [1, 1]} : vector<2x128xf32> to vector<2x32xf32>
    %93 = vector.extract_strided_slice %90 {offsets = [0, 32], sizes = [2, 32], strides = [1, 1]} : vector<2x128xf32> to vector<2x32xf32>
    %94 = vector.extract_strided_slice %90 {offsets = [0, 96], sizes = [2, 32], strides = [1, 1]} : vector<2x128xf32> to vector<2x32xf32>
    %95 = vector.extract_strided_slice %91 {offsets = [0, 64], sizes = [2, 32], strides = [1, 1]} : vector<2x128xf32> to vector<2x32xf32>
    %96 = arith.mulf %93, %80 : vector<2x32xf32>
    %97 = arith.mulf %92, %95 : vector<2x32xf32>
    %98 = arith.addf %96, %97 : vector<2x32xf32>
    %99 = math.tanh %98 : vector<2x32xf32>
    %100 = arith.mulf %94, %99 : vector<2x32xf32>
    %101 = vector.extract_strided_slice %26 {offsets = [8, 0], sizes = [2, 128], strides = [1, 1]} : vector<16x128xf32> to vector<2x128xf32>
    %cst_56 = arith.constant dense<0.000000e+00> : vector<2x128xf32>
    %102 = tpu.matmul %100, %13, %cst_56 {dimension_numbers = #tpu.dot_dimension_numbers<[1], [0], [0], [1], [0, 0, 1, 1], [], []>} : vector<2x32xf32>, vector<32x128xf32>, vector<2x128xf32> -> vector<2x128xf32>
    %103 = arith.addf %101, %102 : vector<2x128xf32>
    %104 = arith.negf %103 : vector<2x128xf32>
    %105 = math.exp %104 : vector<2x128xf32>
    %cst_57 = arith.constant 1.000000e+00 : f32
    %106 = vector.broadcast %cst_57 : f32 to vector<2x128xf32>
    %107 = arith.addf %106, %105 : vector<2x128xf32>
    %108 = arith.divf %106, %107 : vector<2x128xf32>
    %109 = math.tanh %103 : vector<2x128xf32>
    %110 = vector.extract_strided_slice %108 {offsets = [0, 0], sizes = [2, 32], strides = [1, 1]} : vector<2x128xf32> to vector<2x32xf32>
    %111 = vector.extract_strided_slice %108 {offsets = [0, 32], sizes = [2, 32], strides = [1, 1]} : vector<2x128xf32> to vector<2x32xf32>
    %112 = vector.extract_strided_slice %108 {offsets = [0, 96], sizes = [2, 32], strides = [1, 1]} : vector<2x128xf32> to vector<2x32xf32>
    %113 = vector.extract_strided_slice %109 {offsets = [0, 64], sizes = [2, 32], strides = [1, 1]} : vector<2x128xf32> to vector<2x32xf32>
    %114 = arith.mulf %111, %98 : vector<2x32xf32>
    %115 = arith.mulf %110, %113 : vector<2x32xf32>
    %116 = arith.addf %114, %115 : vector<2x32xf32>
    %117 = math.tanh %116 : vector<2x32xf32>
    %118 = arith.mulf %112, %117 : vector<2x32xf32>
    %119 = vector.extract_strided_slice %26 {offsets = [10, 0], sizes = [2, 128], strides = [1, 1]} : vector<16x128xf32> to vector<2x128xf32>
    %cst_58 = arith.constant dense<0.000000e+00> : vector<2x128xf32>
    %120 = tpu.matmul %118, %13, %cst_58 {dimension_numbers = #tpu.dot_dimension_numbers<[1], [0], [0], [1], [0, 0, 1, 1], [], []>} : vector<2x32xf32>, vector<32x128xf32>, vector<2x128xf32> -> vector<2x128xf32>
    %121 = arith.addf %119, %120 : vector<2x128xf32>
    %122 = arith.negf %121 : vector<2x128xf32>
    %123 = math.exp %122 : vector<2x128xf32>
    %cst_59 = arith.constant 1.000000e+00 : f32
    %124 = vector.broadcast %cst_59 : f32 to vector<2x128xf32>
    %125 = arith.addf %124, %123 : vector<2x128xf32>
    %126 = arith.divf %124, %125 : vector<2x128xf32>
    %127 = math.tanh %121 : vector<2x128xf32>
    %128 = vector.extract_strided_slice %126 {offsets = [0, 0], sizes = [2, 32], strides = [1, 1]} : vector<2x128xf32> to vector<2x32xf32>
    %129 = vector.extract_strided_slice %126 {offsets = [0, 32], sizes = [2, 32], strides = [1, 1]} : vector<2x128xf32> to vector<2x32xf32>
    %130 = vector.extract_strided_slice %126 {offsets = [0, 96], sizes = [2, 32], strides = [1, 1]} : vector<2x128xf32> to vector<2x32xf32>
    %131 = vector.extract_strided_slice %127 {offsets = [0, 64], sizes = [2, 32], strides = [1, 1]} : vector<2x128xf32> to vector<2x32xf32>
    %132 = arith.mulf %129, %116 : vector<2x32xf32>
    %133 = arith.mulf %128, %131 : vector<2x32xf32>
    %134 = arith.addf %132, %133 : vector<2x32xf32>
    %135 = math.tanh %134 : vector<2x32xf32>
    %136 = arith.mulf %130, %135 : vector<2x32xf32>
    %137 = vector.extract_strided_slice %26 {offsets = [12, 0], sizes = [2, 128], strides = [1, 1]} : vector<16x128xf32> to vector<2x128xf32>
    %cst_60 = arith.constant dense<0.000000e+00> : vector<2x128xf32>
    %138 = tpu.matmul %136, %13, %cst_60 {dimension_numbers = #tpu.dot_dimension_numbers<[1], [0], [0], [1], [0, 0, 1, 1], [], []>} : vector<2x32xf32>, vector<32x128xf32>, vector<2x128xf32> -> vector<2x128xf32>
    %139 = arith.addf %137, %138 : vector<2x128xf32>
    %140 = arith.negf %139 : vector<2x128xf32>
    %141 = math.exp %140 : vector<2x128xf32>
    %cst_61 = arith.constant 1.000000e+00 : f32
    %142 = vector.broadcast %cst_61 : f32 to vector<2x128xf32>
    %143 = arith.addf %142, %141 : vector<2x128xf32>
    %144 = arith.divf %142, %143 : vector<2x128xf32>
    %145 = math.tanh %139 : vector<2x128xf32>
    %146 = vector.extract_strided_slice %144 {offsets = [0, 0], sizes = [2, 32], strides = [1, 1]} : vector<2x128xf32> to vector<2x32xf32>
    %147 = vector.extract_strided_slice %144 {offsets = [0, 32], sizes = [2, 32], strides = [1, 1]} : vector<2x128xf32> to vector<2x32xf32>
    %148 = vector.extract_strided_slice %144 {offsets = [0, 96], sizes = [2, 32], strides = [1, 1]} : vector<2x128xf32> to vector<2x32xf32>
    %149 = vector.extract_strided_slice %145 {offsets = [0, 64], sizes = [2, 32], strides = [1, 1]} : vector<2x128xf32> to vector<2x32xf32>
    %150 = arith.mulf %147, %134 : vector<2x32xf32>
    %151 = arith.mulf %146, %149 : vector<2x32xf32>
    %152 = arith.addf %150, %151 : vector<2x32xf32>
    %153 = math.tanh %152 : vector<2x32xf32>
    %154 = arith.mulf %148, %153 : vector<2x32xf32>
    %155 = vector.extract_strided_slice %26 {offsets = [14, 0], sizes = [2, 128], strides = [1, 1]} : vector<16x128xf32> to vector<2x128xf32>
    %cst_62 = arith.constant dense<0.000000e+00> : vector<2x128xf32>
    %156 = tpu.matmul %154, %13, %cst_62 {dimension_numbers = #tpu.dot_dimension_numbers<[1], [0], [0], [1], [0, 0, 1, 1], [], []>} : vector<2x32xf32>, vector<32x128xf32>, vector<2x128xf32> -> vector<2x128xf32>
    %157 = arith.addf %155, %156 : vector<2x128xf32>
    %158 = arith.negf %157 : vector<2x128xf32>
    %159 = math.exp %158 : vector<2x128xf32>
    %cst_63 = arith.constant 1.000000e+00 : f32
    %160 = vector.broadcast %cst_63 : f32 to vector<2x128xf32>
    %161 = arith.addf %160, %159 : vector<2x128xf32>
    %162 = arith.divf %160, %161 : vector<2x128xf32>
    %163 = math.tanh %157 : vector<2x128xf32>
    %164 = vector.extract_strided_slice %162 {offsets = [0, 0], sizes = [2, 32], strides = [1, 1]} : vector<2x128xf32> to vector<2x32xf32>
    %165 = vector.extract_strided_slice %162 {offsets = [0, 32], sizes = [2, 32], strides = [1, 1]} : vector<2x128xf32> to vector<2x32xf32>
    %166 = vector.extract_strided_slice %162 {offsets = [0, 96], sizes = [2, 32], strides = [1, 1]} : vector<2x128xf32> to vector<2x32xf32>
    %167 = vector.extract_strided_slice %163 {offsets = [0, 64], sizes = [2, 32], strides = [1, 1]} : vector<2x128xf32> to vector<2x32xf32>
    %168 = arith.mulf %165, %152 : vector<2x32xf32>
    %169 = arith.mulf %164, %167 : vector<2x32xf32>
    %170 = arith.addf %168, %169 : vector<2x32xf32>
    %171 = math.tanh %170 : vector<2x32xf32>
    %172 = arith.mulf %166, %171 : vector<2x32xf32>
    %173 = tpu.concatenate %46, %64, %82, %100, %118, %136, %154, %172 in 0 : vector<2x32xf32>, vector<2x32xf32>, vector<2x32xf32>, vector<2x32xf32>, vector<2x32xf32>, vector<2x32xf32>, vector<2x32xf32>, vector<2x32xf32> -> vector<16x32xf32>
    %cst_64 = arith.constant dense<0.000000e+00> : vector<16x128xf32>
    %174 = tpu.matmul %173, %15, %cst_64 {dimension_numbers = #tpu.dot_dimension_numbers<[1], [0], [0], [1], [0, 0, 1, 1], [], []>} : vector<16x32xf32>, vector<32x128xf32>, vector<16x128xf32> -> vector<16x128xf32>
    %175 = vector.broadcast %17 : vector<1x128xf32> to vector<16x128xf32>
    %176 = arith.addf %174, %175 : vector<16x128xf32>
    %cst_65 = arith.constant 0.000000e+00 : f32
    %177 = vector.broadcast %cst_65 : f32 to vector<2x32xf32>
    %cst_66 = arith.constant 0.000000e+00 : f32
    %178 = vector.broadcast %cst_66 : f32 to vector<2x32xf32>
    %179 = vector.extract_strided_slice %176 {offsets = [0, 0], sizes = [2, 128], strides = [1, 1]} : vector<16x128xf32> to vector<2x128xf32>
    %cst_67 = arith.constant dense<0.000000e+00> : vector<2x128xf32>
    %180 = tpu.matmul %177, %16, %cst_67 {dimension_numbers = #tpu.dot_dimension_numbers<[1], [0], [0], [1], [0, 0, 1, 1], [], []>} : vector<2x32xf32>, vector<32x128xf32>, vector<2x128xf32> -> vector<2x128xf32>
    %181 = arith.addf %179, %180 : vector<2x128xf32>
    %182 = arith.negf %181 : vector<2x128xf32>
    %183 = math.exp %182 : vector<2x128xf32>
    %cst_68 = arith.constant 1.000000e+00 : f32
    %184 = vector.broadcast %cst_68 : f32 to vector<2x128xf32>
    %185 = arith.addf %184, %183 : vector<2x128xf32>
    %186 = arith.divf %184, %185 : vector<2x128xf32>
    %187 = math.tanh %181 : vector<2x128xf32>
    %188 = vector.extract_strided_slice %186 {offsets = [0, 0], sizes = [2, 32], strides = [1, 1]} : vector<2x128xf32> to vector<2x32xf32>
    %189 = vector.extract_strided_slice %186 {offsets = [0, 32], sizes = [2, 32], strides = [1, 1]} : vector<2x128xf32> to vector<2x32xf32>
    %190 = vector.extract_strided_slice %186 {offsets = [0, 96], sizes = [2, 32], strides = [1, 1]} : vector<2x128xf32> to vector<2x32xf32>
    %191 = vector.extract_strided_slice %187 {offsets = [0, 64], sizes = [2, 32], strides = [1, 1]} : vector<2x128xf32> to vector<2x32xf32>
    %192 = arith.mulf %189, %178 : vector<2x32xf32>
    %193 = arith.mulf %188, %191 : vector<2x32xf32>
    %194 = arith.addf %192, %193 : vector<2x32xf32>
    %195 = math.tanh %194 : vector<2x32xf32>
    %196 = arith.mulf %190, %195 : vector<2x32xf32>
    %197 = vector.extract_strided_slice %176 {offsets = [2, 0], sizes = [2, 128], strides = [1, 1]} : vector<16x128xf32> to vector<2x128xf32>
    %cst_69 = arith.constant dense<0.000000e+00> : vector<2x128xf32>
    %198 = tpu.matmul %196, %16, %cst_69 {dimension_numbers = #tpu.dot_dimension_numbers<[1], [0], [0], [1], [0, 0, 1, 1], [], []>} : vector<2x32xf32>, vector<32x128xf32>, vector<2x128xf32> -> vector<2x128xf32>
    %199 = arith.addf %197, %198 : vector<2x128xf32>
    %200 = arith.negf %199 : vector<2x128xf32>
    %201 = math.exp %200 : vector<2x128xf32>
    %cst_70 = arith.constant 1.000000e+00 : f32
    %202 = vector.broadcast %cst_70 : f32 to vector<2x128xf32>
    %203 = arith.addf %202, %201 : vector<2x128xf32>
    %204 = arith.divf %202, %203 : vector<2x128xf32>
    %205 = math.tanh %199 : vector<2x128xf32>
    %206 = vector.extract_strided_slice %204 {offsets = [0, 0], sizes = [2, 32], strides = [1, 1]} : vector<2x128xf32> to vector<2x32xf32>
    %207 = vector.extract_strided_slice %204 {offsets = [0, 32], sizes = [2, 32], strides = [1, 1]} : vector<2x128xf32> to vector<2x32xf32>
    %208 = vector.extract_strided_slice %204 {offsets = [0, 96], sizes = [2, 32], strides = [1, 1]} : vector<2x128xf32> to vector<2x32xf32>
    %209 = vector.extract_strided_slice %205 {offsets = [0, 64], sizes = [2, 32], strides = [1, 1]} : vector<2x128xf32> to vector<2x32xf32>
    %210 = arith.mulf %207, %194 : vector<2x32xf32>
    %211 = arith.mulf %206, %209 : vector<2x32xf32>
    %212 = arith.addf %210, %211 : vector<2x32xf32>
    %213 = math.tanh %212 : vector<2x32xf32>
    %214 = arith.mulf %208, %213 : vector<2x32xf32>
    %215 = vector.extract_strided_slice %176 {offsets = [4, 0], sizes = [2, 128], strides = [1, 1]} : vector<16x128xf32> to vector<2x128xf32>
    %cst_71 = arith.constant dense<0.000000e+00> : vector<2x128xf32>
    %216 = tpu.matmul %214, %16, %cst_71 {dimension_numbers = #tpu.dot_dimension_numbers<[1], [0], [0], [1], [0, 0, 1, 1], [], []>} : vector<2x32xf32>, vector<32x128xf32>, vector<2x128xf32> -> vector<2x128xf32>
    %217 = arith.addf %215, %216 : vector<2x128xf32>
    %218 = arith.negf %217 : vector<2x128xf32>
    %219 = math.exp %218 : vector<2x128xf32>
    %cst_72 = arith.constant 1.000000e+00 : f32
    %220 = vector.broadcast %cst_72 : f32 to vector<2x128xf32>
    %221 = arith.addf %220, %219 : vector<2x128xf32>
    %222 = arith.divf %220, %221 : vector<2x128xf32>
    %223 = math.tanh %217 : vector<2x128xf32>
    %224 = vector.extract_strided_slice %222 {offsets = [0, 0], sizes = [2, 32], strides = [1, 1]} : vector<2x128xf32> to vector<2x32xf32>
    %225 = vector.extract_strided_slice %222 {offsets = [0, 32], sizes = [2, 32], strides = [1, 1]} : vector<2x128xf32> to vector<2x32xf32>
    %226 = vector.extract_strided_slice %222 {offsets = [0, 96], sizes = [2, 32], strides = [1, 1]} : vector<2x128xf32> to vector<2x32xf32>
    %227 = vector.extract_strided_slice %223 {offsets = [0, 64], sizes = [2, 32], strides = [1, 1]} : vector<2x128xf32> to vector<2x32xf32>
    %228 = arith.mulf %225, %212 : vector<2x32xf32>
    %229 = arith.mulf %224, %227 : vector<2x32xf32>
    %230 = arith.addf %228, %229 : vector<2x32xf32>
    %231 = math.tanh %230 : vector<2x32xf32>
    %232 = arith.mulf %226, %231 : vector<2x32xf32>
    %233 = vector.extract_strided_slice %176 {offsets = [6, 0], sizes = [2, 128], strides = [1, 1]} : vector<16x128xf32> to vector<2x128xf32>
    %cst_73 = arith.constant dense<0.000000e+00> : vector<2x128xf32>
    %234 = tpu.matmul %232, %16, %cst_73 {dimension_numbers = #tpu.dot_dimension_numbers<[1], [0], [0], [1], [0, 0, 1, 1], [], []>} : vector<2x32xf32>, vector<32x128xf32>, vector<2x128xf32> -> vector<2x128xf32>
    %235 = arith.addf %233, %234 : vector<2x128xf32>
    %236 = arith.negf %235 : vector<2x128xf32>
    %237 = math.exp %236 : vector<2x128xf32>
    %cst_74 = arith.constant 1.000000e+00 : f32
    %238 = vector.broadcast %cst_74 : f32 to vector<2x128xf32>
    %239 = arith.addf %238, %237 : vector<2x128xf32>
    %240 = arith.divf %238, %239 : vector<2x128xf32>
    %241 = math.tanh %235 : vector<2x128xf32>
    %242 = vector.extract_strided_slice %240 {offsets = [0, 0], sizes = [2, 32], strides = [1, 1]} : vector<2x128xf32> to vector<2x32xf32>
    %243 = vector.extract_strided_slice %240 {offsets = [0, 32], sizes = [2, 32], strides = [1, 1]} : vector<2x128xf32> to vector<2x32xf32>
    %244 = vector.extract_strided_slice %240 {offsets = [0, 96], sizes = [2, 32], strides = [1, 1]} : vector<2x128xf32> to vector<2x32xf32>
    %245 = vector.extract_strided_slice %241 {offsets = [0, 64], sizes = [2, 32], strides = [1, 1]} : vector<2x128xf32> to vector<2x32xf32>
    %246 = arith.mulf %243, %230 : vector<2x32xf32>
    %247 = arith.mulf %242, %245 : vector<2x32xf32>
    %248 = arith.addf %246, %247 : vector<2x32xf32>
    %249 = math.tanh %248 : vector<2x32xf32>
    %250 = arith.mulf %244, %249 : vector<2x32xf32>
    %251 = vector.extract_strided_slice %176 {offsets = [8, 0], sizes = [2, 128], strides = [1, 1]} : vector<16x128xf32> to vector<2x128xf32>
    %cst_75 = arith.constant dense<0.000000e+00> : vector<2x128xf32>
    %252 = tpu.matmul %250, %16, %cst_75 {dimension_numbers = #tpu.dot_dimension_numbers<[1], [0], [0], [1], [0, 0, 1, 1], [], []>} : vector<2x32xf32>, vector<32x128xf32>, vector<2x128xf32> -> vector<2x128xf32>
    %253 = arith.addf %251, %252 : vector<2x128xf32>
    %254 = arith.negf %253 : vector<2x128xf32>
    %255 = math.exp %254 : vector<2x128xf32>
    %cst_76 = arith.constant 1.000000e+00 : f32
    %256 = vector.broadcast %cst_76 : f32 to vector<2x128xf32>
    %257 = arith.addf %256, %255 : vector<2x128xf32>
    %258 = arith.divf %256, %257 : vector<2x128xf32>
    %259 = math.tanh %253 : vector<2x128xf32>
    %260 = vector.extract_strided_slice %258 {offsets = [0, 0], sizes = [2, 32], strides = [1, 1]} : vector<2x128xf32> to vector<2x32xf32>
    %261 = vector.extract_strided_slice %258 {offsets = [0, 32], sizes = [2, 32], strides = [1, 1]} : vector<2x128xf32> to vector<2x32xf32>
    %262 = vector.extract_strided_slice %258 {offsets = [0, 96], sizes = [2, 32], strides = [1, 1]} : vector<2x128xf32> to vector<2x32xf32>
    %263 = vector.extract_strided_slice %259 {offsets = [0, 64], sizes = [2, 32], strides = [1, 1]} : vector<2x128xf32> to vector<2x32xf32>
    %264 = arith.mulf %261, %248 : vector<2x32xf32>
    %265 = arith.mulf %260, %263 : vector<2x32xf32>
    %266 = arith.addf %264, %265 : vector<2x32xf32>
    %267 = math.tanh %266 : vector<2x32xf32>
    %268 = arith.mulf %262, %267 : vector<2x32xf32>
    %269 = vector.extract_strided_slice %176 {offsets = [10, 0], sizes = [2, 128], strides = [1, 1]} : vector<16x128xf32> to vector<2x128xf32>
    %cst_77 = arith.constant dense<0.000000e+00> : vector<2x128xf32>
    %270 = tpu.matmul %268, %16, %cst_77 {dimension_numbers = #tpu.dot_dimension_numbers<[1], [0], [0], [1], [0, 0, 1, 1], [], []>} : vector<2x32xf32>, vector<32x128xf32>, vector<2x128xf32> -> vector<2x128xf32>
    %271 = arith.addf %269, %270 : vector<2x128xf32>
    %272 = arith.negf %271 : vector<2x128xf32>
    %273 = math.exp %272 : vector<2x128xf32>
    %cst_78 = arith.constant 1.000000e+00 : f32
    %274 = vector.broadcast %cst_78 : f32 to vector<2x128xf32>
    %275 = arith.addf %274, %273 : vector<2x128xf32>
    %276 = arith.divf %274, %275 : vector<2x128xf32>
    %277 = math.tanh %271 : vector<2x128xf32>
    %278 = vector.extract_strided_slice %276 {offsets = [0, 0], sizes = [2, 32], strides = [1, 1]} : vector<2x128xf32> to vector<2x32xf32>
    %279 = vector.extract_strided_slice %276 {offsets = [0, 32], sizes = [2, 32], strides = [1, 1]} : vector<2x128xf32> to vector<2x32xf32>
    %280 = vector.extract_strided_slice %276 {offsets = [0, 96], sizes = [2, 32], strides = [1, 1]} : vector<2x128xf32> to vector<2x32xf32>
    %281 = vector.extract_strided_slice %277 {offsets = [0, 64], sizes = [2, 32], strides = [1, 1]} : vector<2x128xf32> to vector<2x32xf32>
    %282 = arith.mulf %279, %266 : vector<2x32xf32>
    %283 = arith.mulf %278, %281 : vector<2x32xf32>
    %284 = arith.addf %282, %283 : vector<2x32xf32>
    %285 = math.tanh %284 : vector<2x32xf32>
    %286 = arith.mulf %280, %285 : vector<2x32xf32>
    %287 = vector.extract_strided_slice %176 {offsets = [12, 0], sizes = [2, 128], strides = [1, 1]} : vector<16x128xf32> to vector<2x128xf32>
    %cst_79 = arith.constant dense<0.000000e+00> : vector<2x128xf32>
    %288 = tpu.matmul %286, %16, %cst_79 {dimension_numbers = #tpu.dot_dimension_numbers<[1], [0], [0], [1], [0, 0, 1, 1], [], []>} : vector<2x32xf32>, vector<32x128xf32>, vector<2x128xf32> -> vector<2x128xf32>
    %289 = arith.addf %287, %288 : vector<2x128xf32>
    %290 = arith.negf %289 : vector<2x128xf32>
    %291 = math.exp %290 : vector<2x128xf32>
    %cst_80 = arith.constant 1.000000e+00 : f32
    %292 = vector.broadcast %cst_80 : f32 to vector<2x128xf32>
    %293 = arith.addf %292, %291 : vector<2x128xf32>
    %294 = arith.divf %292, %293 : vector<2x128xf32>
    %295 = math.tanh %289 : vector<2x128xf32>
    %296 = vector.extract_strided_slice %294 {offsets = [0, 0], sizes = [2, 32], strides = [1, 1]} : vector<2x128xf32> to vector<2x32xf32>
    %297 = vector.extract_strided_slice %294 {offsets = [0, 32], sizes = [2, 32], strides = [1, 1]} : vector<2x128xf32> to vector<2x32xf32>
    %298 = vector.extract_strided_slice %294 {offsets = [0, 96], sizes = [2, 32], strides = [1, 1]} : vector<2x128xf32> to vector<2x32xf32>
    %299 = vector.extract_strided_slice %295 {offsets = [0, 64], sizes = [2, 32], strides = [1, 1]} : vector<2x128xf32> to vector<2x32xf32>
    %300 = arith.mulf %297, %284 : vector<2x32xf32>
    %301 = arith.mulf %296, %299 : vector<2x32xf32>
    %302 = arith.addf %300, %301 : vector<2x32xf32>
    %303 = math.tanh %302 : vector<2x32xf32>
    %304 = arith.mulf %298, %303 : vector<2x32xf32>
    %305 = vector.extract_strided_slice %176 {offsets = [14, 0], sizes = [2, 128], strides = [1, 1]} : vector<16x128xf32> to vector<2x128xf32>
    %cst_81 = arith.constant dense<0.000000e+00> : vector<2x128xf32>
    %306 = tpu.matmul %304, %16, %cst_81 {dimension_numbers = #tpu.dot_dimension_numbers<[1], [0], [0], [1], [0, 0, 1, 1], [], []>} : vector<2x32xf32>, vector<32x128xf32>, vector<2x128xf32> -> vector<2x128xf32>
    %307 = arith.addf %305, %306 : vector<2x128xf32>
    %308 = arith.negf %307 : vector<2x128xf32>
    %309 = math.exp %308 : vector<2x128xf32>
    %cst_82 = arith.constant 1.000000e+00 : f32
    %310 = vector.broadcast %cst_82 : f32 to vector<2x128xf32>
    %311 = arith.addf %310, %309 : vector<2x128xf32>
    %312 = arith.divf %310, %311 : vector<2x128xf32>
    %313 = math.tanh %307 : vector<2x128xf32>
    %314 = vector.extract_strided_slice %312 {offsets = [0, 0], sizes = [2, 32], strides = [1, 1]} : vector<2x128xf32> to vector<2x32xf32>
    %315 = vector.extract_strided_slice %312 {offsets = [0, 32], sizes = [2, 32], strides = [1, 1]} : vector<2x128xf32> to vector<2x32xf32>
    %316 = vector.extract_strided_slice %312 {offsets = [0, 96], sizes = [2, 32], strides = [1, 1]} : vector<2x128xf32> to vector<2x32xf32>
    %317 = vector.extract_strided_slice %313 {offsets = [0, 64], sizes = [2, 32], strides = [1, 1]} : vector<2x128xf32> to vector<2x32xf32>
    %318 = arith.mulf %315, %302 : vector<2x32xf32>
    %319 = arith.mulf %314, %317 : vector<2x32xf32>
    %320 = arith.addf %318, %319 : vector<2x32xf32>
    %321 = math.tanh %320 : vector<2x32xf32>
    %322 = arith.mulf %316, %321 : vector<2x32xf32>
    %323 = vector.extract_strided_slice %23 {offsets = [14, 0], sizes = [2, 4], strides = [1, 1]} : vector<16x4xf32> to vector<2x4xf32>
    %324 = tpu.concatenate %323, %172 in 1 : vector<2x4xf32>, vector<2x32xf32> -> vector<2x36xf32>
    %cst_83 = arith.constant dense<0.000000e+00> : vector<2x128xf32>
    %325 = tpu.matmul %324, %18, %cst_83 {dimension_numbers = #tpu.dot_dimension_numbers<[1], [0], [0], [1], [0, 0, 1, 1], [], []>} : vector<2x36xf32>, vector<36x128xf32>, vector<2x128xf32> -> vector<2x128xf32>
    %326 = vector.broadcast %19 : vector<1x128xf32> to vector<2x128xf32>
    %327 = arith.addf %325, %326 : vector<2x128xf32>
    %328 = arith.negf %327 : vector<2x128xf32>
    %329 = math.exp %328 : vector<2x128xf32>
    %cst_84 = arith.constant 1.000000e+00 : f32
    %330 = vector.broadcast %cst_84 : f32 to vector<2x128xf32>
    %331 = arith.addf %330, %329 : vector<2x128xf32>
    %332 = arith.divf %330, %331 : vector<2x128xf32>
    %333 = math.tanh %327 : vector<2x128xf32>
    %334 = vector.extract_strided_slice %332 {offsets = [0, 0], sizes = [2, 32], strides = [1, 1]} : vector<2x128xf32> to vector<2x32xf32>
    %335 = vector.extract_strided_slice %332 {offsets = [0, 32], sizes = [2, 32], strides = [1, 1]} : vector<2x128xf32> to vector<2x32xf32>
    %336 = vector.extract_strided_slice %332 {offsets = [0, 96], sizes = [2, 32], strides = [1, 1]} : vector<2x128xf32> to vector<2x32xf32>
    %337 = vector.extract_strided_slice %333 {offsets = [0, 64], sizes = [2, 32], strides = [1, 1]} : vector<2x128xf32> to vector<2x32xf32>
    %338 = arith.mulf %335, %170 : vector<2x32xf32>
    %339 = arith.mulf %334, %337 : vector<2x32xf32>
    %340 = arith.addf %338, %339 : vector<2x32xf32>
    %341 = math.tanh %340 : vector<2x32xf32>
    %342 = arith.mulf %336, %341 : vector<2x32xf32>
    %343 = tpu.concatenate %342, %322 in 1 : vector<2x32xf32>, vector<2x32xf32> -> vector<2x64xf32>
    %cst_85 = arith.constant dense<0.000000e+00> : vector<2x128xf32>
    %344 = tpu.matmul %343, %20, %cst_85 {dimension_numbers = #tpu.dot_dimension_numbers<[1], [0], [0], [1], [0, 0, 1, 1], [], []>} : vector<2x64xf32>, vector<64x128xf32>, vector<2x128xf32> -> vector<2x128xf32>
    %345 = vector.broadcast %21 : vector<1x128xf32> to vector<2x128xf32>
    %346 = arith.addf %344, %345 : vector<2x128xf32>
    %347 = arith.negf %346 : vector<2x128xf32>
    %348 = math.exp %347 : vector<2x128xf32>
    %cst_86 = arith.constant 1.000000e+00 : f32
    %349 = vector.broadcast %cst_86 : f32 to vector<2x128xf32>
    %350 = arith.addf %349, %348 : vector<2x128xf32>
    %351 = arith.divf %349, %350 : vector<2x128xf32>
    %352 = math.tanh %346 : vector<2x128xf32>
    %353 = vector.extract_strided_slice %351 {offsets = [0, 0], sizes = [2, 32], strides = [1, 1]} : vector<2x128xf32> to vector<2x32xf32>
    %354 = vector.extract_strided_slice %351 {offsets = [0, 32], sizes = [2, 32], strides = [1, 1]} : vector<2x128xf32> to vector<2x32xf32>
    %355 = vector.extract_strided_slice %351 {offsets = [0, 96], sizes = [2, 32], strides = [1, 1]} : vector<2x128xf32> to vector<2x32xf32>
    %356 = vector.extract_strided_slice %352 {offsets = [0, 64], sizes = [2, 32], strides = [1, 1]} : vector<2x128xf32> to vector<2x32xf32>
    %357 = arith.mulf %354, %320 : vector<2x32xf32>
    %358 = arith.mulf %353, %356 : vector<2x32xf32>
    %359 = arith.addf %357, %358 : vector<2x32xf32>
    %360 = math.tanh %359 : vector<2x32xf32>
    %361 = arith.mulf %355, %360 : vector<2x32xf32>
    %cst_87 = arith.constant dense<0.000000e+00> : vector<2x32xf32>
    %362 = tpu.matmul %361, %0, %cst_87 {dimension_numbers = #tpu.dot_dimension_numbers<[1], [0], [0], [1], [0, 0, 1, 1], [], []>} : vector<2x32xf32>, vector<32x32xf32>, vector<2x32xf32> -> vector<2x32xf32>
    %363 = vector.broadcast %1 : vector<1x32xf32> to vector<2x32xf32>
    %364 = arith.addf %362, %363 : vector<2x32xf32>
    %cst_88 = arith.constant 0.000000e+00 : f32
    %365 = vector.broadcast %cst_88 : f32 to vector<2x32xf32>
    %366 = arith.cmpf ogt, %364, %365 : vector<2x32xf32>
    %cst_89 = arith.constant 0.00999999977 : f32
    %367 = vector.broadcast %cst_89 : f32 to vector<2x32xf32>
    %368 = arith.mulf %367, %364 : vector<2x32xf32>
    %369 = arith.select %366, %364, %368 : vector<2x32xi1>, vector<2x32xf32>
    %cst_90 = arith.constant dense<0.000000e+00> : vector<2x96xf32>
    %370 = tpu.matmul %369, %2, %cst_90 {dimension_numbers = #tpu.dot_dimension_numbers<[1], [0], [0], [1], [0, 0, 1, 1], [], []>} : vector<2x32xf32>, vector<32x96xf32>, vector<2x96xf32> -> vector<2x96xf32>
    %371 = vector.broadcast %3 : vector<1x96xf32> to vector<2x96xf32>
    %372 = arith.addf %370, %371 : vector<2x96xf32>
    %373 = vector.extract_strided_slice %372 {offsets = [0, 0], sizes = [2, 32], strides = [1, 1]} : vector<2x96xf32> to vector<2x32xf32>
    %374 = vector.extract_strided_slice %372 {offsets = [0, 32], sizes = [2, 32], strides = [1, 1]} : vector<2x96xf32> to vector<2x32xf32>
    %375 = vector.extract_strided_slice %372 {offsets = [0, 64], sizes = [2, 32], strides = [1, 1]} : vector<2x96xf32> to vector<2x32xf32>
    %cst_91 = arith.constant dense<0.000000e+00> : vector<2x2xf32>
    %376 = tpu.matmul %373, %374, %cst_91 {dimension_numbers = #tpu.dot_dimension_numbers<[1], [1], [0], [0], [0, 0, 1, 0], [], []>} : vector<2x32xf32>, vector<2x32xf32>, vector<2x2xf32> -> vector<2x2xf32>
    %cst_92 = arith.constant dense<0xFF800000> : vector<2xf32>
    %377 = vector.multi_reduction <maximumf>, %376, %cst_92 [1] : vector<2x2xf32> to vector<2xf32>
    %378 = vector.shape_cast %377 : vector<2xf32> to vector<2x1xf32>
    %379 = vector.broadcast %378 : vector<2x1xf32> to vector<2x2xf32>
    %380 = arith.subf %376, %379 : vector<2x2xf32>
    %381 = math.exp %380 : vector<2x2xf32>
    %cst_93 = arith.constant dense<0.000000e+00> : vector<2xf32>
    %382 = vector.multi_reduction <add>, %381, %cst_93 [1] : vector<2x2xf32> to vector<2xf32>
    %383 = vector.shape_cast %382 : vector<2xf32> to vector<2x1xf32>
    %384 = tpu.reciprocal %383 {approx = true} : vector<2x1xf32> -> vector<2x1xf32>
    %385 = vector.broadcast %384 : vector<2x1xf32> to vector<2x2xf32>
    %386 = arith.mulf %381, %385 : vector<2x2xf32>
    %cst_94 = arith.constant dense<0.000000e+00> : vector<2x32xf32>
    %387 = tpu.matmul %386, %375, %cst_94 {dimension_numbers = #tpu.dot_dimension_numbers<[1], [0], [0], [1], [0, 0, 1, 1], [], []>} : vector<2x2xf32>, vector<2x32xf32>, vector<2x32xf32> -> vector<2x32xf32>
    %cst_95 = arith.constant dense<0.000000e+00> : vector<2x32xf32>
    %388 = tpu.matmul %387, %4, %cst_95 {dimension_numbers = #tpu.dot_dimension_numbers<[1], [0], [0], [1], [0, 0, 1, 1], [], []>} : vector<2x32xf32>, vector<32x32xf32>, vector<2x32xf32> -> vector<2x32xf32>
    %389 = vector.broadcast %5 : vector<1x32xf32> to vector<2x32xf32>
    %390 = arith.addf %388, %389 : vector<2x32xf32>
    %cst_96 = arith.constant dense<0.000000e+00> : vector<2x64xf32>
    %391 = tpu.matmul %390, %6, %cst_96 {dimension_numbers = #tpu.dot_dimension_numbers<[1], [0], [0], [1], [0, 0, 1, 1], [], []>} : vector<2x32xf32>, vector<32x64xf32>, vector<2x64xf32> -> vector<2x64xf32>
    %392 = vector.broadcast %7 : vector<1x64xf32> to vector<2x64xf32>
    %393 = arith.addf %391, %392 : vector<2x64xf32>
    %cst_97 = arith.constant 0.000000e+00 : f32
    %394 = vector.broadcast %cst_97 : f32 to vector<2x64xf32>
    %395 = arith.maximumf %393, %394 : vector<2x64xf32>
    %cst_98 = arith.constant dense<0.000000e+00> : vector<2x32xf32>
    %396 = tpu.matmul %395, %8, %cst_98 {dimension_numbers = #tpu.dot_dimension_numbers<[1], [0], [0], [1], [0, 0, 1, 1], [], []>} : vector<2x64xf32>, vector<64x32xf32>, vector<2x32xf32> -> vector<2x32xf32>
    %397 = vector.broadcast %9 : vector<1x32xf32> to vector<2x32xf32>
    %398 = arith.addf %396, %397 : vector<2x32xf32>
    %cst_99 = arith.constant 0.000000e+00 : f32
    %399 = vector.broadcast %cst_99 : f32 to vector<2x32xf32>
    %400 = arith.maximumf %398, %399 : vector<2x32xf32>
    %cst_100 = arith.constant dense<0.000000e+00> : vector<2x4xf32>
    %401 = tpu.matmul %400, %10, %cst_100 {dimension_numbers = #tpu.dot_dimension_numbers<[1], [0], [0], [1], [0, 0, 1, 1], [], []>} : vector<2x32xf32>, vector<32x4xf32>, vector<2x4xf32> -> vector<2x4xf32>
    %402 = vector.broadcast %11 : vector<1x4xf32> to vector<2x4xf32>
    %403 = arith.addf %401, %402 : vector<2x4xf32>
    %cst_101 = arith.constant 0.000000e+00 : f32
    %404 = vector.broadcast %cst_101 : f32 to vector<2x4xf32>
    %405 = arith.maximumf %403, %404 : vector<2x4xf32>
    %406 = tpu.concatenate %405, %342 in 1 : vector<2x4xf32>, vector<2x32xf32> -> vector<2x36xf32>
    %cst_102 = arith.constant dense<0.000000e+00> : vector<2x128xf32>
    %407 = tpu.matmul %406, %18, %cst_102 {dimension_numbers = #tpu.dot_dimension_numbers<[1], [0], [0], [1], [0, 0, 1, 1], [], []>} : vector<2x36xf32>, vector<36x128xf32>, vector<2x128xf32> -> vector<2x128xf32>
    %408 = vector.broadcast %19 : vector<1x128xf32> to vector<2x128xf32>
    %409 = arith.addf %407, %408 : vector<2x128xf32>
    %410 = arith.negf %409 : vector<2x128xf32>
    %411 = math.exp %410 : vector<2x128xf32>
    %cst_103 = arith.constant 1.000000e+00 : f32
    %412 = vector.broadcast %cst_103 : f32 to vector<2x128xf32>
    %413 = arith.addf %412, %411 : vector<2x128xf32>
    %414 = arith.divf %412, %413 : vector<2x128xf32>
    %415 = math.tanh %409 : vector<2x128xf32>
    %416 = vector.extract_strided_slice %414 {offsets = [0, 0], sizes = [2, 32], strides = [1, 1]} : vector<2x128xf32> to vector<2x32xf32>
    %417 = vector.extract_strided_slice %414 {offsets = [0, 32], sizes = [2, 32], strides = [1, 1]} : vector<2x128xf32> to vector<2x32xf32>
    %418 = vector.extract_strided_slice %414 {offsets = [0, 96], sizes = [2, 32], strides = [1, 1]} : vector<2x128xf32> to vector<2x32xf32>
    %419 = vector.extract_strided_slice %415 {offsets = [0, 64], sizes = [2, 32], strides = [1, 1]} : vector<2x128xf32> to vector<2x32xf32>
    %420 = arith.mulf %417, %340 : vector<2x32xf32>
    %421 = arith.mulf %416, %419 : vector<2x32xf32>
    %422 = arith.addf %420, %421 : vector<2x32xf32>
    %423 = math.tanh %422 : vector<2x32xf32>
    %424 = arith.mulf %418, %423 : vector<2x32xf32>
    %425 = tpu.concatenate %424, %361 in 1 : vector<2x32xf32>, vector<2x32xf32> -> vector<2x64xf32>
    %cst_104 = arith.constant dense<0.000000e+00> : vector<2x128xf32>
    %426 = tpu.matmul %425, %20, %cst_104 {dimension_numbers = #tpu.dot_dimension_numbers<[1], [0], [0], [1], [0, 0, 1, 1], [], []>} : vector<2x64xf32>, vector<64x128xf32>, vector<2x128xf32> -> vector<2x128xf32>
    %427 = vector.broadcast %21 : vector<1x128xf32> to vector<2x128xf32>
    %428 = arith.addf %426, %427 : vector<2x128xf32>
    %429 = arith.negf %428 : vector<2x128xf32>
    %430 = math.exp %429 : vector<2x128xf32>
    %cst_105 = arith.constant 1.000000e+00 : f32
    %431 = vector.broadcast %cst_105 : f32 to vector<2x128xf32>
    %432 = arith.addf %431, %430 : vector<2x128xf32>
    %433 = arith.divf %431, %432 : vector<2x128xf32>
    %434 = math.tanh %428 : vector<2x128xf32>
    %435 = vector.extract_strided_slice %433 {offsets = [0, 0], sizes = [2, 32], strides = [1, 1]} : vector<2x128xf32> to vector<2x32xf32>
    %436 = vector.extract_strided_slice %433 {offsets = [0, 32], sizes = [2, 32], strides = [1, 1]} : vector<2x128xf32> to vector<2x32xf32>
    %437 = vector.extract_strided_slice %433 {offsets = [0, 96], sizes = [2, 32], strides = [1, 1]} : vector<2x128xf32> to vector<2x32xf32>
    %438 = vector.extract_strided_slice %434 {offsets = [0, 64], sizes = [2, 32], strides = [1, 1]} : vector<2x128xf32> to vector<2x32xf32>
    %439 = arith.mulf %436, %359 : vector<2x32xf32>
    %440 = arith.mulf %435, %438 : vector<2x32xf32>
    %441 = arith.addf %439, %440 : vector<2x32xf32>
    %442 = math.tanh %441 : vector<2x32xf32>
    %443 = arith.mulf %437, %442 : vector<2x32xf32>
    %cst_106 = arith.constant dense<0.000000e+00> : vector<2x32xf32>
    %444 = tpu.matmul %443, %0, %cst_106 {dimension_numbers = #tpu.dot_dimension_numbers<[1], [0], [0], [1], [0, 0, 1, 1], [], []>} : vector<2x32xf32>, vector<32x32xf32>, vector<2x32xf32> -> vector<2x32xf32>
    %445 = vector.broadcast %1 : vector<1x32xf32> to vector<2x32xf32>
    %446 = arith.addf %444, %445 : vector<2x32xf32>
    %cst_107 = arith.constant 0.000000e+00 : f32
    %447 = vector.broadcast %cst_107 : f32 to vector<2x32xf32>
    %448 = arith.cmpf ogt, %446, %447 : vector<2x32xf32>
    %cst_108 = arith.constant 0.00999999977 : f32
    %449 = vector.broadcast %cst_108 : f32 to vector<2x32xf32>
    %450 = arith.mulf %449, %446 : vector<2x32xf32>
    %451 = arith.select %448, %446, %450 : vector<2x32xi1>, vector<2x32xf32>
    %cst_109 = arith.constant dense<0.000000e+00> : vector<2x96xf32>
    %452 = tpu.matmul %451, %2, %cst_109 {dimension_numbers = #tpu.dot_dimension_numbers<[1], [0], [0], [1], [0, 0, 1, 1], [], []>} : vector<2x32xf32>, vector<32x96xf32>, vector<2x96xf32> -> vector<2x96xf32>
    %453 = vector.broadcast %3 : vector<1x96xf32> to vector<2x96xf32>
    %454 = arith.addf %452, %453 : vector<2x96xf32>
    %455 = vector.extract_strided_slice %454 {offsets = [0, 0], sizes = [2, 32], strides = [1, 1]} : vector<2x96xf32> to vector<2x32xf32>
    %456 = vector.extract_strided_slice %454 {offsets = [0, 32], sizes = [2, 32], strides = [1, 1]} : vector<2x96xf32> to vector<2x32xf32>
    %457 = vector.extract_strided_slice %454 {offsets = [0, 64], sizes = [2, 32], strides = [1, 1]} : vector<2x96xf32> to vector<2x32xf32>
    %cst_110 = arith.constant dense<0.000000e+00> : vector<2x2xf32>
    %458 = tpu.matmul %455, %456, %cst_110 {dimension_numbers = #tpu.dot_dimension_numbers<[1], [1], [0], [0], [0, 0, 1, 0], [], []>} : vector<2x32xf32>, vector<2x32xf32>, vector<2x2xf32> -> vector<2x2xf32>
    %cst_111 = arith.constant dense<0xFF800000> : vector<2xf32>
    %459 = vector.multi_reduction <maximumf>, %458, %cst_111 [1] : vector<2x2xf32> to vector<2xf32>
    %460 = vector.shape_cast %459 : vector<2xf32> to vector<2x1xf32>
    %461 = vector.broadcast %460 : vector<2x1xf32> to vector<2x2xf32>
    %462 = arith.subf %458, %461 : vector<2x2xf32>
    %463 = math.exp %462 : vector<2x2xf32>
    %cst_112 = arith.constant dense<0.000000e+00> : vector<2xf32>
    %464 = vector.multi_reduction <add>, %463, %cst_112 [1] : vector<2x2xf32> to vector<2xf32>
    %465 = vector.shape_cast %464 : vector<2xf32> to vector<2x1xf32>
    %466 = tpu.reciprocal %465 {approx = true} : vector<2x1xf32> -> vector<2x1xf32>
    %467 = vector.broadcast %466 : vector<2x1xf32> to vector<2x2xf32>
    %468 = arith.mulf %463, %467 : vector<2x2xf32>
    %cst_113 = arith.constant dense<0.000000e+00> : vector<2x32xf32>
    %469 = tpu.matmul %468, %457, %cst_113 {dimension_numbers = #tpu.dot_dimension_numbers<[1], [0], [0], [1], [0, 0, 1, 1], [], []>} : vector<2x2xf32>, vector<2x32xf32>, vector<2x32xf32> -> vector<2x32xf32>
    %cst_114 = arith.constant dense<0.000000e+00> : vector<2x32xf32>
    %470 = tpu.matmul %469, %4, %cst_114 {dimension_numbers = #tpu.dot_dimension_numbers<[1], [0], [0], [1], [0, 0, 1, 1], [], []>} : vector<2x32xf32>, vector<32x32xf32>, vector<2x32xf32> -> vector<2x32xf32>
    %471 = vector.broadcast %5 : vector<1x32xf32> to vector<2x32xf32>
    %472 = arith.addf %470, %471 : vector<2x32xf32>
    %cst_115 = arith.constant dense<0.000000e+00> : vector<2x64xf32>
    %473 = tpu.matmul %472, %6, %cst_115 {dimension_numbers = #tpu.dot_dimension_numbers<[1], [0], [0], [1], [0, 0, 1, 1], [], []>} : vector<2x32xf32>, vector<32x64xf32>, vector<2x64xf32> -> vector<2x64xf32>
    %474 = vector.broadcast %7 : vector<1x64xf32> to vector<2x64xf32>
    %475 = arith.addf %473, %474 : vector<2x64xf32>
    %cst_116 = arith.constant 0.000000e+00 : f32
    %476 = vector.broadcast %cst_116 : f32 to vector<2x64xf32>
    %477 = arith.maximumf %475, %476 : vector<2x64xf32>
    %cst_117 = arith.constant dense<0.000000e+00> : vector<2x32xf32>
    %478 = tpu.matmul %477, %8, %cst_117 {dimension_numbers = #tpu.dot_dimension_numbers<[1], [0], [0], [1], [0, 0, 1, 1], [], []>} : vector<2x64xf32>, vector<64x32xf32>, vector<2x32xf32> -> vector<2x32xf32>
    %479 = vector.broadcast %9 : vector<1x32xf32> to vector<2x32xf32>
    %480 = arith.addf %478, %479 : vector<2x32xf32>
    %cst_118 = arith.constant 0.000000e+00 : f32
    %481 = vector.broadcast %cst_118 : f32 to vector<2x32xf32>
    %482 = arith.maximumf %480, %481 : vector<2x32xf32>
    %cst_119 = arith.constant dense<0.000000e+00> : vector<2x4xf32>
    %483 = tpu.matmul %482, %10, %cst_119 {dimension_numbers = #tpu.dot_dimension_numbers<[1], [0], [0], [1], [0, 0, 1, 1], [], []>} : vector<2x32xf32>, vector<32x4xf32>, vector<2x4xf32> -> vector<2x4xf32>
    %484 = vector.broadcast %11 : vector<1x4xf32> to vector<2x4xf32>
    %485 = arith.addf %483, %484 : vector<2x4xf32>
    %cst_120 = arith.constant 0.000000e+00 : f32
    %486 = vector.broadcast %cst_120 : f32 to vector<2x4xf32>
    %487 = arith.maximumf %485, %486 : vector<2x4xf32>
    %488 = tpu.concatenate %487, %424 in 1 : vector<2x4xf32>, vector<2x32xf32> -> vector<2x36xf32>
    %cst_121 = arith.constant dense<0.000000e+00> : vector<2x128xf32>
    %489 = tpu.matmul %488, %18, %cst_121 {dimension_numbers = #tpu.dot_dimension_numbers<[1], [0], [0], [1], [0, 0, 1, 1], [], []>} : vector<2x36xf32>, vector<36x128xf32>, vector<2x128xf32> -> vector<2x128xf32>
    %490 = vector.broadcast %19 : vector<1x128xf32> to vector<2x128xf32>
    %491 = arith.addf %489, %490 : vector<2x128xf32>
    %492 = arith.negf %491 : vector<2x128xf32>
    %493 = math.exp %492 : vector<2x128xf32>
    %cst_122 = arith.constant 1.000000e+00 : f32
    %494 = vector.broadcast %cst_122 : f32 to vector<2x128xf32>
    %495 = arith.addf %494, %493 : vector<2x128xf32>
    %496 = arith.divf %494, %495 : vector<2x128xf32>
    %497 = math.tanh %491 : vector<2x128xf32>
    %498 = vector.extract_strided_slice %496 {offsets = [0, 0], sizes = [2, 32], strides = [1, 1]} : vector<2x128xf32> to vector<2x32xf32>
    %499 = vector.extract_strided_slice %496 {offsets = [0, 32], sizes = [2, 32], strides = [1, 1]} : vector<2x128xf32> to vector<2x32xf32>
    %500 = vector.extract_strided_slice %496 {offsets = [0, 96], sizes = [2, 32], strides = [1, 1]} : vector<2x128xf32> to vector<2x32xf32>
    %501 = vector.extract_strided_slice %497 {offsets = [0, 64], sizes = [2, 32], strides = [1, 1]} : vector<2x128xf32> to vector<2x32xf32>
    %502 = arith.mulf %499, %422 : vector<2x32xf32>
    %503 = arith.mulf %498, %501 : vector<2x32xf32>
    %504 = arith.addf %502, %503 : vector<2x32xf32>
    %505 = math.tanh %504 : vector<2x32xf32>
    %506 = arith.mulf %500, %505 : vector<2x32xf32>
    %507 = tpu.concatenate %506, %443 in 1 : vector<2x32xf32>, vector<2x32xf32> -> vector<2x64xf32>
    %cst_123 = arith.constant dense<0.000000e+00> : vector<2x128xf32>
    %508 = tpu.matmul %507, %20, %cst_123 {dimension_numbers = #tpu.dot_dimension_numbers<[1], [0], [0], [1], [0, 0, 1, 1], [], []>} : vector<2x64xf32>, vector<64x128xf32>, vector<2x128xf32> -> vector<2x128xf32>
    %509 = vector.broadcast %21 : vector<1x128xf32> to vector<2x128xf32>
    %510 = arith.addf %508, %509 : vector<2x128xf32>
    %511 = arith.negf %510 : vector<2x128xf32>
    %512 = math.exp %511 : vector<2x128xf32>
    %cst_124 = arith.constant 1.000000e+00 : f32
    %513 = vector.broadcast %cst_124 : f32 to vector<2x128xf32>
    %514 = arith.addf %513, %512 : vector<2x128xf32>
    %515 = arith.divf %513, %514 : vector<2x128xf32>
    %516 = math.tanh %510 : vector<2x128xf32>
    %517 = vector.extract_strided_slice %515 {offsets = [0, 0], sizes = [2, 32], strides = [1, 1]} : vector<2x128xf32> to vector<2x32xf32>
    %518 = vector.extract_strided_slice %515 {offsets = [0, 32], sizes = [2, 32], strides = [1, 1]} : vector<2x128xf32> to vector<2x32xf32>
    %519 = vector.extract_strided_slice %515 {offsets = [0, 96], sizes = [2, 32], strides = [1, 1]} : vector<2x128xf32> to vector<2x32xf32>
    %520 = vector.extract_strided_slice %516 {offsets = [0, 64], sizes = [2, 32], strides = [1, 1]} : vector<2x128xf32> to vector<2x32xf32>
    %521 = arith.mulf %518, %441 : vector<2x32xf32>
    %522 = arith.mulf %517, %520 : vector<2x32xf32>
    %523 = arith.addf %521, %522 : vector<2x32xf32>
    %524 = math.tanh %523 : vector<2x32xf32>
    %525 = arith.mulf %519, %524 : vector<2x32xf32>
    %cst_125 = arith.constant dense<0.000000e+00> : vector<2x32xf32>
    %526 = tpu.matmul %525, %0, %cst_125 {dimension_numbers = #tpu.dot_dimension_numbers<[1], [0], [0], [1], [0, 0, 1, 1], [], []>} : vector<2x32xf32>, vector<32x32xf32>, vector<2x32xf32> -> vector<2x32xf32>
    %527 = vector.broadcast %1 : vector<1x32xf32> to vector<2x32xf32>
    %528 = arith.addf %526, %527 : vector<2x32xf32>
    %cst_126 = arith.constant 0.000000e+00 : f32
    %529 = vector.broadcast %cst_126 : f32 to vector<2x32xf32>
    %530 = arith.cmpf ogt, %528, %529 : vector<2x32xf32>
    %cst_127 = arith.constant 0.00999999977 : f32
    %531 = vector.broadcast %cst_127 : f32 to vector<2x32xf32>
    %532 = arith.mulf %531, %528 : vector<2x32xf32>
    %533 = arith.select %530, %528, %532 : vector<2x32xi1>, vector<2x32xf32>
    %cst_128 = arith.constant dense<0.000000e+00> : vector<2x96xf32>
    %534 = tpu.matmul %533, %2, %cst_128 {dimension_numbers = #tpu.dot_dimension_numbers<[1], [0], [0], [1], [0, 0, 1, 1], [], []>} : vector<2x32xf32>, vector<32x96xf32>, vector<2x96xf32> -> vector<2x96xf32>
    %535 = vector.broadcast %3 : vector<1x96xf32> to vector<2x96xf32>
    %536 = arith.addf %534, %535 : vector<2x96xf32>
    %537 = vector.extract_strided_slice %536 {offsets = [0, 0], sizes = [2, 32], strides = [1, 1]} : vector<2x96xf32> to vector<2x32xf32>
    %538 = vector.extract_strided_slice %536 {offsets = [0, 32], sizes = [2, 32], strides = [1, 1]} : vector<2x96xf32> to vector<2x32xf32>
    %539 = vector.extract_strided_slice %536 {offsets = [0, 64], sizes = [2, 32], strides = [1, 1]} : vector<2x96xf32> to vector<2x32xf32>
    %cst_129 = arith.constant dense<0.000000e+00> : vector<2x2xf32>
    %540 = tpu.matmul %537, %538, %cst_129 {dimension_numbers = #tpu.dot_dimension_numbers<[1], [1], [0], [0], [0, 0, 1, 0], [], []>} : vector<2x32xf32>, vector<2x32xf32>, vector<2x2xf32> -> vector<2x2xf32>
    %cst_130 = arith.constant dense<0xFF800000> : vector<2xf32>
    %541 = vector.multi_reduction <maximumf>, %540, %cst_130 [1] : vector<2x2xf32> to vector<2xf32>
    %542 = vector.shape_cast %541 : vector<2xf32> to vector<2x1xf32>
    %543 = vector.broadcast %542 : vector<2x1xf32> to vector<2x2xf32>
    %544 = arith.subf %540, %543 : vector<2x2xf32>
    %545 = math.exp %544 : vector<2x2xf32>
    %cst_131 = arith.constant dense<0.000000e+00> : vector<2xf32>
    %546 = vector.multi_reduction <add>, %545, %cst_131 [1] : vector<2x2xf32> to vector<2xf32>
    %547 = vector.shape_cast %546 : vector<2xf32> to vector<2x1xf32>
    %548 = tpu.reciprocal %547 {approx = true} : vector<2x1xf32> -> vector<2x1xf32>
    %549 = vector.broadcast %548 : vector<2x1xf32> to vector<2x2xf32>
    %550 = arith.mulf %545, %549 : vector<2x2xf32>
    %cst_132 = arith.constant dense<0.000000e+00> : vector<2x32xf32>
    %551 = tpu.matmul %550, %539, %cst_132 {dimension_numbers = #tpu.dot_dimension_numbers<[1], [0], [0], [1], [0, 0, 1, 1], [], []>} : vector<2x2xf32>, vector<2x32xf32>, vector<2x32xf32> -> vector<2x32xf32>
    %cst_133 = arith.constant dense<0.000000e+00> : vector<2x32xf32>
    %552 = tpu.matmul %551, %4, %cst_133 {dimension_numbers = #tpu.dot_dimension_numbers<[1], [0], [0], [1], [0, 0, 1, 1], [], []>} : vector<2x32xf32>, vector<32x32xf32>, vector<2x32xf32> -> vector<2x32xf32>
    %553 = vector.broadcast %5 : vector<1x32xf32> to vector<2x32xf32>
    %554 = arith.addf %552, %553 : vector<2x32xf32>
    %cst_134 = arith.constant dense<0.000000e+00> : vector<2x64xf32>
    %555 = tpu.matmul %554, %6, %cst_134 {dimension_numbers = #tpu.dot_dimension_numbers<[1], [0], [0], [1], [0, 0, 1, 1], [], []>} : vector<2x32xf32>, vector<32x64xf32>, vector<2x64xf32> -> vector<2x64xf32>
    %556 = vector.broadcast %7 : vector<1x64xf32> to vector<2x64xf32>
    %557 = arith.addf %555, %556 : vector<2x64xf32>
    %cst_135 = arith.constant 0.000000e+00 : f32
    %558 = vector.broadcast %cst_135 : f32 to vector<2x64xf32>
    %559 = arith.maximumf %557, %558 : vector<2x64xf32>
    %cst_136 = arith.constant dense<0.000000e+00> : vector<2x32xf32>
    %560 = tpu.matmul %559, %8, %cst_136 {dimension_numbers = #tpu.dot_dimension_numbers<[1], [0], [0], [1], [0, 0, 1, 1], [], []>} : vector<2x64xf32>, vector<64x32xf32>, vector<2x32xf32> -> vector<2x32xf32>
    %561 = vector.broadcast %9 : vector<1x32xf32> to vector<2x32xf32>
    %562 = arith.addf %560, %561 : vector<2x32xf32>
    %cst_137 = arith.constant 0.000000e+00 : f32
    %563 = vector.broadcast %cst_137 : f32 to vector<2x32xf32>
    %564 = arith.maximumf %562, %563 : vector<2x32xf32>
    %cst_138 = arith.constant dense<0.000000e+00> : vector<2x4xf32>
    %565 = tpu.matmul %564, %10, %cst_138 {dimension_numbers = #tpu.dot_dimension_numbers<[1], [0], [0], [1], [0, 0, 1, 1], [], []>} : vector<2x32xf32>, vector<32x4xf32>, vector<2x4xf32> -> vector<2x4xf32>
    %566 = vector.broadcast %11 : vector<1x4xf32> to vector<2x4xf32>
    %567 = arith.addf %565, %566 : vector<2x4xf32>
    %cst_139 = arith.constant 0.000000e+00 : f32
    %568 = vector.broadcast %cst_139 : f32 to vector<2x4xf32>
    %569 = arith.maximumf %567, %568 : vector<2x4xf32>
    %570 = tpu.concatenate %405, %487, %569 in 1 : vector<2x4xf32>, vector<2x4xf32>, vector<2x4xf32> -> vector<2x12xf32>
    %c0_140 = arith.constant 0 : index
    %c0_141 = arith.constant 0 : index
    %c0_142 = arith.constant 0 : index
    %571 = vector.load %arg24[%c0_140, %c0_141, %c0_142] : memref<1x2x12xf32, #tpu.memory_space<vmem>>, vector<1x2x12xf32>
    %572 = vector.shape_cast %571 : vector<1x2x12xf32> to vector<2x12xf32>
    %573 = vector.shape_cast %570 : vector<2x12xf32> to vector<1x2x12xf32>
    tpu.vector_store %arg24[%c0_140, %c0_141, %c0_142], %573 {strides = array<i32>} : memref<1x2x12xf32, #tpu.memory_space<vmem>>, vector<1x2x12xf32>,
    return
  }
  func.func @transform_0(%arg0: i32) -> (i32, i32, i32) {
    %c0_i32 = arith.constant 0 : i32
    %c0_i32_0 = arith.constant 0 : i32
    %c0_i32_1 = arith.constant 0 : i32
    return %arg0, %c0_i32, %c0_i32_0 : i32, i32, i32
  }
  func.func @transform_1(%arg0: i32) -> (i32, i32) {
    %c0_i32 = arith.constant 0 : i32
    %c0_i32_0 = arith.constant 0 : i32
    %c0_i32_1 = arith.constant 0 : i32
    return %c0_i32, %c0_i32_0 : i32, i32
  }
  func.func @transform_2(%arg0: i32) -> (i32, i32) {
    %c0_i32 = arith.constant 0 : i32
    %c0_i32_0 = arith.constant 0 : i32
    %c0_i32_1 = arith.constant 0 : i32
    return %c0_i32, %c0_i32_0 : i32, i32
  }
  func.func @transform_3(%arg0: i32) -> (i32, i32) {
    %c0_i32 = arith.constant 0 : i32
    %c0_i32_0 = arith.constant 0 : i32
    %c0_i32_1 = arith.constant 0 : i32
    return %c0_i32, %c0_i32_0 : i32, i32
  }
  func.func @transform_4(%arg0: i32) -> (i32, i32) {
    %c0_i32 = arith.constant 0 : i32
    %c0_i32_0 = arith.constant 0 : i32
    %c0_i32_1 = arith.constant 0 : i32
    return %c0_i32, %c0_i32_0 : i32, i32
  }
  func.func @transform_5(%arg0: i32) -> (i32, i32) {
    %c0_i32 = arith.constant 0 : i32
    %c0_i32_0 = arith.constant 0 : i32
    %c0_i32_1 = arith.constant 0 : i32
    return %c0_i32, %c0_i32_0 : i32, i32
  }
  func.func @transform_6(%arg0: i32) -> (i32, i32) {
    %c0_i32 = arith.constant 0 : i32
    %c0_i32_0 = arith.constant 0 : i32
    %c0_i32_1 = arith.constant 0 : i32
    return %c0_i32, %c0_i32_0 : i32, i32
  }
  func.func @transform_7(%arg0: i32) -> (i32, i32) {
    %c0_i32 = arith.constant 0 : i32
    %c0_i32_0 = arith.constant 0 : i32
    %c0_i32_1 = arith.constant 0 : i32
    return %c0_i32, %c0_i32_0 : i32, i32
  }
  func.func @transform_8(%arg0: i32) -> (i32, i32) {
    %c0_i32 = arith.constant 0 : i32
    %c0_i32_0 = arith.constant 0 : i32
    %c0_i32_1 = arith.constant 0 : i32
    return %c0_i32, %c0_i32_0 : i32, i32
  }
  func.func @transform_9(%arg0: i32) -> (i32, i32) {
    %c0_i32 = arith.constant 0 : i32
    %c0_i32_0 = arith.constant 0 : i32
    %c0_i32_1 = arith.constant 0 : i32
    return %c0_i32, %c0_i32_0 : i32, i32
  }
  func.func @transform_10(%arg0: i32) -> (i32, i32) {
    %c0_i32 = arith.constant 0 : i32
    %c0_i32_0 = arith.constant 0 : i32
    %c0_i32_1 = arith.constant 0 : i32
    return %c0_i32, %c0_i32_0 : i32, i32
  }
  func.func @transform_11(%arg0: i32) -> (i32, i32) {
    %c0_i32 = arith.constant 0 : i32
    %c0_i32_0 = arith.constant 0 : i32
    %c0_i32_1 = arith.constant 0 : i32
    return %c0_i32, %c0_i32_0 : i32, i32
  }
  func.func @transform_12(%arg0: i32) -> (i32, i32) {
    %c0_i32 = arith.constant 0 : i32
    %c0_i32_0 = arith.constant 0 : i32
    %c0_i32_1 = arith.constant 0 : i32
    return %c0_i32, %c0_i32_0 : i32, i32
  }
  func.func @transform_13(%arg0: i32) -> (i32, i32) {
    %c0_i32 = arith.constant 0 : i32
    %c0_i32_0 = arith.constant 0 : i32
    %c0_i32_1 = arith.constant 0 : i32
    return %c0_i32, %c0_i32_0 : i32, i32
  }
  func.func @transform_14(%arg0: i32) -> (i32, i32) {
    %c0_i32 = arith.constant 0 : i32
    %c0_i32_0 = arith.constant 0 : i32
    %c0_i32_1 = arith.constant 0 : i32
    return %c0_i32, %c0_i32_0 : i32, i32
  }
  func.func @transform_15(%arg0: i32) -> (i32, i32) {
    %c0_i32 = arith.constant 0 : i32
    %c0_i32_0 = arith.constant 0 : i32
    %c0_i32_1 = arith.constant 0 : i32
    return %c0_i32, %c0_i32_0 : i32, i32
  }
  func.func @transform_16(%arg0: i32) -> (i32, i32) {
    %c0_i32 = arith.constant 0 : i32
    %c0_i32_0 = arith.constant 0 : i32
    %c0_i32_1 = arith.constant 0 : i32
    return %c0_i32, %c0_i32_0 : i32, i32
  }
  func.func @transform_17(%arg0: i32) -> (i32, i32) {
    %c0_i32 = arith.constant 0 : i32
    %c0_i32_0 = arith.constant 0 : i32
    %c0_i32_1 = arith.constant 0 : i32
    return %c0_i32, %c0_i32_0 : i32, i32
  }
  func.func @transform_18(%arg0: i32) -> (i32, i32) {
    %c0_i32 = arith.constant 0 : i32
    %c0_i32_0 = arith.constant 0 : i32
    %c0_i32_1 = arith.constant 0 : i32
    return %c0_i32, %c0_i32_0 : i32, i32
  }
  func.func @transform_19(%arg0: i32) -> (i32, i32) {
    %c0_i32 = arith.constant 0 : i32
    %c0_i32_0 = arith.constant 0 : i32
    %c0_i32_1 = arith.constant 0 : i32
    return %c0_i32, %c0_i32_0 : i32, i32
  }
  func.func @transform_20(%arg0: i32) -> (i32, i32) {
    %c0_i32 = arith.constant 0 : i32
    %c0_i32_0 = arith.constant 0 : i32
    %c0_i32_1 = arith.constant 0 : i32
    return %c0_i32, %c0_i32_0 : i32, i32
  }
  func.func @transform_21(%arg0: i32) -> (i32, i32) {
    %c0_i32 = arith.constant 0 : i32
    %c0_i32_0 = arith.constant 0 : i32
    %c0_i32_1 = arith.constant 0 : i32
    return %c0_i32, %c0_i32_0 : i32, i32
  }
  func.func @transform_22(%arg0: i32) -> (i32, i32) {
    %c0_i32 = arith.constant 0 : i32
    %c0_i32_0 = arith.constant 0 : i32
    %c0_i32_1 = arith.constant 0 : i32
    return %c0_i32, %c0_i32_0 : i32, i32
  }
  func.func @transform_23(%arg0: i32) -> (i32, i32, i32) {
    %c0_i32 = arith.constant 0 : i32
    %c0_i32_0 = arith.constant 0 : i32
    %c0_i32_1 = arith.constant 0 : i32
    return %arg0, %c0_i32, %c0_i32_0 : i32, i32, i32
  }
}

</mosaic_0001>

<llo_original>
// kernel: tpu_custom_call.1
$region0: #{tpu_custom_call.1}
  #allocation0 [shape = 'u32[]', space=smem, size = 0x4, offset = 0x4, fixed_abs, tag = 'smem constant byte address 0x4 - core index']
  #allocation1 [shape = 'u32[144,128]{1,0:T(1,128)}', space=vmem, size = 0x12000, scoped, tag = 'internal scratch']
  %s0 = inlined_call_operand.vmem [shape: f32[1,16,4], index: 0, kind: input, shape index: {}]
  %s1 = inlined_call_operand.hbm [shape: f32[4,128], index: 1, kind: input, shape index: {}]
  %s2 = inlined_call_operand.vmem [shape: f32[32,128], index: 2, kind: input, shape index: {}]
  %s3 = inlined_call_operand.hbm [shape: f32[1,128], index: 3, kind: input, shape index: {}]
  %s4 = inlined_call_operand.hbm [shape: f32[32,128], index: 4, kind: input, shape index: {}]
  %s5 = inlined_call_operand.hbm [shape: f32[32,128], index: 5, kind: input, shape index: {}]
  %s6 = inlined_call_operand.hbm [shape: f32[1,128], index: 6, kind: input, shape index: {}]
  %s7 = inlined_call_operand.vmem [shape: f32[36,128], index: 7, kind: input, shape index: {}]
  %s8 = inlined_call_operand.hbm [shape: f32[1,128], index: 8, kind: input, shape index: {}]
  %s9 = inlined_call_operand.vmem [shape: f32[64,128], index: 9, kind: input, shape index: {}]
  %s10 = inlined_call_operand.hbm [shape: f32[1,128], index: 10, kind: input, shape index: {}]
  %s11 = inlined_call_operand.vmem [shape: f32[32,32], index: 11, kind: input, shape index: {}]
  %s12 = inlined_call_operand.vmem [shape: f32[1,32], index: 12, kind: input, shape index: {}]
  %s13 = inlined_call_operand.hbm [shape: f32[32,96], index: 13, kind: input, shape index: {}]
  %s14 = inlined_call_operand.vmem [shape: f32[1,96], index: 14, kind: input, shape index: {}]
  %s15 = inlined_call_operand.hbm [shape: f32[32,32], index: 15, kind: input, shape index: {}]
  %s16 = inlined_call_operand.vmem [shape: f32[1,32], index: 16, kind: input, shape index: {}]
  %s17 = inlined_call_operand.hbm [shape: f32[32,64], index: 17, kind: input, shape index: {}]
  %s18 = inlined_call_operand.vmem [shape: f32[1,64], index: 18, kind: input, shape index: {}]
  %s19 = inlined_call_operand.vmem [shape: f32[64,32], index: 19, kind: input, shape index: {}]
  %s20 = inlined_call_operand.vmem [shape: f32[1,32], index: 20, kind: input, shape index: {}]
  %s21 = inlined_call_operand.vmem [shape: f32[32,4], index: 21, kind: input, shape index: {}]
  %s22 = inlined_call_operand.vmem [shape: f32[1,4], index: 22, kind: input, shape index: {}]
  %s23 = inlined_call_operand.hbm [shape: f32[1,2,12], index: 23, kind: output, shape index: {}]
  %s24 = sld [smem:[#allocation0]]
  $region142: #{tpu_custom_call.1} parent=0
    _
  %s26 = ssub.s32 1, %s24
  %s27 = scalar_select 0, %s26, %s24
  $region1: #{tpu_custom_call.1} parent=0
    #allocation2 [shape = 'u8[2048]{0}', space=vmem, size = 0x800, scoped, tag = 'input window, operand 1, single buffered']
    #allocation3 [shape = 's32[1]{0}', space=sflag, size = 0x4, scoped, tag = 'scoped memory for tpu_custom_call.1']
    #allocation4 [shape = 's32[1]{0}', space=sflag, size = 0x4, scoped, tag = 'scoped memory for tpu_custom_call.1']
    #allocation5 [shape = 'u8[512]{0}', space=vmem, size = 0x400, scoped, tag = 'input window, operand 3, single buffered']
    #allocation6 [shape = 's32[1]{0}', space=sflag, size = 0x4, scoped, tag = 'scoped memory for tpu_custom_call.1']
    #allocation7 [shape = 'u8[16384]{0}', space=vmem, size = 0x4000, scoped, tag = 'input window, operand 4, single buffered']
    #allocation8 [shape = 'u8[16384]{0}', space=vmem, size = 0x4000, scoped, tag = 'input window, operand 5, single buffered']
    #allocation9 [shape = 's32[1]{0}', space=sflag, size = 0x4, scoped, tag = 'scoped memory for tpu_custom_call.1']
    #allocation10 [shape = 'u8[512]{0}', space=vmem, size = 0x400, scoped, tag = 'input window, operand 6, single buffered']
    #allocation11 [shape = 'u8[512]{0}', space=vmem, size = 0x400, scoped, tag = 'input window, operand 8, single buffered']
    #allocation12 [shape = 's32[1]{0}', space=sflag, size = 0x4, scoped, tag = 'scoped memory for tpu_custom_call.1']
    #allocation13 [shape = 'u8[512]{0}', space=vmem, size = 0x400, scoped, tag = 'input window, operand 10, single buffered']
    #allocation14 [shape = 'u8[16384]{0}', space=vmem, size = 0x4000, scoped, tag = 'input window, operand 13, single buffered']
    #allocation15 [shape = 's32[1]{0}', space=sflag, size = 0x4, scoped, tag = 'scoped memory for tpu_custom_call.1']
    #allocation16 [shape = 'u8[16384]{0}', space=vmem, size = 0x4000, scoped, tag = 'input window, operand 15, single buffered']
    #allocation17 [shape = 'u8[16384]{0}', space=vmem, size = 0x4000, scoped, tag = 'input window, operand 17, single buffered']
    #allocation18 [shape = 's32[1]{0}', space=sflag, size = 0x4, scoped, tag = 'scoped memory for tpu_custom_call.1']
    #allocation19 [shape = 'u8[1024]{0}', space=vmem, size = 0x400, scoped, tag = 'output window, operand 0, single buffered']
    %28 = vsyncpa [#allocation3], 0
    %29 = vsyncpa [#allocation6], 0
    %30 = vsyncpa [#allocation9], 0
    %31 = vsyncpa [#allocation12], 0
    %32 = vsyncpa [#allocation15], 0
    %33 = vsyncpa [#allocation18], 0
    %34 = vsyncpa [#allocation4], 0
    // Predicated region
    $region2: #{tpu_custom_call.1} parent=1 // pred_check
      _
    $region3: #{tpu_custom_call.1} parent=1 // pred_check_branch
      %36 = sbr.rel (0) target = $region5
    $region4: #{tpu_custom_call.1} parent=1 // pred_region
      _
    $region5: #{tpu_custom_call.1} parent=1 // pred_fallthru
      _
    // Predicated region
    $region6: #{tpu_custom_call.1} parent=1 // pred_check
      _
    $region7: #{tpu_custom_call.1} parent=1 // pred_check_branch
      %38 = sbr.rel (0) target = $region9
    $region8: #{tpu_custom_call.1} parent=1 // pred_region
      %s40 = ssub.s32 64, 64
      %41 = vsyncadd [#allocation3], %s40
      %s43 = sshll.u32 [#allocation2], 4
      %s44 = int_to_ptr.vmem [resolvable:$true] %s43
      %46 = dma.hbm_to_vmem [thread:$0]  %s1, 64, %s44, [#allocation3]
    $region9: #{tpu_custom_call.1} parent=1 // pred_fallthru
      _
    // Predicated region
    $region10: #{tpu_custom_call.1} parent=1 // pred_check
      _
    $region11: #{tpu_custom_call.1} parent=1 // pred_check_branch
      %48 = sbr.rel (0) target = $region13
    $region12: #{tpu_custom_call.1} parent=1 // pred_region
      _
    $region13: #{tpu_custom_call.1} parent=1 // pred_fallthru
      _
    // Predicated region
    $region14: #{tpu_custom_call.1} parent=1 // pred_check
      _
    $region15: #{tpu_custom_call.1} parent=1 // pred_check_branch
      %50 = sbr.rel (0) target = $region17
    $region16: #{tpu_custom_call.1} parent=1 // pred_region
      %s52 = ssub.s32 16, 16
      %53 = vsyncadd [#allocation6], %s52
      %s55 = sshll.u32 [#allocation5], 4
      %s56 = int_to_ptr.vmem [resolvable:$true] %s55
      %58 = dma.hbm_to_vmem [thread:$0]  %s3, 16, %s56, [#allocation6]
    $region17: #{tpu_custom_call.1} parent=1 // pred_fallthru
      _
    // Predicated region
    $region18: #{tpu_custom_call.1} parent=1 // pred_check
      _
    $region19: #{tpu_custom_call.1} parent=1 // pred_check_branch
      %60 = sbr.rel (0) target = $region21
    $region20: #{tpu_custom_call.1} parent=1 // pred_region
      %s62 = ssub.s32 512, 512
      %63 = vsyncadd [#allocation6], %s62
      %s64 = sshll.u32 [#allocation7], 4
      %s65 = int_to_ptr.vmem [resolvable:$true] %s64
      %70 = dma.hbm_to_vmem [thread:$0]  %s4, 512, %s65, [#allocation6], 128, 128, 8
    $region21: #{tpu_custom_call.1} parent=1 // pred_fallthru
      _
    // Predicated region
    $region22: #{tpu_custom_call.1} parent=1 // pred_check
      _
    $region23: #{tpu_custom_call.1} parent=1 // pred_check_branch
      %72 = sbr.rel (0) target = $region25
    $region24: #{tpu_custom_call.1} parent=1 // pred_region
      %s74 = ssub.s32 512, 512
      %75 = vsyncadd [#allocation9], %s74
      %s76 = sshll.u32 [#allocation8], 4
      %s77 = int_to_ptr.vmem [resolvable:$true] %s76
      %82 = dma.hbm_to_vmem [thread:$0]  %s5, 512, %s77, [#allocation9], 128, 128, 8
    $region25: #{tpu_custom_call.1} parent=1 // pred_fallthru
      _
    // Predicated region
    $region26: #{tpu_custom_call.1} parent=1 // pred_check
      _
    $region27: #{tpu_custom_call.1} parent=1 // pred_check_branch
      %84 = sbr.rel (0) target = $region29
    $region28: #{tpu_custom_call.1} parent=1 // pred_region
      %s86 = ssub.s32 16, 16
      %87 = vsyncadd [#allocation9], %s86
      %s89 = sshll.u32 [#allocation10], 4
      %s90 = int_to_ptr.vmem [resolvable:$true] %s89
      %92 = dma.hbm_to_vmem [thread:$0]  %s6, 16, %s90, [#allocation9]
    $region29: #{tpu_custom_call.1} parent=1 // pred_fallthru
      _
    // Predicated region
    $region30: #{tpu_custom_call.1} parent=1 // pred_check
      _
    $region31: #{tpu_custom_call.1} parent=1 // pred_check_branch
      %94 = sbr.rel (0) target = $region33
    $region32: #{tpu_custom_call.1} parent=1 // pred_region
      _
    $region33: #{tpu_custom_call.1} parent=1 // pred_fallthru
      _
    // Predicated region
    $region34: #{tpu_custom_call.1} parent=1 // pred_check
      _
    $region35: #{tpu_custom_call.1} parent=1 // pred_check_branch
      %96 = sbr.rel (0) target = $region37
    $region36: #{tpu_custom_call.1} parent=1 // pred_region
      %s98 = ssub.s32 16, 16
      %99 = vsyncadd [#allocation12], %s98
      %s101 = sshll.u32 [#allocation11], 4
      %s102 = int_to_ptr.vmem [resolvable:$true] %s101
      %104 = dma.hbm_to_vmem [thread:$0]  %s8, 16, %s102, [#allocation12]
    $region37: #{tpu_custom_call.1} parent=1 // pred_fallthru
      _
    // Predicated region
    $region38: #{tpu_custom_call.1} parent=1 // pred_check
      _
    $region39: #{tpu_custom_call.1} parent=1 // pred_check_branch
      %106 = sbr.rel (0) target = $region41
    $region40: #{tpu_custom_call.1} parent=1 // pred_region
      _
    $region41: #{tpu_custom_call.1} parent=1 // pred_fallthru
      _
    // Predicated region
    $region42: #{tpu_custom_call.1} parent=1 // pred_check
      _
    $region43: #{tpu_custom_call.1} parent=1 // pred_check_branch
      %108 = sbr.rel (0) target = $region45
    $region44: #{tpu_custom_call.1} parent=1 // pred_region
      %s110 = ssub.s32 16, 16
      %111 = vsyncadd [#allocation12], %s110
      %s113 = sshll.u32 [#allocation13], 4
      %s114 = int_to_ptr.vmem [resolvable:$true] %s113
      %116 = dma.hbm_to_vmem [thread:$0]  %s10, 16, %s114, [#allocation12]
    $region45: #{tpu_custom_call.1} parent=1 // pred_fallthru
      _
    // Predicated region
    $region46: #{tpu_custom_call.1} parent=1 // pred_check
      _
    $region47: #{tpu_custom_call.1} parent=1 // pred_check_branch
      %118 = sbr.rel (0) target = $region49
    $region48: #{tpu_custom_call.1} parent=1 // pred_region
      _
    $region49: #{tpu_custom_call.1} parent=1 // pred_fallthru
      _
    // Predicated region
    $region50: #{tpu_custom_call.1} parent=1 // pred_check
      _
    $region51: #{tpu_custom_call.1} parent=1 // pred_check_branch
      %120 = sbr.rel (0) target = $region53
    $region52: #{tpu_custom_call.1} parent=1 // pred_region
      _
    $region53: #{tpu_custom_call.1} parent=1 // pred_fallthru
      _
    // Predicated region
    $region54: #{tpu_custom_call.1} parent=1 // pred_check
      _
    $region55: #{tpu_custom_call.1} parent=1 // pred_check_branch
      %122 = sbr.rel (0) target = $region57
    $region56: #{tpu_custom_call.1} parent=1 // pred_region
      %s124 = ssub.s32 512, 512
      %125 = vsyncadd [#allocation15], %s124
      %s126 = sshll.u32 [#allocation14], 4
      %s127 = int_to_ptr.vmem [resolvable:$true] %s126
      %132 = dma.hbm_to_vmem [thread:$0]  %s13, 512, %s127, [#allocation15], 128, 128, 8
    $region57: #{tpu_custom_call.1} parent=1 // pred_fallthru
      _
    // Predicated region
    $region58: #{tpu_custom_call.1} parent=1 // pred_check
      _
    $region59: #{tpu_custom_call.1} parent=1 // pred_check_branch
      %134 = sbr.rel (0) target = $region61
    $region60: #{tpu_custom_call.1} parent=1 // pred_region
      _
    $region61: #{tpu_custom_call.1} parent=1 // pred_fallthru
      _
    // Predicated region
    $region62: #{tpu_custom_call.1} parent=1 // pred_check
      _
    $region63: #{tpu_custom_call.1} parent=1 // pred_check_branch
      %136 = sbr.rel (0) target = $region65
    $region64: #{tpu_custom_call.1} parent=1 // pred_region
      %s138 = ssub.s32 512, 512
      %139 = vsyncadd [#allocation15], %s138
      %s140 = sshll.u32 [#allocation16], 4
      %s141 = int_to_ptr.vmem [resolvable:$true] %s140
      %146 = dma.hbm_to_vmem [thread:$0]  %s15, 512, %s141, [#allocation15], 128, 128, 8
    $region65: #{tpu_custom_call.1} parent=1 // pred_fallthru
      _
    // Predicated region
    $region66: #{tpu_custom_call.1} parent=1 // pred_check
      _
    $region67: #{tpu_custom_call.1} parent=1 // pred_check_branch
      %148 = sbr.rel (0) target = $region69
    $region68: #{tpu_custom_call.1} parent=1 // pred_region
      _
    $region69: #{tpu_custom_call.1} parent=1 // pred_fallthru
      _
    // Predicated region
    $region70: #{tpu_custom_call.1} parent=1 // pred_check
      _
    $region71: #{tpu_custom_call.1} parent=1 // pred_check_branch
      %150 = sbr.rel (0) target = $region73
    $region72: #{tpu_custom_call.1} parent=1 // pred_region
      %s152 = ssub.s32 512, 512
      %153 = vsyncadd [#allocation18], %s152
      %s154 = sshll.u32 [#allocation17], 4
      %s155 = int_to_ptr.vmem [resolvable:$true] %s154
      %160 = dma.hbm_to_vmem [thread:$0]  %s17, 512, %s155, [#allocation18], 128, 128, 8
    $region73: #{tpu_custom_call.1} parent=1 // pred_fallthru
      _
    // Predicated region
    $region74: #{tpu_custom_call.1} parent=1 // pred_check
      _
    $region75: #{tpu_custom_call.1} parent=1 // pred_check_branch
      %162 = sbr.rel (0) target = $region77
    $region76: #{tpu_custom_call.1} parent=1 // pred_region
      _
    $region77: #{tpu_custom_call.1} parent=1 // pred_fallthru
      _
    // Predicated region
    $region78: #{tpu_custom_call.1} parent=1 // pred_check
      _
    $region79: #{tpu_custom_call.1} parent=1 // pred_check_branch
      %164 = sbr.rel (0) target = $region81
    $region80: #{tpu_custom_call.1} parent=1 // pred_region
      _
    $region81: #{tpu_custom_call.1} parent=1 // pred_fallthru
      _
    // Predicated region
    $region82: #{tpu_custom_call.1} parent=1 // pred_check
      _
    $region83: #{tpu_custom_call.1} parent=1 // pred_check_branch
      %166 = sbr.rel (0) target = $region85
    $region84: #{tpu_custom_call.1} parent=1 // pred_region
      _
    $region85: #{tpu_custom_call.1} parent=1 // pred_fallthru
      _
    // Predicated region
    $region86: #{tpu_custom_call.1} parent=1 // pred_check
      _
    $region87: #{tpu_custom_call.1} parent=1 // pred_check_branch
      %168 = sbr.rel (0) target = $region89
    $region88: #{tpu_custom_call.1} parent=1 // pred_region
      _
    $region89: #{tpu_custom_call.1} parent=1 // pred_fallthru
      _
    // Predicated region
    $region90: #{tpu_custom_call.1} parent=1 // pred_check
      _
    $region91: #{tpu_custom_call.1} parent=1 // pred_check_branch
      %170 = sbr.rel (0) target = $region93
    $region92: #{tpu_custom_call.1} parent=1 // pred_region
      _
    $region93: #{tpu_custom_call.1} parent=1 // pred_fallthru
      _
    // Predicated region
    $region94: #{tpu_custom_call.1} parent=1 // pred_check
      _
    $region95: #{tpu_custom_call.1} parent=1 // pred_check_branch
      %172 = sbr.rel (0) target = $region97
    $region96: #{tpu_custom_call.1} parent=1 // pred_region
      %173 = dma.done [#allocation3], 64
    $region97: #{tpu_custom_call.1} parent=1 // pred_fallthru
      _
    // Predicated region
    $region98: #{tpu_custom_call.1} parent=1 // pred_check
      _
    $region99: #{tpu_custom_call.1} parent=1 // pred_check_branch
      %175 = sbr.rel (0) target = $region101
    $region100: #{tpu_custom_call.1} parent=1 // pred_region
      %176 = dma.done [#allocation6], 16
    $region101: #{tpu_custom_call.1} parent=1 // pred_fallthru
      _
    // Predicated region
    $region102: #{tpu_custom_call.1} parent=1 // pred_check
      _
    $region103: #{tpu_custom_call.1} parent=1 // pred_check_branch
      %178 = sbr.rel (0) target = $region105
    $region104: #{tpu_custom_call.1} parent=1 // pred_region
      %179 = dma.done [#allocation6], 512
    $region105: #{tpu_custom_call.1} parent=1 // pred_fallthru
      _
    // Predicated region
    $region106: #{tpu_custom_call.1} parent=1 // pred_check
      _
    $region107: #{tpu_custom_call.1} parent=1 // pred_check_branch
      %181 = sbr.rel (0) target = $region109
    $region108: #{tpu_custom_call.1} parent=1 // pred_region
      %182 = dma.done [#allocation9], 512
    $region109: #{tpu_custom_call.1} parent=1 // pred_fallthru
      _
    // Predicated region
    $region110: #{tpu_custom_call.1} parent=1 // pred_check
      _
    $region111: #{tpu_custom_call.1} parent=1 // pred_check_branch
      %184 = sbr.rel (0) target = $region113
    $region112: #{tpu_custom_call.1} parent=1 // pred_region
      %185 = dma.done [#allocation9], 16
    $region113: #{tpu_custom_call.1} parent=1 // pred_fallthru
      _
    // Predicated region
    $region114: #{tpu_custom_call.1} parent=1 // pred_check
      _
    $region115: #{tpu_custom_call.1} parent=1 // pred_check_branch
      %187 = sbr.rel (0) target = $region117
    $region116: #{tpu_custom_call.1} parent=1 // pred_region
      %188 = dma.done [#allocation12], 16
    $region117: #{tpu_custom_call.1} parent=1 // pred_fallthru
      _
    // Predicated region
    $region118: #{tpu_custom_call.1} parent=1 // pred_check
      _
    $region119: #{tpu_custom_call.1} parent=1 // pred_check_branch
      %190 = sbr.rel (0) target = $region121
    $region120: #{tpu_custom_call.1} parent=1 // pred_region
      %191 = dma.done [#allocation12], 16
    $region121: #{tpu_custom_call.1} parent=1 // pred_fallthru
      _
    // Predicated region
    $region122: #{tpu_custom_call.1} parent=1 // pred_check
      _
    $region123: #{tpu_custom_call.1} parent=1 // pred_check_branch
      %193 = sbr.rel (0) target = $region125
    $region124: #{tpu_custom_call.1} parent=1 // pred_region
      %194 = dma.done [#allocation15], 512
    $region125: #{tpu_custom_call.1} parent=1 // pred_fallthru
      _
    // Predicated region
    $region126: #{tpu_custom_call.1} parent=1 // pred_check
      _
    $region127: #{tpu_custom_call.1} parent=1 // pred_check_branch
      %196 = sbr.rel (0) target = $region129
    $region128: #{tpu_custom_call.1} parent=1 // pred_region
      %197 = dma.done [#allocation15], 512
    $region129: #{tpu_custom_call.1} parent=1 // pred_fallthru
      _
    // Predicated region
    $region130: #{tpu_custom_call.1} parent=1 // pred_check
      _
    $region131: #{tpu_custom_call.1} parent=1 // pred_check_branch
      %199 = sbr.rel (0) target = $region133
    $region132: #{tpu_custom_call.1} parent=1 // pred_region
      %200 = dma.done [#allocation18], 512
    $region133: #{tpu_custom_call.1} parent=1 // pred_fallthru
      _
    %v201 = vld [vmem:[%s11] sm:$0xff]
    %v202 = vld [vmem:[%s11 + $0x8] sm:$0xff]
    %v203 = vld [vmem:[%s11 + $0x10] sm:$0xff]
    %v204 = vld [vmem:[%s11 + $0x18] sm:$0xff]
    %v205 = vld [vmem:[%s12] sm:$0x1]
    %v206 = vld [vmem:[#allocation14] sm:$0xff]
    %v207 = vld [vmem:[#allocation14 + $0x8] sm:$0xff]
    %v208 = vld [vmem:[#allocation14 + $0x10] sm:$0xff]
    %v209 = vld [vmem:[#allocation14 + $0x18] sm:$0xff]
    %v210 = vld [vmem:[%s14] sm:$0x1]
    %v211 = vld [vmem:[#allocation16] sm:$0xff]
    %v212 = vld [vmem:[#allocation16 + $0x8] sm:$0xff]
    %v213 = vld [vmem:[#allocation16 + $0x10] sm:$0xff]
    %v214 = vld [vmem:[#allocation16 + $0x18] sm:$0xff]
    %v215 = vld [vmem:[%s16] sm:$0x1]
    %v216 = vld [vmem:[#allocation17] sm:$0xff]
    %v217 = vld [vmem:[#allocation17 + $0x8] sm:$0xff]
    %v218 = vld [vmem:[#allocation17 + $0x10] sm:$0xff]
    %v219 = vld [vmem:[#allocation17 + $0x18] sm:$0xff]
    %v220 = vld [vmem:[%s18] sm:$0x1]
    %v221 = vld [vmem:[%s19] sm:$0xff]
    %v222 = vld [vmem:[%s19 + $0x8] sm:$0xff]
    %v223 = vld [vmem:[%s19 + $0x10] sm:$0xff]
    %v224 = vld [vmem:[%s19 + $0x18] sm:$0xff]
    %v225 = vld [vmem:[%s19 + $0x20] sm:$0xff]
    %v226 = vld [vmem:[%s19 + $0x28] sm:$0xff]
    %v227 = vld [vmem:[%s19 + $0x30] sm:$0xff]
    %v228 = vld [vmem:[%s19 + $0x38] sm:$0xff]
    %v229 = vld [vmem:[%s20] sm:$0x1]
    %v230 = vld [vmem:[%s21] sm:$0xff]
    %v231 = vld [vmem:[%s21 + $0x8] sm:$0xff]
    %v232 = vld [vmem:[%s21 + $0x10] sm:$0xff]
    %v233 = vld [vmem:[%s21 + $0x18] sm:$0xff]
    %v234 = vld [vmem:[%s22] sm:$0x1]
    %v235 = vld [vmem:[#allocation2] sm:$0xf]
    %v236 = vld [vmem:[%s2] sm:$0xff]
    %v237 = vld [vmem:[%s2 + $0x8] sm:$0xff]
    %v238 = vld [vmem:[%s2 + $0x10] sm:$0xff]
    %v239 = vld [vmem:[%s2 + $0x18] sm:$0xff]
    %v240 = vld [vmem:[#allocation5] sm:$0x1]
    %v241 = vld [vmem:[#allocation7] sm:$0xff]
    %v242 = vld [vmem:[#allocation7 + $0x8] sm:$0xff]
    %v243 = vld [vmem:[#allocation7 + $0x10] sm:$0xff]
    %v244 = vld [vmem:[#allocation7 + $0x18] sm:$0xff]
    %v245 = vld [vmem:[#allocation8] sm:$0xff]
    %v246 = vld [vmem:[#allocation8 + $0x8] sm:$0xff]
    %v247 = vld [vmem:[#allocation8 + $0x10] sm:$0xff]
    %v248 = vld [vmem:[#allocation8 + $0x18] sm:$0xff]
    %v249 = vld [vmem:[#allocation10] sm:$0x1]
    %v250 = vld [vmem:[%s7] sm:$0xff]
    %v251 = vld [vmem:[%s7 + $0x8] sm:$0xff]
    %v252 = vld [vmem:[%s7 + $0x10] sm:$0xff]
    %v253 = vld [vmem:[%s7 + $0x18] sm:$0xff]
    %v254 = vld [vmem:[%s7 + $0x20] sm:$0xf]
    %v255 = vld [vmem:[#allocation11] sm:$0x1]
    %v256 = vld [vmem:[%s9] sm:$0xff]
    %v257 = vld [vmem:[%s9 + $0x8] sm:$0xff]
    %v258 = vld [vmem:[%s9 + $0x10] sm:$0xff]
    %v259 = vld [vmem:[%s9 + $0x18] sm:$0xff]
    %v260 = vld [vmem:[%s9 + $0x20] sm:$0xff]
    %v261 = vld [vmem:[%s9 + $0x28] sm:$0xff]
    %v262 = vld [vmem:[%s9 + $0x30] sm:$0xff]
    %v263 = vld [vmem:[%s9 + $0x38] sm:$0xff]
    %v264 = vld [vmem:[#allocation13] sm:$0x1]
    %v265 = vld [vmem:[%s0] sm:$0xff]
    %v266 = vld [vmem:[%s0 + $0x8] sm:$0xff]
    %v268 = vlaneseq
    %v269 = vshrl.u32 %v268, 7
    %v270 = vsub.s32 0, %v269
    %v271 = vrot.slane %v240, %v270
    %vm273 = vcmask 31744
    %v275 = vsel %vm273, %v265, 0
    %v278 = vsel %vm273, %v266, 0
    %vm280 = vcmask 1043456
    %v282 = vsel %vm280, %v235, 0
    %284 = vmatprep.subr.mxu0 0.0
    %285 = vmatpush1.msra.mxu0 0.0
    %286 = vmatprep.subr.mxu0 0.0
    %287 = vmatpush1.msra.mxu0 0.0
    %288 = vmatprep.subr.mxu0 0.0
    %289 = vmatpush1.msra.mxu0 0.0
    %290 = vmatprep.subr.mxu0 0.0
    %291 = vmatpush1.msra.mxu0 0.0
    %292 = vmatprep.subr.mxu0 0.0
    %293 = vmatpush1.msra.mxu0 0.0
    %294 = vmatprep.subr.mxu0 0.0
    %295 = vmatpush1.msra.mxu0 0.0
    %296 = vmatprep.subr.mxu0 0.0
    %297 = vmatpush1.msra.mxu0 0.0
    %298 = vmatprep.subr.mxu0 0.0
    %299 = vmatpush1.msra.mxu0 0.0
    %300 = vmatprep.subr.mxu0 0.0
    %301 = vmatpush1.msra.mxu0 0.0
    %302 = vmatprep.subr.mxu0 0.0
    %303 = vmatpush1.msra.mxu0 0.0
    %304 = vmatprep.subr.mxu0 0.0
    %305 = vmatpush1.msra.mxu0 0.0
    %306 = vmatprep.subr.mxu0 0.0
    %307 = vmatpush1.msra.mxu0 0.0
    %308 = vmatprep.subr.mxu0 0.0
    %309 = vmatpush1.msra.mxu0 0.0
    %310 = vmatprep.subr.mxu0 0.0
    %311 = vmatpush1.msra.mxu0 0.0
    %312 = vmatprep.subr.mxu0 0.0
    %313 = vmatpush1.msra.mxu0 0.0
    %314 = vmatprep.subr.mxu0 0.0
    %315 = vmatpush1.msra.mxu0 %v282
    %316 = vmatprep.subr.mxu0 0.0
    %317 = vmatpush2.msra.mxu0 0.0
    %318 = vmatprep.subr.mxu0 0.0
    %319 = vmatpush2.msra.mxu0 0.0
    %320 = vmatprep.subr.mxu0 0.0
    %321 = vmatpush2.msra.mxu0 0.0
    %322 = vmatprep.subr.mxu0 0.0
    %323 = vmatpush2.msra.mxu0 0.0
    %324 = vmatprep.subr.mxu0 0.0
    %325 = vmatpush2.msra.mxu0 0.0
    %326 = vmatprep.subr.mxu0 0.0
    %327 = vmatpush2.msra.mxu0 0.0
    %328 = vmatprep.subr.mxu0 0.0
    %329 = vmatpush2.msra.mxu0 0.0
    %330 = vmatprep.subr.mxu0 0.0
    %331 = vmatpush2.msra.mxu0 0.0
    %332 = vmatprep.subr.mxu0 0.0
    %333 = vmatpush2.msra.mxu0 0.0
    %334 = vmatprep.subr.mxu0 0.0
    %335 = vmatpush2.msra.mxu0 0.0
    %336 = vmatprep.subr.mxu0 0.0
    %337 = vmatpush2.msra.mxu0 0.0
    %338 = vmatprep.subr.mxu0 0.0
    %339 = vmatpush2.msra.mxu0 0.0
    %340 = vmatprep.subr.mxu0 0.0
    %341 = vmatpush2.msra.mxu0 0.0
    %342 = vmatprep.subr.mxu0 0.0
    %343 = vmatpush2.msra.mxu0 0.0
    %344 = vmatprep.subr.mxu0 0.0
    %345 = vmatpush2.msra.mxu0 0.0
    %346 = vmatprep.subr.mxu0 0.0
    %347 = vmatpush2.msra.mxu0 0.0
    %348 = vmatprep.mubr.f32.mxu0 0.0
    %349 = vmatmul.mubr.f32.gmra.mxu0 %v275
    %v350 = vpop.f32.mrf.mxu0
    %v351 = vadd.f32 %v271, %v350
    %v352 = vpop.f32.mrf.mxu0
    %353 = vmatprep.mubr.f32.mxu0 0.0
    %354 = vmatmul.mubr.f32.gmra.mxu0 %v278
    %v355 = vpop.f32.mrf.mxu0
    %v356 = vadd.f32 %v271, %v355
    %v357 = vpop.f32.mrf.mxu0
    %358 = vdwg.mxu0
    %vm359 = vcmask 261120
    %v361 = vsel %vm359, 0.0, 0
    %363 = vmatprep.subr.mxu0 0.0
    %364 = vmatpush1.msra.mxu0 0.0
    %365 = vmatprep.subr.mxu0 0.0
    %366 = vmatpush1.msra.mxu0 0.0
    %367 = vmatprep.subr.mxu0 0.0
    %368 = vmatpush1.msra.mxu0 0.0
    %369 = vmatprep.subr.mxu0 0.0
    %370 = vmatpush1.msra.mxu0 0.0
    %371 = vmatprep.subr.mxu0 0.0
    %372 = vmatpush1.msra.mxu0 0.0
    %373 = vmatprep.subr.mxu0 0.0
    %374 = vmatpush1.msra.mxu0 0.0
    %375 = vmatprep.subr.mxu0 0.0
    %376 = vmatpush1.msra.mxu0 0.0
    %377 = vmatprep.subr.mxu0 0.0
    %378 = vmatpush1.msra.mxu0 0.0
    %379 = vmatprep.subr.mxu0 0.0
    %380 = vmatpush1.msra.mxu0 0.0
    %381 = vmatprep.subr.mxu0 0.0
    %382 = vmatpush1.msra.mxu0 0.0
    %383 = vmatprep.subr.mxu0 0.0
    %384 = vmatpush1.msra.mxu0 0.0
    %385 = vmatprep.subr.mxu0 0.0
    %386 = vmatpush1.msra.mxu0 0.0
    %387 = vmatprep.subr.mxu0 0.0
    %388 = vmatpush1.msra.mxu0 %v239
    %389 = vmatprep.subr.mxu0 0.0
    %390 = vmatpush1.msra.mxu0 %v238
    %391 = vmatprep.subr.mxu0 0.0
    %392 = vmatpush1.msra.mxu0 %v237
    %393 = vmatprep.subr.mxu0 0.0
    %394 = vmatpush1.msra.mxu0 %v236
    %395 = vmatprep.subr.mxu0 0.0
    %396 = vmatpush2.msra.mxu0 0.0
    %397 = vmatprep.subr.mxu0 0.0
    %398 = vmatpush2.msra.mxu0 0.0
    %399 = vmatprep.subr.mxu0 0.0
    %400 = vmatpush2.msra.mxu0 0.0
    %401 = vmatprep.subr.mxu0 0.0
    %402 = vmatpush2.msra.mxu0 0.0
    %403 = vmatprep.subr.mxu0 0.0
    %404 = vmatpush2.msra.mxu0 0.0
    %405 = vmatprep.subr.mxu0 0.0
    %406 = vmatpush2.msra.mxu0 0.0
    %407 = vmatprep.subr.mxu0 0.0
    %408 = vmatpush2.msra.mxu0 0.0
    %409 = vmatprep.subr.mxu0 0.0
    %410 = vmatpush2.msra.mxu0 0.0
    %411 = vmatprep.subr.mxu0 0.0
    %412 = vmatpush2.msra.mxu0 0.0
    %413 = vmatprep.subr.mxu0 0.0
    %414 = vmatpush2.msra.mxu0 0.0
    %415 = vmatprep.subr.mxu0 0.0
    %416 = vmatpush2.msra.mxu0 0.0
    %417 = vmatprep.subr.mxu0 0.0
    %418 = vmatpush2.msra.mxu0 0.0
    %419 = vmatprep.subr.mxu0 0.0
    %420 = vmatpush2.msra.mxu0 0.0
    %421 = vmatprep.subr.mxu0 0.0
    %422 = vmatpush2.msra.mxu0 0.0
    %423 = vmatprep.subr.mxu0 0.0
    %424 = vmatpush2.msra.mxu0 0.0
    %425 = vmatprep.subr.mxu0 0.0
    %426 = vmatpush2.msra.mxu0 0.0
    %427 = vmatprep.mubr.f32.mxu0 0.0
    %428 = vmatmul.mubr.f32.gmra.mxu0 %v361
    %v429 = vpop.f32.mrf.mxu0
    %v430 = vadd.f32 0.0, %v429
    %v431 = vpop.f32.mrf.mxu0
    %432 = vdwg.mxu0
    %v433 = vadd.f32 %v351, %v430
    %v434 = vxor.u32 %v433, 2147483648
    %v435 = vmul.f32 %v434, 1.442695
    %v436 = vpow.pop %v435
    %v437 = vadd.f32 %v436, 1.0
    %v438 = vrcp.pop %v437
    %v439 = vmul.f32 1.0, %v438
    %v440 = vtanh.pop %v433
    %v441 = vmul.f32 %v439, 0.0
    %443 = vrot.lane.b32.xlu0 %v440, 64
    %v444 = vpop.permute.xlu0 %443
    %v446 = vmul.f32 %v439, %v444
    %448 = vrot.lane.b32.xlu0 %v446, 32
    %v449 = vpop.permute.xlu0 %448
    %v451 = vadd.f32 %v441, %v449
    %v452 = vtanh.pop %v451
    %454 = vrot.lane.b32.xlu0 %v452, 64
    %v455 = vpop.permute.xlu0 %454
    %v457 = vmul.f32 %v439, %v455
    %459 = vrot.lane.b32.xlu0 %v457, 32
    %v460 = vpop.permute.xlu0 %459
    %v461 = vsel %vm359, %v460, 0
    %463 = vmatprep.subr.mxu0 0.0
    %464 = vmatpush1.msra.mxu0 0.0
    %465 = vmatprep.subr.mxu0 0.0
    %466 = vmatpush1.msra.mxu0 0.0
    %467 = vmatprep.subr.mxu0 0.0
    %468 = vmatpush1.msra.mxu0 0.0
    %469 = vmatprep.subr.mxu0 0.0
    %470 = vmatpush1.msra.mxu0 0.0
    %471 = vmatprep.subr.mxu0 0.0
    %472 = vmatpush1.msra.mxu0 0.0
    %473 = vmatprep.subr.mxu0 0.0
    %474 = vmatpush1.msra.mxu0 0.0
    %475 = vmatprep.subr.mxu0 0.0
    %476 = vmatpush1.msra.mxu0 0.0
    %477 = vmatprep.subr.mxu0 0.0
    %478 = vmatpush1.msra.mxu0 0.0
    %479 = vmatprep.subr.mxu0 0.0
    %480 = vmatpush1.msra.mxu0 0.0
    %481 = vmatprep.subr.mxu0 0.0
    %482 = vmatpush1.msra.mxu0 0.0
    %483 = vmatprep.subr.mxu0 0.0
    %484 = vmatpush1.msra.mxu0 0.0
    %485 = vmatprep.subr.mxu0 0.0
    %486 = vmatpush1.msra.mxu0 0.0
    %487 = vmatprep.subr.mxu0 0.0
    %488 = vmatpush1.msra.mxu0 %v239
    %489 = vmatprep.subr.mxu0 0.0
    %490 = vmatpush1.msra.mxu0 %v238
    %491 = vmatprep.subr.mxu0 0.0
    %492 = vmatpush1.msra.mxu0 %v237
    %493 = vmatprep.subr.mxu0 0.0
    %494 = vmatpush1.msra.mxu0 %v236
    %495 = vmatprep.subr.mxu0 0.0
    %496 = vmatpush2.msra.mxu0 0.0
    %497 = vmatprep.subr.mxu0 0.0
    %498 = vmatpush2.msra.mxu0 0.0
    %499 = vmatprep.subr.mxu0 0.0
    %500 = vmatpush2.msra.mxu0 0.0
    %501 = vmatprep.subr.mxu0 0.0
    %502 = vmatpush2.msra.mxu0 0.0
    %503 = vmatprep.subr.mxu0 0.0
    %504 = vmatpush2.msra.mxu0 0.0
    %505 = vmatprep.subr.mxu0 0.0
    %506 = vmatpush2.msra.mxu0 0.0
    %507 = vmatprep.subr.mxu0 0.0
    %508 = vmatpush2.msra.mxu0 0.0
    %509 = vmatprep.subr.mxu0 0.0
    %510 = vmatpush2.msra.mxu0 0.0
    %511 = vmatprep.subr.mxu0 0.0
    %512 = vmatpush2.msra.mxu0 0.0
    %513 = vmatprep.subr.mxu0 0.0
    %514 = vmatpush2.msra.mxu0 0.0
    %515 = vmatprep.subr.mxu0 0.0
    %516 = vmatpush2.msra.mxu0 0.0
    %517 = vmatprep.subr.mxu0 0.0
    %518 = vmatpush2.msra.mxu0 0.0
    %519 = vmatprep.subr.mxu0 0.0
    %520 = vmatpush2.msra.mxu0 0.0
    %521 = vmatprep.subr.mxu0 0.0
    %522 = vmatpush2.msra.mxu0 0.0
    %523 = vmatprep.subr.mxu0 0.0
    %524 = vmatpush2.msra.mxu0 0.0
    %525 = vmatprep.subr.mxu0 0.0
    %526 = vmatpush2.msra.mxu0 0.0
    %527 = vmatprep.mubr.f32.mxu0 0.0
    %528 = vmatmul.mubr.f32.gmra.mxu0 %v461
    %v529 = vpop.f32.mrf.mxu0
    %v530 = vadd.f32 0.0, %v529
    %v531 = vpop.f32.mrf.mxu0
    %532 = vdwg.mxu0
    %v534 = vrot.slane %v530, 6
    %v536 = vadd.f32 %v351, %v534
    %v537 = vxor.u32 %v536, 2147483648
    %v538 = vmul.f32 %v537, 1.442695
    %v539 = vpow.pop %v538
    %v540 = vadd.f32 %v539, 1.0
    %v541 = vrcp.pop %v540
    %v542 = vmul.f32 1.0, %v541
    %v543 = vtanh.pop %v536
    %v545 = vrot.slane %v451, 6
    %v547 = vmul.f32 %v542, %v545
    %549 = vrot.lane.b32.xlu0 %v543, 64
    %v550 = vpop.permute.xlu0 %549
    %v552 = vmul.f32 %v542, %v550
    %554 = vrot.lane.b32.xlu0 %v552, 32
    %v555 = vpop.permute.xlu0 %554
    %v557 = vadd.f32 %v547, %v555
    %v558 = vtanh.pop %v557
    %560 = vrot.lane.b32.xlu0 %v558, 64
    %v561 = vpop.permute.xlu0 %560
    %v563 = vmul.f32 %v542, %v561
    %v565 = vrot.slane %v563, 2
    %566 = vrot.lane.b32.xlu0 %v565, 32
    %v567 = vpop.permute.xlu0 %566
    %v568 = vsel %vm359, %v567, 0
    %570 = vmatprep.subr.mxu0 0.0
    %571 = vmatpush1.msra.mxu0 0.0
    %572 = vmatprep.subr.mxu0 0.0
    %573 = vmatpush1.msra.mxu0 0.0
    %574 = vmatprep.subr.mxu0 0.0
    %575 = vmatpush1.msra.mxu0 0.0
    %576 = vmatprep.subr.mxu0 0.0
    %577 = vmatpush1.msra.mxu0 0.0
    %578 = vmatprep.subr.mxu0 0.0
    %579 = vmatpush1.msra.mxu0 0.0
    %580 = vmatprep.subr.mxu0 0.0
    %581 = vmatpush1.msra.mxu0 0.0
    %582 = vmatprep.subr.mxu0 0.0
    %583 = vmatpush1.msra.mxu0 0.0
    %584 = vmatprep.subr.mxu0 0.0
    %585 = vmatpush1.msra.mxu0 0.0
    %586 = vmatprep.subr.mxu0 0.0
    %587 = vmatpush1.msra.mxu0 0.0
    %588 = vmatprep.subr.mxu0 0.0
    %589 = vmatpush1.msra.mxu0 0.0
    %590 = vmatprep.subr.mxu0 0.0
    %591 = vmatpush1.msra.mxu0 0.0
    %592 = vmatprep.subr.mxu0 0.0
    %593 = vmatpush1.msra.mxu0 0.0
    %594 = vmatprep.subr.mxu0 0.0
    %595 = vmatpush1.msra.mxu0 %v239
    %596 = vmatprep.subr.mxu0 0.0
    %597 = vmatpush1.msra.mxu0 %v238
    %598 = vmatprep.subr.mxu0 0.0
    %599 = vmatpush1.msra.mxu0 %v237
    %600 = vmatprep.subr.mxu0 0.0
    %601 = vmatpush1.msra.mxu0 %v236
    %602 = vmatprep.subr.mxu0 0.0
    %603 = vmatpush2.msra.mxu0 0.0
    %604 = vmatprep.subr.mxu0 0.0
    %605 = vmatpush2.msra.mxu0 0.0
    %606 = vmatprep.subr.mxu0 0.0
    %607 = vmatpush2.msra.mxu0 0.0
    %608 = vmatprep.subr.mxu0 0.0
    %609 = vmatpush2.msra.mxu0 0.0
    %610 = vmatprep.subr.mxu0 0.0
    %611 = vmatpush2.msra.mxu0 0.0
    %612 = vmatprep.subr.mxu0 0.0
    %613 = vmatpush2.msra.mxu0 0.0
    %614 = vmatprep.subr.mxu0 0.0
    %615 = vmatpush2.msra.mxu0 0.0
    %616 = vmatprep.subr.mxu0 0.0
    %617 = vmatpush2.msra.mxu0 0.0
    %618 = vmatprep.subr.mxu0 0.0
    %619 = vmatpush2.msra.mxu0 0.0
    %620 = vmatprep.subr.mxu0 0.0
    %621 = vmatpush2.msra.mxu0 0.0
    %622 = vmatprep.subr.mxu0 0.0
    %623 = vmatpush2.msra.mxu0 0.0
    %624 = vmatprep.subr.mxu0 0.0
    %625 = vmatpush2.msra.mxu0 0.0
    %626 = vmatprep.subr.mxu0 0.0
    %627 = vmatpush2.msra.mxu0 0.0
    %628 = vmatprep.subr.mxu0 0.0
    %629 = vmatpush2.msra.mxu0 0.0
    %630 = vmatprep.subr.mxu0 0.0
    %631 = vmatpush2.msra.mxu0 0.0
    %632 = vmatprep.subr.mxu0 0.0
    %633 = vmatpush2.msra.mxu0 0.0
    %634 = vmatprep.mubr.f32.mxu0 0.0
    %635 = vmatmul.mubr.f32.gmra.mxu0 %v568
    %v636 = vpop.f32.mrf.mxu0
    %v637 = vadd.f32 0.0, %v636
    %v638 = vpop.f32.mrf.mxu0
    %639 = vdwg.mxu0
    %v641 = vrot.slane %v637, 4
    %v643 = vadd.f32 %v351, %v641
    %v644 = vxor.u32 %v643, 2147483648
    %v645 = vmul.f32 %v644, 1.442695
    %v646 = vpow.pop %v645
    %v647 = vadd.f32 %v646, 1.0
    %v648 = vrcp.pop %v647
    %v649 = vmul.f32 1.0, %v648
    %v650 = vtanh.pop %v643
    %v652 = vrot.slane %v557, 6
    %v654 = vmul.f32 %v649, %v652
    %656 = vrot.lane.b32.xlu0 %v650, 64
    %v657 = vpop.permute.xlu0 %656
    %v659 = vmul.f32 %v649, %v657
    %661 = vrot.lane.b32.xlu0 %v659, 32
    %v662 = vpop.permute.xlu0 %661
    %v664 = vadd.f32 %v654, %v662
    %v665 = vtanh.pop %v664
    %667 = vrot.lane.b32.xlu0 %v665, 64
    %v668 = vpop.permute.xlu0 %667
    %v670 = vmul.f32 %v649, %v668
    %v672 = vrot.slane %v670, 4
    %673 = vrot.lane.b32.xlu0 %v672, 32
    %v674 = vpop.permute.xlu0 %673
    %v675 = vsel %vm359, %v674, 0
    %677 = vmatprep.subr.mxu0 0.0
    %678 = vmatpush1.msra.mxu0 0.0
    %679 = vmatprep.subr.mxu0 0.0
    %680 = vmatpush1.msra.mxu0 0.0
    %681 = vmatprep.subr.mxu0 0.0
    %682 = vmatpush1.msra.mxu0 0.0
    %683 = vmatprep.subr.mxu0 0.0
    %684 = vmatpush1.msra.mxu0 0.0
    %685 = vmatprep.subr.mxu0 0.0
    %686 = vmatpush1.msra.mxu0 0.0
    %687 = vmatprep.subr.mxu0 0.0
    %688 = vmatpush1.msra.mxu0 0.0
    %689 = vmatprep.subr.mxu0 0.0
    %690 = vmatpush1.msra.mxu0 0.0
    %691 = vmatprep.subr.mxu0 0.0
    %692 = vmatpush1.msra.mxu0 0.0
    %693 = vmatprep.subr.mxu0 0.0
    %694 = vmatpush1.msra.mxu0 0.0
    %695 = vmatprep.subr.mxu0 0.0
    %696 = vmatpush1.msra.mxu0 0.0
    %697 = vmatprep.subr.mxu0 0.0
    %698 = vmatpush1.msra.mxu0 0.0
    %699 = vmatprep.subr.mxu0 0.0
    %700 = vmatpush1.msra.mxu0 0.0
    %701 = vmatprep.subr.mxu0 0.0
    %702 = vmatpush1.msra.mxu0 %v239
    %703 = vmatprep.subr.mxu0 0.0
    %704 = vmatpush1.msra.mxu0 %v238
    %705 = vmatprep.subr.mxu0 0.0
    %706 = vmatpush1.msra.mxu0 %v237
    %707 = vmatprep.subr.mxu0 0.0
    %708 = vmatpush1.msra.mxu0 %v236
    %709 = vmatprep.subr.mxu0 0.0
    %710 = vmatpush2.msra.mxu0 0.0
    %711 = vmatprep.subr.mxu0 0.0
    %712 = vmatpush2.msra.mxu0 0.0
    %713 = vmatprep.subr.mxu0 0.0
    %714 = vmatpush2.msra.mxu0 0.0
    %715 = vmatprep.subr.mxu0 0.0
    %716 = vmatpush2.msra.mxu0 0.0
    %717 = vmatprep.subr.mxu0 0.0
    %718 = vmatpush2.msra.mxu0 0.0
    %719 = vmatprep.subr.mxu0 0.0
    %720 = vmatpush2.msra.mxu0 0.0
    %721 = vmatprep.subr.mxu0 0.0
    %722 = vmatpush2.msra.mxu0 0.0
    %723 = vmatprep.subr.mxu0 0.0
    %724 = vmatpush2.msra.mxu0 0.0
    %725 = vmatprep.subr.mxu0 0.0
    %726 = vmatpush2.msra.mxu0 0.0
    %727 = vmatprep.subr.mxu0 0.0
    %728 = vmatpush2.msra.mxu0 0.0
    %729 = vmatprep.subr.mxu0 0.0
    %730 = vmatpush2.msra.mxu0 0.0
    %731 = vmatprep.subr.mxu0 0.0
    %732 = vmatpush2.msra.mxu0 0.0
    %733 = vmatprep.subr.mxu0 0.0
    %734 = vmatpush2.msra.mxu0 0.0
    %735 = vmatprep.subr.mxu0 0.0
    %736 = vmatpush2.msra.mxu0 0.0
    %737 = vmatprep.subr.mxu0 0.0
    %738 = vmatpush2.msra.mxu0 0.0
    %739 = vmatprep.subr.mxu0 0.0
    %740 = vmatpush2.msra.mxu0 0.0
    %741 = vmatprep.mubr.f32.mxu0 0.0
    %742 = vmatmul.mubr.f32.gmra.mxu0 %v675
    %v743 = vpop.f32.mrf.mxu0
    %v744 = vadd.f32 0.0, %v743
    %v745 = vpop.f32.mrf.mxu0
    %746 = vdwg.mxu0
    %v748 = vrot.slane %v744, 2
    %v750 = vadd.f32 %v351, %v748
    %v751 = vxor.u32 %v750, 2147483648
    %v752 = vmul.f32 %v751, 1.442695
    %v753 = vpow.pop %v752
    %v754 = vadd.f32 %v753, 1.0
    %v755 = vrcp.pop %v754
    %v756 = vmul.f32 1.0, %v755
    %v757 = vtanh.pop %v750
    %v759 = vrot.slane %v664, 6
    %v761 = vmul.f32 %v756, %v759
    %763 = vrot.lane.b32.xlu0 %v757, 64
    %v764 = vpop.permute.xlu0 %763
    %v766 = vmul.f32 %v756, %v764
    %768 = vrot.lane.b32.xlu0 %v766, 32
    %v769 = vpop.permute.xlu0 %768
    %v771 = vadd.f32 %v761, %v769
    %v772 = vtanh.pop %v771
    %774 = vrot.lane.b32.xlu0 %v772, 64
    %v775 = vpop.permute.xlu0 %774
    %v777 = vmul.f32 %v756, %v775
    %v779 = vrot.slane %v777, 6
    %780 = vrot.lane.b32.xlu0 %v779, 32
    %v781 = vpop.permute.xlu0 %780
    %v782 = vsel %vm359, %v781, 0
    %784 = vmatprep.subr.mxu0 0.0
    %785 = vmatpush1.msra.mxu0 0.0
    %786 = vmatprep.subr.mxu0 0.0
    %787 = vmatpush1.msra.mxu0 0.0
    %788 = vmatprep.subr.mxu0 0.0
    %789 = vmatpush1.msra.mxu0 0.0
    %790 = vmatprep.subr.mxu0 0.0
    %791 = vmatpush1.msra.mxu0 0.0
    %792 = vmatprep.subr.mxu0 0.0
    %793 = vmatpush1.msra.mxu0 0.0
    %794 = vmatprep.subr.mxu0 0.0
    %795 = vmatpush1.msra.mxu0 0.0
    %796 = vmatprep.subr.mxu0 0.0
    %797 = vmatpush1.msra.mxu0 0.0
    %798 = vmatprep.subr.mxu0 0.0
    %799 = vmatpush1.msra.mxu0 0.0
    %800 = vmatprep.subr.mxu0 0.0
    %801 = vmatpush1.msra.mxu0 0.0
    %802 = vmatprep.subr.mxu0 0.0
    %803 = vmatpush1.msra.mxu0 0.0
    %804 = vmatprep.subr.mxu0 0.0
    %805 = vmatpush1.msra.mxu0 0.0
    %806 = vmatprep.subr.mxu0 0.0
    %807 = vmatpush1.msra.mxu0 0.0
    %808 = vmatprep.subr.mxu0 0.0
    %809 = vmatpush1.msra.mxu0 %v239
    %810 = vmatprep.subr.mxu0 0.0
    %811 = vmatpush1.msra.mxu0 %v238
    %812 = vmatprep.subr.mxu0 0.0
    %813 = vmatpush1.msra.mxu0 %v237
    %814 = vmatprep.subr.mxu0 0.0
    %815 = vmatpush1.msra.mxu0 %v236
    %816 = vmatprep.subr.mxu0 0.0
    %817 = vmatpush2.msra.mxu0 0.0
    %818 = vmatprep.subr.mxu0 0.0
    %819 = vmatpush2.msra.mxu0 0.0
    %820 = vmatprep.subr.mxu0 0.0
    %821 = vmatpush2.msra.mxu0 0.0
    %822 = vmatprep.subr.mxu0 0.0
    %823 = vmatpush2.msra.mxu0 0.0
    %824 = vmatprep.subr.mxu0 0.0
    %825 = vmatpush2.msra.mxu0 0.0
    %826 = vmatprep.subr.mxu0 0.0
    %827 = vmatpush2.msra.mxu0 0.0
    %828 = vmatprep.subr.mxu0 0.0
    %829 = vmatpush2.msra.mxu0 0.0
    %830 = vmatprep.subr.mxu0 0.0
    %831 = vmatpush2.msra.mxu0 0.0
    %832 = vmatprep.subr.mxu0 0.0
    %833 = vmatpush2.msra.mxu0 0.0
    %834 = vmatprep.subr.mxu0 0.0
    %835 = vmatpush2.msra.mxu0 0.0
    %836 = vmatprep.subr.mxu0 0.0
    %837 = vmatpush2.msra.mxu0 0.0
    %838 = vmatprep.subr.mxu0 0.0
    %839 = vmatpush2.msra.mxu0 0.0
    %840 = vmatprep.subr.mxu0 0.0
    %841 = vmatpush2.msra.mxu0 0.0
    %842 = vmatprep.subr.mxu0 0.0
    %843 = vmatpush2.msra.mxu0 0.0
    %844 = vmatprep.subr.mxu0 0.0
    %845 = vmatpush2.msra.mxu0 0.0
    %846 = vmatprep.subr.mxu0 0.0
    %847 = vmatpush2.msra.mxu0 0.0
    %848 = vmatprep.mubr.f32.mxu0 0.0
    %849 = vmatmul.mubr.f32.gmra.mxu0 %v782
    %v850 = vpop.f32.mrf.mxu0
    %v851 = vadd.f32 0.0, %v850
    %v852 = vpop.f32.mrf.mxu0
    %853 = vdwg.mxu0
    %v854 = vadd.f32 %v356, %v851
    %v855 = vxor.u32 %v854, 2147483648
    %v856 = vmul.f32 %v855, 1.442695
    %v857 = vpow.pop %v856
    %v858 = vadd.f32 %v857, 1.0
    %v859 = vrcp.pop %v858
    %v860 = vmul.f32 1.0, %v859
    %v861 = vtanh.pop %v854
    %v863 = vrot.slane %v771, 6
    %v865 = vmul.f32 %v860, %v863
    %867 = vrot.lane.b32.xlu0 %v861, 64
    %v868 = vpop.permute.xlu0 %867
    %v870 = vmul.f32 %v860, %v868
    %872 = vrot.lane.b32.xlu0 %v870, 32
    %v873 = vpop.permute.xlu0 %872
    %v875 = vadd.f32 %v865, %v873
    %v876 = vtanh.pop %v875
    %878 = vrot.lane.b32.xlu0 %v876, 64
    %v879 = vpop.permute.xlu0 %878
    %v881 = vmul.f32 %v860, %v879
    %883 = vrot.lane.b32.xlu0 %v881, 32
    %v884 = vpop.permute.xlu0 %883
    %v885 = vsel %vm359, %v884, 0
    %887 = vmatprep.subr.mxu0 0.0
    %888 = vmatpush1.msra.mxu0 0.0
    %889 = vmatprep.subr.mxu0 0.0
    %890 = vmatpush1.msra.mxu0 0.0
    %891 = vmatprep.subr.mxu0 0.0
    %892 = vmatpush1.msra.mxu0 0.0
    %893 = vmatprep.subr.mxu0 0.0
    %894 = vmatpush1.msra.mxu0 0.0
    %895 = vmatprep.subr.mxu0 0.0
    %896 = vmatpush1.msra.mxu0 0.0
    %897 = vmatprep.subr.mxu0 0.0
    %898 = vmatpush1.msra.mxu0 0.0
    %899 = vmatprep.subr.mxu0 0.0
    %900 = vmatpush1.msra.mxu0 0.0
    %901 = vmatprep.subr.mxu0 0.0
    %902 = vmatpush1.msra.mxu0 0.0
    %903 = vmatprep.subr.mxu0 0.0
    %904 = vmatpush1.msra.mxu0 0.0
    %905 = vmatprep.subr.mxu0 0.0
    %906 = vmatpush1.msra.mxu0 0.0
    %907 = vmatprep.subr.mxu0 0.0
    %908 = vmatpush1.msra.mxu0 0.0
    %909 = vmatprep.subr.mxu0 0.0
    %910 = vmatpush1.msra.mxu0 0.0
    %911 = vmatprep.subr.mxu0 0.0
    %912 = vmatpush1.msra.mxu0 %v239
    %913 = vmatprep.subr.mxu0 0.0
    %914 = vmatpush1.msra.mxu0 %v238
    %915 = vmatprep.subr.mxu0 0.0
    %916 = vmatpush1.msra.mxu0 %v237
    %917 = vmatprep.subr.mxu0 0.0
    %918 = vmatpush1.msra.mxu0 %v236
    %919 = vmatprep.subr.mxu0 0.0
    %920 = vmatpush2.msra.mxu0 0.0
    %921 = vmatprep.subr.mxu0 0.0
    %922 = vmatpush2.msra.mxu0 0.0
    %923 = vmatprep.subr.mxu0 0.0
    %924 = vmatpush2.msra.mxu0 0.0
    %925 = vmatprep.subr.mxu0 0.0
    %926 = vmatpush2.msra.mxu0 0.0
    %927 = vmatprep.subr.mxu0 0.0
    %928 = vmatpush2.msra.mxu0 0.0
    %929 = vmatprep.subr.mxu0 0.0
    %930 = vmatpush2.msra.mxu0 0.0
    %931 = vmatprep.subr.mxu0 0.0
    %932 = vmatpush2.msra.mxu0 0.0
    %933 = vmatprep.subr.mxu0 0.0
    %934 = vmatpush2.msra.mxu0 0.0
    %935 = vmatprep.subr.mxu0 0.0
    %936 = vmatpush2.msra.mxu0 0.0
    %937 = vmatprep.subr.mxu0 0.0
    %938 = vmatpush2.msra.mxu0 0.0
    %939 = vmatprep.subr.mxu0 0.0
    %940 = vmatpush2.msra.mxu0 0.0
    %941 = vmatprep.subr.mxu0 0.0
    %942 = vmatpush2.msra.mxu0 0.0
    %943 = vmatprep.subr.mxu0 0.0
    %944 = vmatpush2.msra.mxu0 0.0
    %945 = vmatprep.subr.mxu0 0.0
    %946 = vmatpush2.msra.mxu0 0.0
    %947 = vmatprep.subr.mxu0 0.0
    %948 = vmatpush2.msra.mxu0 0.0
    %949 = vmatprep.subr.mxu0 0.0
    %950 = vmatpush2.msra.mxu0 0.0
    %951 = vmatprep.mubr.f32.mxu0 0.0
    %952 = vmatmul.mubr.f32.gmra.mxu0 %v885
    %v953 = vpop.f32.mrf.mxu0
    %v954 = vadd.f32 0.0, %v953
    %v955 = vpop.f32.mrf.mxu0
    %956 = vdwg.mxu0
    %v958 = vrot.slane %v954, 6
    %v960 = vadd.f32 %v356, %v958
    %v961 = vxor.u32 %v960, 2147483648
    %v962 = vmul.f32 %v961, 1.442695
    %v963 = vpow.pop %v962
    %v964 = vadd.f32 %v963, 1.0
    %v965 = vrcp.pop %v964
    %v966 = vmul.f32 1.0, %v965
    %v967 = vtanh.pop %v960
    %v969 = vrot.slane %v875, 6
    %v971 = vmul.f32 %v966, %v969
    %973 = vrot.lane.b32.xlu0 %v967, 64
    %v974 = vpop.permute.xlu0 %973
    %v976 = vmul.f32 %v966, %v974
    %978 = vrot.lane.b32.xlu0 %v976, 32
    %v979 = vpop.permute.xlu0 %978
    %v981 = vadd.f32 %v971, %v979
    %v982 = vtanh.pop %v981
    %984 = vrot.lane.b32.xlu0 %v982, 64
    %v985 = vpop.permute.xlu0 %984
    %v987 = vmul.f32 %v966, %v985
    %v989 = vrot.slane %v987, 2
    %990 = vrot.lane.b32.xlu0 %v989, 32
    %v991 = vpop.permute.xlu0 %990
    %v992 = vsel %vm359, %v991, 0
    %994 = vmatprep.subr.mxu0 0.0
    %995 = vmatpush1.msra.mxu0 0.0
    %996 = vmatprep.subr.mxu0 0.0
    %997 = vmatpush1.msra.mxu0 0.0
    %998 = vmatprep.subr.mxu0 0.0
    %999 = vmatpush1.msra.mxu0 0.0
    %1000 = vmatprep.subr.mxu0 0.0
    %1001 = vmatpush1.msra.mxu0 0.0
    %1002 = vmatprep.subr.mxu0 0.0
    %1003 = vmatpush1.msra.mxu0 0.0
    %1004 = vmatprep.subr.mxu0 0.0
    %1005 = vmatpush1.msra.mxu0 0.0
    %1006 = vmatprep.subr.mxu0 0.0
    %1007 = vmatpush1.msra.mxu0 0.0
    %1008 = vmatprep.subr.mxu0 0.0
    %1009 = vmatpush1.msra.mxu0 0.0
    %1010 = vmatprep.subr.mxu0 0.0
    %1011 = vmatpush1.msra.mxu0 0.0
    %1012 = vmatprep.subr.mxu0 0.0
    %1013 = vmatpush1.msra.mxu0 0.0
    %1014 = vmatprep.subr.mxu0 0.0
    %1015 = vmatpush1.msra.mxu0 0.0
    %1016 = vmatprep.subr.mxu0 0.0
    %1017 = vmatpush1.msra.mxu0 0.0
    %1018 = vmatprep.subr.mxu0 0.0
    %1019 = vmatpush1.msra.mxu0 %v239
    %1020 = vmatprep.subr.mxu0 0.0
    %1021 = vmatpush1.msra.mxu0 %v238
    %1022 = vmatprep.subr.mxu0 0.0
    %1023 = vmatpush1.msra.mxu0 %v237
    %1024 = vmatprep.subr.mxu0 0.0
    %1025 = vmatpush1.msra.mxu0 %v236
    %1026 = vmatprep.subr.mxu0 0.0
    %1027 = vmatpush2.msra.mxu0 0.0
    %1028 = vmatprep.subr.mxu0 0.0
    %1029 = vmatpush2.msra.mxu0 0.0
    %1030 = vmatprep.subr.mxu0 0.0
    %1031 = vmatpush2.msra.mxu0 0.0
    %1032 = vmatprep.subr.mxu0 0.0
    %1033 = vmatpush2.msra.mxu0 0.0
    %1034 = vmatprep.subr.mxu0 0.0
    %1035 = vmatpush2.msra.mxu0 0.0
    %1036 = vmatprep.subr.mxu0 0.0
    %1037 = vmatpush2.msra.mxu0 0.0
    %1038 = vmatprep.subr.mxu0 0.0
    %1039 = vmatpush2.msra.mxu0 0.0
    %1040 = vmatprep.subr.mxu0 0.0
    %1041 = vmatpush2.msra.mxu0 0.0
    %1042 = vmatprep.subr.mxu0 0.0
    %1043 = vmatpush2.msra.mxu0 0.0
    %1044 = vmatprep.subr.mxu0 0.0
    %1045 = vmatpush2.msra.mxu0 0.0
    %1046 = vmatprep.subr.mxu0 0.0
    %1047 = vmatpush2.msra.mxu0 0.0
    %1048 = vmatprep.subr.mxu0 0.0
    %1049 = vmatpush2.msra.mxu0 0.0
    %1050 = vmatprep.subr.mxu0 0.0
    %1051 = vmatpush2.msra.mxu0 0.0
    %1052 = vmatprep.subr.mxu0 0.0
    %1053 = vmatpush2.msra.mxu0 0.0
    %1054 = vmatprep.subr.mxu0 0.0
    %1055 = vmatpush2.msra.mxu0 0.0
    %1056 = vmatprep.subr.mxu0 0.0
    %1057 = vmatpush2.msra.mxu0 0.0
    %1058 = vmatprep.mubr.f32.mxu0 0.0
    %1059 = vmatmul.mubr.f32.gmra.mxu0 %v992
    %v1060 = vpop.f32.mrf.mxu0
    %v1061 = vadd.f32 0.0, %v1060
    %v1062 = vpop.f32.mrf.mxu0
    %1063 = vdwg.mxu0
    %v1065 = vrot.slane %v1061, 4
    %v1067 = vadd.f32 %v356, %v1065
    %v1068 = vxor.u32 %v1067, 2147483648
    %v1069 = vmul.f32 %v1068, 1.442695
    %v1070 = vpow.pop %v1069
    %v1071 = vadd.f32 %v1070, 1.0
    %v1072 = vrcp.pop %v1071
    %v1073 = vmul.f32 1.0, %v1072
    %v1074 = vtanh.pop %v1067
    %v1076 = vrot.slane %v981, 6
    %v1078 = vmul.f32 %v1073, %v1076
    %1080 = vrot.lane.b32.xlu0 %v1074, 64
    %v1081 = vpop.permute.xlu0 %1080
    %v1083 = vmul.f32 %v1073, %v1081
    %1085 = vrot.lane.b32.xlu0 %v1083, 32
    %v1086 = vpop.permute.xlu0 %1085
    %v1088 = vadd.f32 %v1078, %v1086
    %v1089 = vtanh.pop %v1088
    %1091 = vrot.lane.b32.xlu0 %v1089, 64
    %v1092 = vpop.permute.xlu0 %1091
    %v1094 = vmul.f32 %v1073, %v1092
    %v1096 = vrot.slane %v1094, 4
    %1097 = vrot.lane.b32.xlu0 %v1096, 32
    %v1098 = vpop.permute.xlu0 %1097
    %v1099 = vsel %vm359, %v1098, 0
    %1101 = vmatprep.subr.mxu0 0.0
    %1102 = vmatpush1.msra.mxu0 0.0
    %1103 = vmatprep.subr.mxu0 0.0
    %1104 = vmatpush1.msra.mxu0 0.0
    %1105 = vmatprep.subr.mxu0 0.0
    %1106 = vmatpush1.msra.mxu0 0.0
    %1107 = vmatprep.subr.mxu0 0.0
    %1108 = vmatpush1.msra.mxu0 0.0
    %1109 = vmatprep.subr.mxu0 0.0
    %1110 = vmatpush1.msra.mxu0 0.0
    %1111 = vmatprep.subr.mxu0 0.0
    %1112 = vmatpush1.msra.mxu0 0.0
    %1113 = vmatprep.subr.mxu0 0.0
    %1114 = vmatpush1.msra.mxu0 0.0
    %1115 = vmatprep.subr.mxu0 0.0
    %1116 = vmatpush1.msra.mxu0 0.0
    %1117 = vmatprep.subr.mxu0 0.0
    %1118 = vmatpush1.msra.mxu0 0.0
    %1119 = vmatprep.subr.mxu0 0.0
    %1120 = vmatpush1.msra.mxu0 0.0
    %1121 = vmatprep.subr.mxu0 0.0
    %1122 = vmatpush1.msra.mxu0 0.0
    %1123 = vmatprep.subr.mxu0 0.0
    %1124 = vmatpush1.msra.mxu0 0.0
    %1125 = vmatprep.subr.mxu0 0.0
    %1126 = vmatpush1.msra.mxu0 %v239
    %1127 = vmatprep.subr.mxu0 0.0
    %1128 = vmatpush1.msra.mxu0 %v238
    %1129 = vmatprep.subr.mxu0 0.0
    %1130 = vmatpush1.msra.mxu0 %v237
    %1131 = vmatprep.subr.mxu0 0.0
    %1132 = vmatpush1.msra.mxu0 %v236
    %1133 = vmatprep.subr.mxu0 0.0
    %1134 = vmatpush2.msra.mxu0 0.0
    %1135 = vmatprep.subr.mxu0 0.0
    %1136 = vmatpush2.msra.mxu0 0.0
    %1137 = vmatprep.subr.mxu0 0.0
    %1138 = vmatpush2.msra.mxu0 0.0
    %1139 = vmatprep.subr.mxu0 0.0
    %1140 = vmatpush2.msra.mxu0 0.0
    %1141 = vmatprep.subr.mxu0 0.0
    %1142 = vmatpush2.msra.mxu0 0.0
    %1143 = vmatprep.subr.mxu0 0.0
    %1144 = vmatpush2.msra.mxu0 0.0
    %1145 = vmatprep.subr.mxu0 0.0
    %1146 = vmatpush2.msra.mxu0 0.0
    %1147 = vmatprep.subr.mxu0 0.0
    %1148 = vmatpush2.msra.mxu0 0.0
    %1149 = vmatprep.subr.mxu0 0.0
    %1150 = vmatpush2.msra.mxu0 0.0
    %1151 = vmatprep.subr.mxu0 0.0
    %1152 = vmatpush2.msra.mxu0 0.0
    %1153 = vmatprep.subr.mxu0 0.0
    %1154 = vmatpush2.msra.mxu0 0.0
    %1155 = vmatprep.subr.mxu0 0.0
    %1156 = vmatpush2.msra.mxu0 0.0
    %1157 = vmatprep.subr.mxu0 0.0
    %1158 = vmatpush2.msra.mxu0 0.0
    %1159 = vmatprep.subr.mxu0 0.0
    %1160 = vmatpush2.msra.mxu0 0.0
    %1161 = vmatprep.subr.mxu0 0.0
    %1162 = vmatpush2.msra.mxu0 0.0
    %1163 = vmatprep.subr.mxu0 0.0
    %1164 = vmatpush2.msra.mxu0 0.0
    %1165 = vmatprep.mubr.f32.mxu0 0.0
    %1166 = vmatmul.mubr.f32.gmra.mxu0 %v1099
    %v1167 = vpop.f32.mrf.mxu0
    %v1168 = vadd.f32 0.0, %v1167
    %v1169 = vpop.f32.mrf.mxu0
    %1170 = vdwg.mxu0
    %v1172 = vrot.slane %v1168, 2
    %v1174 = vadd.f32 %v356, %v1172
    %v1175 = vxor.u32 %v1174, 2147483648
    %v1176 = vmul.f32 %v1175, 1.442695
    %v1177 = vpow.pop %v1176
    %v1178 = vadd.f32 %v1177, 1.0
    %v1179 = vrcp.pop %v1178
    %v1180 = vmul.f32 1.0, %v1179
    %v1181 = vtanh.pop %v1174
    %v1183 = vrot.slane %v1088, 6
    %v1185 = vmul.f32 %v1180, %v1183
    %1187 = vrot.lane.b32.xlu0 %v1181, 64
    %v1188 = vpop.permute.xlu0 %1187
    %v1190 = vmul.f32 %v1180, %v1188
    %1192 = vrot.lane.b32.xlu0 %v1190, 32
    %v1193 = vpop.permute.xlu0 %1192
    %v1195 = vadd.f32 %v1185, %v1193
    %v1196 = vtanh.pop %v1195
    %1198 = vrot.lane.b32.xlu0 %v1196, 64
    %v1199 = vpop.permute.xlu0 %1198
    %v1201 = vmul.f32 %v1180, %v1199
    %vm1202 = vcmask 1041408
    %v1203 = vsel %vm1202, %v457, %v563
    %v1204 = vsel %vm280, %v1203, %v670
    %vm1205 = vcmask 1045504
    %v1206 = vsel %vm1205, %v1204, %v777
    %v1207 = vsel %vm1202, %v881, %v987
    %v1208 = vsel %vm280, %v1207, %v1094
    %v1209 = vsel %vm1205, %v1208, %v1201
    %v1211 = vlaneseq
    %v1212 = vshrl.u32 %v1211, 7
    %v1213 = vsub.s32 0, %v1212
    %v1214 = vrot.slane %v249, %v1213
    %1218 = vrot.lane.b32.xlu0 %v1206, 32
    %v1219 = vpop.permute.xlu0 %1218
    %1220 = vrot.lane.b32.xlu0 %v1209, 32
    %v1221 = vpop.permute.xlu0 %1220
    %v1222 = vsel %vm359, %v1219, 0
    %v1224 = vsel %vm359, %v1221, 0
    %1226 = vmatprep.subr.mxu0 0.0
    %1227 = vmatpush1.msra.mxu0 0.0
    %1228 = vmatprep.subr.mxu0 0.0
    %1229 = vmatpush1.msra.mxu0 0.0
    %1230 = vmatprep.subr.mxu0 0.0
    %1231 = vmatpush1.msra.mxu0 0.0
    %1232 = vmatprep.subr.mxu0 0.0
    %1233 = vmatpush1.msra.mxu0 0.0
    %1234 = vmatprep.subr.mxu0 0.0
    %1235 = vmatpush1.msra.mxu0 0.0
    %1236 = vmatprep.subr.mxu0 0.0
    %1237 = vmatpush1.msra.mxu0 0.0
    %1238 = vmatprep.subr.mxu0 0.0
    %1239 = vmatpush1.msra.mxu0 0.0
    %1240 = vmatprep.subr.mxu0 0.0
    %1241 = vmatpush1.msra.mxu0 0.0
    %1242 = vmatprep.subr.mxu0 0.0
    %1243 = vmatpush1.msra.mxu0 0.0
    %1244 = vmatprep.subr.mxu0 0.0
    %1245 = vmatpush1.msra.mxu0 0.0
    %1246 = vmatprep.subr.mxu0 0.0
    %1247 = vmatpush1.msra.mxu0 0.0
    %1248 = vmatprep.subr.mxu0 0.0
    %1249 = vmatpush1.msra.mxu0 0.0
    %1250 = vmatprep.subr.mxu0 0.0
    %1251 = vmatpush1.msra.mxu0 %v244
    %1252 = vmatprep.subr.mxu0 0.0
    %1253 = vmatpush1.msra.mxu0 %v243
    %1254 = vmatprep.subr.mxu0 0.0
    %1255 = vmatpush1.msra.mxu0 %v242
    %1256 = vmatprep.subr.mxu0 0.0
    %1257 = vmatpush1.msra.mxu0 %v241
    %1258 = vmatprep.subr.mxu0 0.0
    %1259 = vmatpush2.msra.mxu0 0.0
    %1260 = vmatprep.subr.mxu0 0.0
    %1261 = vmatpush2.msra.mxu0 0.0
    %1262 = vmatprep.subr.mxu0 0.0
    %1263 = vmatpush2.msra.mxu0 0.0
    %1264 = vmatprep.subr.mxu0 0.0
    %1265 = vmatpush2.msra.mxu0 0.0
    %1266 = vmatprep.subr.mxu0 0.0
    %1267 = vmatpush2.msra.mxu0 0.0
    %1268 = vmatprep.subr.mxu0 0.0
    %1269 = vmatpush2.msra.mxu0 0.0
    %1270 = vmatprep.subr.mxu0 0.0
    %1271 = vmatpush2.msra.mxu0 0.0
    %1272 = vmatprep.subr.mxu0 0.0
    %1273 = vmatpush2.msra.mxu0 0.0
    %1274 = vmatprep.subr.mxu0 0.0
    %1275 = vmatpush2.msra.mxu0 0.0
    %1276 = vmatprep.subr.mxu0 0.0
    %1277 = vmatpush2.msra.mxu0 0.0
    %1278 = vmatprep.subr.mxu0 0.0
    %1279 = vmatpush2.msra.mxu0 0.0
    %1280 = vmatprep.subr.mxu0 0.0
    %1281 = vmatpush2.msra.mxu0 0.0
    %1282 = vmatprep.subr.mxu0 0.0
    %1283 = vmatpush2.msra.mxu0 0.0
    %1284 = vmatprep.subr.mxu0 0.0
    %1285 = vmatpush2.msra.mxu0 0.0
    %1286 = vmatprep.subr.mxu0 0.0
    %1287 = vmatpush2.msra.mxu0 0.0
    %1288 = vmatprep.subr.mxu0 0.0
    %1289 = vmatpush2.msra.mxu0 0.0
    %1290 = vmatprep.mubr.f32.mxu0 0.0
    %1291 = vmatmul.mubr.f32.gmra.mxu0 %v1222
    %v1292 = vpop.f32.mrf.mxu0
    %v1293 = vadd.f32 %v1214, %v1292
    %v1294 = vpop.f32.mrf.mxu0
    %1295 = vmatprep.mubr.f32.mxu0 0.0
    %1296 = vmatmul.mubr.f32.gmra.mxu0 %v1224
    %v1297 = vpop.f32.mrf.mxu0
    %v1298 = vadd.f32 %v1214, %v1297
    %v1299 = vpop.f32.mrf.mxu0
    %1300 = vdwg.mxu0
    %1301 = vmatprep.subr.mxu0 0.0
    %1302 = vmatpush1.msra.mxu0 0.0
    %1303 = vmatprep.subr.mxu0 0.0
    %1304 = vmatpush1.msra.mxu0 0.0
    %1305 = vmatprep.subr.mxu0 0.0
    %1306 = vmatpush1.msra.mxu0 0.0
    %1307 = vmatprep.subr.mxu0 0.0
    %1308 = vmatpush1.msra.mxu0 0.0
    %1309 = vmatprep.subr.mxu0 0.0
    %1310 = vmatpush1.msra.mxu0 0.0
    %1311 = vmatprep.subr.mxu0 0.0
    %1312 = vmatpush1.msra.mxu0 0.0
    %1313 = vmatprep.subr.mxu0 0.0
    %1314 = vmatpush1.msra.mxu0 0.0
    %1315 = vmatprep.subr.mxu0 0.0
    %1316 = vmatpush1.msra.mxu0 0.0
    %1317 = vmatprep.subr.mxu0 0.0
    %1318 = vmatpush1.msra.mxu0 0.0
    %1319 = vmatprep.subr.mxu0 0.0
    %1320 = vmatpush1.msra.mxu0 0.0
    %1321 = vmatprep.subr.mxu0 0.0
    %1322 = vmatpush1.msra.mxu0 0.0
    %1323 = vmatprep.subr.mxu0 0.0
    %1324 = vmatpush1.msra.mxu0 0.0
    %1325 = vmatprep.subr.mxu0 0.0
    %1326 = vmatpush1.msra.mxu0 %v248
    %1327 = vmatprep.subr.mxu0 0.0
    %1328 = vmatpush1.msra.mxu0 %v247
    %1329 = vmatprep.subr.mxu0 0.0
    %1330 = vmatpush1.msra.mxu0 %v246
    %1331 = vmatprep.subr.mxu0 0.0
    %1332 = vmatpush1.msra.mxu0 %v245
    %1333 = vmatprep.subr.mxu0 0.0
    %1334 = vmatpush2.msra.mxu0 0.0
    %1335 = vmatprep.subr.mxu0 0.0
    %1336 = vmatpush2.msra.mxu0 0.0
    %1337 = vmatprep.subr.mxu0 0.0
    %1338 = vmatpush2.msra.mxu0 0.0
    %1339 = vmatprep.subr.mxu0 0.0
    %1340 = vmatpush2.msra.mxu0 0.0
    %1341 = vmatprep.subr.mxu0 0.0
    %1342 = vmatpush2.msra.mxu0 0.0
    %1343 = vmatprep.subr.mxu0 0.0
    %1344 = vmatpush2.msra.mxu0 0.0
    %1345 = vmatprep.subr.mxu0 0.0
    %1346 = vmatpush2.msra.mxu0 0.0
    %1347 = vmatprep.subr.mxu0 0.0
    %1348 = vmatpush2.msra.mxu0 0.0
    %1349 = vmatprep.subr.mxu0 0.0
    %1350 = vmatpush2.msra.mxu0 0.0
    %1351 = vmatprep.subr.mxu0 0.0
    %1352 = vmatpush2.msra.mxu0 0.0
    %1353 = vmatprep.subr.mxu0 0.0
    %1354 = vmatpush2.msra.mxu0 0.0
    %1355 = vmatprep.subr.mxu0 0.0
    %1356 = vmatpush2.msra.mxu0 0.0
    %1357 = vmatprep.subr.mxu0 0.0
    %1358 = vmatpush2.msra.mxu0 0.0
    %1359 = vmatprep.subr.mxu0 0.0
    %1360 = vmatpush2.msra.mxu0 0.0
    %1361 = vmatprep.subr.mxu0 0.0
    %1362 = vmatpush2.msra.mxu0 0.0
    %1363 = vmatprep.subr.mxu0 0.0
    %1364 = vmatpush2.msra.mxu0 0.0
    %1365 = vmatprep.mubr.f32.mxu0 0.0
    %1366 = vmatmul.mubr.f32.gmra.mxu0 %v361
    %v1367 = vpop.f32.mrf.mxu0
    %v1368 = vadd.f32 0.0, %v1367
    %v1369 = vpop.f32.mrf.mxu0
    %1370 = vdwg.mxu0
    %v1371 = vadd.f32 %v1293, %v1368
    %v1372 = vxor.u32 %v1371, 2147483648
    %v1373 = vmul.f32 %v1372, 1.442695
    %v1374 = vpow.pop %v1373
    %v1375 = vadd.f32 %v1374, 1.0
    %v1376 = vrcp.pop %v1375
    %v1377 = vmul.f32 1.0, %v1376
    %v1378 = vtanh.pop %v1371
    %v1379 = vmul.f32 %v1377, 0.0
    %1381 = vrot.lane.b32.xlu0 %v1378, 64
    %v1382 = vpop.permute.xlu0 %1381
    %v1384 = vmul.f32 %v1377, %v1382
    %1386 = vrot.lane.b32.xlu0 %v1384, 32
    %v1387 = vpop.permute.xlu0 %1386
    %v1389 = vadd.f32 %v1379, %v1387
    %v1390 = vtanh.pop %v1389
    %1392 = vrot.lane.b32.xlu0 %v1390, 64
    %v1393 = vpop.permute.xlu0 %1392
    %v1395 = vmul.f32 %v1377, %v1393
    %1397 = vrot.lane.b32.xlu0 %v1395, 32
    %v1398 = vpop.permute.xlu0 %1397
    %v1399 = vsel %vm359, %v1398, 0
    %1401 = vmatprep.subr.mxu0 0.0
    %1402 = vmatpush1.msra.mxu0 0.0
    %1403 = vmatprep.subr.mxu0 0.0
    %1404 = vmatpush1.msra.mxu0 0.0
    %1405 = vmatprep.subr.mxu0 0.0
    %1406 = vmatpush1.msra.mxu0 0.0
    %1407 = vmatprep.subr.mxu0 0.0
    %1408 = vmatpush1.msra.mxu0 0.0
    %1409 = vmatprep.subr.mxu0 0.0
    %1410 = vmatpush1.msra.mxu0 0.0
    %1411 = vmatprep.subr.mxu0 0.0
    %1412 = vmatpush1.msra.mxu0 0.0
    %1413 = vmatprep.subr.mxu0 0.0
    %1414 = vmatpush1.msra.mxu0 0.0
    %1415 = vmatprep.subr.mxu0 0.0
    %1416 = vmatpush1.msra.mxu0 0.0
    %1417 = vmatprep.subr.mxu0 0.0
    %1418 = vmatpush1.msra.mxu0 0.0
    %1419 = vmatprep.subr.mxu0 0.0
    %1420 = vmatpush1.msra.mxu0 0.0
    %1421 = vmatprep.subr.mxu0 0.0
    %1422 = vmatpush1.msra.mxu0 0.0
    %1423 = vmatprep.subr.mxu0 0.0
    %1424 = vmatpush1.msra.mxu0 0.0
    %1425 = vmatprep.subr.mxu0 0.0
    %1426 = vmatpush1.msra.mxu0 %v248
    %1427 = vmatprep.subr.mxu0 0.0
    %1428 = vmatpush1.msra.mxu0 %v247
    %1429 = vmatprep.subr.mxu0 0.0
    %1430 = vmatpush1.msra.mxu0 %v246
    %1431 = vmatprep.subr.mxu0 0.0
    %1432 = vmatpush1.msra.mxu0 %v245
    %1433 = vmatprep.subr.mxu0 0.0
    %1434 = vmatpush2.msra.mxu0 0.0
    %1435 = vmatprep.subr.mxu0 0.0
    %1436 = vmatpush2.msra.mxu0 0.0
    %1437 = vmatprep.subr.mxu0 0.0
    %1438 = vmatpush2.msra.mxu0 0.0
    %1439 = vmatprep.subr.mxu0 0.0
    %1440 = vmatpush2.msra.mxu0 0.0
    %1441 = vmatprep.subr.mxu0 0.0
    %1442 = vmatpush2.msra.mxu0 0.0
    %1443 = vmatprep.subr.mxu0 0.0
    %1444 = vmatpush2.msra.mxu0 0.0
    %1445 = vmatprep.subr.mxu0 0.0
    %1446 = vmatpush2.msra.mxu0 0.0
    %1447 = vmatprep.subr.mxu0 0.0
    %1448 = vmatpush2.msra.mxu0 0.0
    %1449 = vmatprep.subr.mxu0 0.0
    %1450 = vmatpush2.msra.mxu0 0.0
    %1451 = vmatprep.subr.mxu0 0.0
    %1452 = vmatpush2.msra.mxu0 0.0
    %1453 = vmatprep.subr.mxu0 0.0
    %1454 = vmatpush2.msra.mxu0 0.0
    %1455 = vmatprep.subr.mxu0 0.0
    %1456 = vmatpush2.msra.mxu0 0.0
    %1457 = vmatprep.subr.mxu0 0.0
    %1458 = vmatpush2.msra.mxu0 0.0
    %1459 = vmatprep.subr.mxu0 0.0
    %1460 = vmatpush2.msra.mxu0 0.0
    %1461 = vmatprep.subr.mxu0 0.0
    %1462 = vmatpush2.msra.mxu0 0.0
    %1463 = vmatprep.subr.mxu0 0.0
    %1464 = vmatpush2.msra.mxu0 0.0
    %1465 = vmatprep.mubr.f32.mxu0 0.0
    %1466 = vmatmul.mubr.f32.gmra.mxu0 %v1399
    %v1467 = vpop.f32.mrf.mxu0
    %v1468 = vadd.f32 0.0, %v1467
    %v1469 = vpop.f32.mrf.mxu0
    %1470 = vdwg.mxu0
    %v1472 = vrot.slane %v1468, 6
    %v1474 = vadd.f32 %v1293, %v1472
    %v1475 = vxor.u32 %v1474, 2147483648
    %v1476 = vmul.f32 %v1475, 1.442695
    %v1477 = vpow.pop %v1476
    %v1478 = vadd.f32 %v1477, 1.0
    %v1479 = vrcp.pop %v1478
    %v1480 = vmul.f32 1.0, %v1479
    %v1481 = vtanh.pop %v1474
    %v1483 = vrot.slane %v1389, 6
    %v1485 = vmul.f32 %v1480, %v1483
    %1487 = vrot.lane.b32.xlu0 %v1481, 64
    %v1488 = vpop.permute.xlu0 %1487
    %v1490 = vmul.f32 %v1480, %v1488
    %1492 = vrot.lane.b32.xlu0 %v1490, 32
    %v1493 = vpop.permute.xlu0 %1492
    %v1495 = vadd.f32 %v1485, %v1493
    %v1496 = vtanh.pop %v1495
    %1498 = vrot.lane.b32.xlu0 %v1496, 64
    %v1499 = vpop.permute.xlu0 %1498
    %v1501 = vmul.f32 %v1480, %v1499
    %v1503 = vrot.slane %v1501, 2
    %1504 = vrot.lane.b32.xlu0 %v1503, 32
    %v1505 = vpop.permute.xlu0 %1504
    %v1506 = vsel %vm359, %v1505, 0
    %1508 = vmatprep.subr.mxu0 0.0
    %1509 = vmatpush1.msra.mxu0 0.0
    %1510 = vmatprep.subr.mxu0 0.0
    %1511 = vmatpush1.msra.mxu0 0.0
    %1512 = vmatprep.subr.mxu0 0.0
    %1513 = vmatpush1.msra.mxu0 0.0
    %1514 = vmatprep.subr.mxu0 0.0
    %1515 = vmatpush1.msra.mxu0 0.0
    %1516 = vmatprep.subr.mxu0 0.0
    %1517 = vmatpush1.msra.mxu0 0.0
    %1518 = vmatprep.subr.mxu0 0.0
    %1519 = vmatpush1.msra.mxu0 0.0
    %1520 = vmatprep.subr.mxu0 0.0
    %1521 = vmatpush1.msra.mxu0 0.0
    %1522 = vmatprep.subr.mxu0 0.0
    %1523 = vmatpush1.msra.mxu0 0.0
    %1524 = vmatprep.subr.mxu0 0.0
    %1525 = vmatpush1.msra.mxu0 0.0
    %1526 = vmatprep.subr.mxu0 0.0
    %1527 = vmatpush1.msra.mxu0 0.0
    %1528 = vmatprep.subr.mxu0 0.0
    %1529 = vmatpush1.msra.mxu0 0.0
    %1530 = vmatprep.subr.mxu0 0.0
    %1531 = vmatpush1.msra.mxu0 0.0
    %1532 = vmatprep.subr.mxu0 0.0
    %1533 = vmatpush1.msra.mxu0 %v248
    %1534 = vmatprep.subr.mxu0 0.0
    %1535 = vmatpush1.msra.mxu0 %v247
    %1536 = vmatprep.subr.mxu0 0.0
    %1537 = vmatpush1.msra.mxu0 %v246
    %1538 = vmatprep.subr.mxu0 0.0
    %1539 = vmatpush1.msra.mxu0 %v245
    %1540 = vmatprep.subr.mxu0 0.0
    %1541 = vmatpush2.msra.mxu0 0.0
    %1542 = vmatprep.subr.mxu0 0.0
    %1543 = vmatpush2.msra.mxu0 0.0
    %1544 = vmatprep.subr.mxu0 0.0
    %1545 = vmatpush2.msra.mxu0 0.0
    %1546 = vmatprep.subr.mxu0 0.0
    %1547 = vmatpush2.msra.mxu0 0.0
    %1548 = vmatprep.subr.mxu0 0.0
    %1549 = vmatpush2.msra.mxu0 0.0
    %1550 = vmatprep.subr.mxu0 0.0
    %1551 = vmatpush2.msra.mxu0 0.0
    %1552 = vmatprep.subr.mxu0 0.0
    %1553 = vmatpush2.msra.mxu0 0.0
    %1554 = vmatprep.subr.mxu0 0.0
    %1555 = vmatpush2.msra.mxu0 0.0
    %1556 = vmatprep.subr.mxu0 0.0
    %1557 = vmatpush2.msra.mxu0 0.0
    %1558 = vmatprep.subr.mxu0 0.0
    %1559 = vmatpush2.msra.mxu0 0.0
    %1560 = vmatprep.subr.mxu0 0.0
    %1561 = vmatpush2.msra.mxu0 0.0
    %1562 = vmatprep.subr.mxu0 0.0
    %1563 = vmatpush2.msra.mxu0 0.0
    %1564 = vmatprep.subr.mxu0 0.0
    %1565 = vmatpush2.msra.mxu0 0.0
    %1566 = vmatprep.subr.mxu0 0.0
    %1567 = vmatpush2.msra.mxu0 0.0
    %1568 = vmatprep.subr.mxu0 0.0
    %1569 = vmatpush2.msra.mxu0 0.0
    %1570 = vmatprep.subr.mxu0 0.0
    %1571 = vmatpush2.msra.mxu0 0.0
    %1572 = vmatprep.mubr.f32.mxu0 0.0
    %1573 = vmatmul.mubr.f32.gmra.mxu0 %v1506
    %v1574 = vpop.f32.mrf.mxu0
    %v1575 = vadd.f32 0.0, %v1574
    %v1576 = vpop.f32.mrf.mxu0
    %1577 = vdwg.mxu0
    %v1579 = vrot.slane %v1575, 4
    %v1581 = vadd.f32 %v1293, %v1579
    %v1582 = vxor.u32 %v1581, 2147483648
    %v1583 = vmul.f32 %v1582, 1.442695
    %v1584 = vpow.pop %v1583
    %v1585 = vadd.f32 %v1584, 1.0
    %v1586 = vrcp.pop %v1585
    %v1587 = vmul.f32 1.0, %v1586
    %v1588 = vtanh.pop %v1581
    %v1590 = vrot.slane %v1495, 6
    %v1592 = vmul.f32 %v1587, %v1590
    %1594 = vrot.lane.b32.xlu0 %v1588, 64
    %v1595 = vpop.permute.xlu0 %1594
    %v1597 = vmul.f32 %v1587, %v1595
    %1599 = vrot.lane.b32.xlu0 %v1597, 32
    %v1600 = vpop.permute.xlu0 %1599
    %v1602 = vadd.f32 %v1592, %v1600
    %v1603 = vtanh.pop %v1602
    %1605 = vrot.lane.b32.xlu0 %v1603, 64
    %v1606 = vpop.permute.xlu0 %1605
    %v1608 = vmul.f32 %v1587, %v1606
    %v1610 = vrot.slane %v1608, 4
    %1611 = vrot.lane.b32.xlu0 %v1610, 32
    %v1612 = vpop.permute.xlu0 %1611
    %v1613 = vsel %vm359, %v1612, 0
    %1615 = vmatprep.subr.mxu0 0.0
    %1616 = vmatpush1.msra.mxu0 0.0
    %1617 = vmatprep.subr.mxu0 0.0
    %1618 = vmatpush1.msra.mxu0 0.0
    %1619 = vmatprep.subr.mxu0 0.0
    %1620 = vmatpush1.msra.mxu0 0.0
    %1621 = vmatprep.subr.mxu0 0.0
    %1622 = vmatpush1.msra.mxu0 0.0
    %1623 = vmatprep.subr.mxu0 0.0
    %1624 = vmatpush1.msra.mxu0 0.0
    %1625 = vmatprep.subr.mxu0 0.0
    %1626 = vmatpush1.msra.mxu0 0.0
    %1627 = vmatprep.subr.mxu0 0.0
    %1628 = vmatpush1.msra.mxu0 0.0
    %1629 = vmatprep.subr.mxu0 0.0
    %1630 = vmatpush1.msra.mxu0 0.0
    %1631 = vmatprep.subr.mxu0 0.0
    %1632 = vmatpush1.msra.mxu0 0.0
    %1633 = vmatprep.subr.mxu0 0.0
    %1634 = vmatpush1.msra.mxu0 0.0
    %1635 = vmatprep.subr.mxu0 0.0
    %1636 = vmatpush1.msra.mxu0 0.0
    %1637 = vmatprep.subr.mxu0 0.0
    %1638 = vmatpush1.msra.mxu0 0.0
    %1639 = vmatprep.subr.mxu0 0.0
    %1640 = vmatpush1.msra.mxu0 %v248
    %1641 = vmatprep.subr.mxu0 0.0
    %1642 = vmatpush1.msra.mxu0 %v247
    %1643 = vmatprep.subr.mxu0 0.0
    %1644 = vmatpush1.msra.mxu0 %v246
    %1645 = vmatprep.subr.mxu0 0.0
    %1646 = vmatpush1.msra.mxu0 %v245
    %1647 = vmatprep.subr.mxu0 0.0
    %1648 = vmatpush2.msra.mxu0 0.0
    %1649 = vmatprep.subr.mxu0 0.0
    %1650 = vmatpush2.msra.mxu0 0.0
    %1651 = vmatprep.subr.mxu0 0.0
    %1652 = vmatpush2.msra.mxu0 0.0
    %1653 = vmatprep.subr.mxu0 0.0
    %1654 = vmatpush2.msra.mxu0 0.0
    %1655 = vmatprep.subr.mxu0 0.0
    %1656 = vmatpush2.msra.mxu0 0.0
    %1657 = vmatprep.subr.mxu0 0.0
    %1658 = vmatpush2.msra.mxu0 0.0
    %1659 = vmatprep.subr.mxu0 0.0
    %1660 = vmatpush2.msra.mxu0 0.0
    %1661 = vmatprep.subr.mxu0 0.0
    %1662 = vmatpush2.msra.mxu0 0.0
    %1663 = vmatprep.subr.mxu0 0.0
    %1664 = vmatpush2.msra.mxu0 0.0
    %1665 = vmatprep.subr.mxu0 0.0
    %1666 = vmatpush2.msra.mxu0 0.0
    %1667 = vmatprep.subr.mxu0 0.0
    %1668 = vmatpush2.msra.mxu0 0.0
    %1669 = vmatprep.subr.mxu0 0.0
    %1670 = vmatpush2.msra.mxu0 0.0
    %1671 = vmatprep.subr.mxu0 0.0
    %1672 = vmatpush2.msra.mxu0 0.0
    %1673 = vmatprep.subr.mxu0 0.0
    %1674 = vmatpush2.msra.mxu0 0.0
    %1675 = vmatprep.subr.mxu0 0.0
    %1676 = vmatpush2.msra.mxu0 0.0
    %1677 = vmatprep.subr.mxu0 0.0
    %1678 = vmatpush2.msra.mxu0 0.0
    %1679 = vmatprep.mubr.f32.mxu0 0.0
    %1680 = vmatmul.mubr.f32.gmra.mxu0 %v1613
    %v1681 = vpop.f32.mrf.mxu0
    %v1682 = vadd.f32 0.0, %v1681
    %v1683 = vpop.f32.mrf.mxu0
    %1684 = vdwg.mxu0
    %v1686 = vrot.slane %v1682, 2
    %v1688 = vadd.f32 %v1293, %v1686
    %v1689 = vxor.u32 %v1688, 2147483648
    %v1690 = vmul.f32 %v1689, 1.442695
    %v1691 = vpow.pop %v1690
    %v1692 = vadd.f32 %v1691, 1.0
    %v1693 = vrcp.pop %v1692
    %v1694 = vmul.f32 1.0, %v1693
    %v1695 = vtanh.pop %v1688
    %v1697 = vrot.slane %v1602, 6
    %v1699 = vmul.f32 %v1694, %v1697
    %1701 = vrot.lane.b32.xlu0 %v1695, 64
    %v1702 = vpop.permute.xlu0 %1701
    %v1704 = vmul.f32 %v1694, %v1702
    %1706 = vrot.lane.b32.xlu0 %v1704, 32
    %v1707 = vpop.permute.xlu0 %1706
    %v1709 = vadd.f32 %v1699, %v1707
    %v1710 = vtanh.pop %v1709
    %1712 = vrot.lane.b32.xlu0 %v1710, 64
    %v1713 = vpop.permute.xlu0 %1712
    %v1715 = vmul.f32 %v1694, %v1713
    %v1717 = vrot.slane %v1715, 6
    %1718 = vrot.lane.b32.xlu0 %v1717, 32
    %v1719 = vpop.permute.xlu0 %1718
    %v1720 = vsel %vm359, %v1719, 0
    %1722 = vmatprep.subr.mxu0 0.0
    %1723 = vmatpush1.msra.mxu0 0.0
    %1724 = vmatprep.subr.mxu0 0.0
    %1725 = vmatpush1.msra.mxu0 0.0
    %1726 = vmatprep.subr.mxu0 0.0
    %1727 = vmatpush1.msra.mxu0 0.0
    %1728 = vmatprep.subr.mxu0 0.0
    %1729 = vmatpush1.msra.mxu0 0.0
    %1730 = vmatprep.subr.mxu0 0.0
    %1731 = vmatpush1.msra.mxu0 0.0
    %1732 = vmatprep.subr.mxu0 0.0
    %1733 = vmatpush1.msra.mxu0 0.0
    %1734 = vmatprep.subr.mxu0 0.0
    %1735 = vmatpush1.msra.mxu0 0.0
    %1736 = vmatprep.subr.mxu0 0.0
    %1737 = vmatpush1.msra.mxu0 0.0
    %1738 = vmatprep.subr.mxu0 0.0
    %1739 = vmatpush1.msra.mxu0 0.0
    %1740 = vmatprep.subr.mxu0 0.0
    %1741 = vmatpush1.msra.mxu0 0.0
    %1742 = vmatprep.subr.mxu0 0.0
    %1743 = vmatpush1.msra.mxu0 0.0
    %1744 = vmatprep.subr.mxu0 0.0
    %1745 = vmatpush1.msra.mxu0 0.0
    %1746 = vmatprep.subr.mxu0 0.0
    %1747 = vmatpush1.msra.mxu0 %v248
    %1748 = vmatprep.subr.mxu0 0.0
    %1749 = vmatpush1.msra.mxu0 %v247
    %1750 = vmatprep.subr.mxu0 0.0
    %1751 = vmatpush1.msra.mxu0 %v246
    %1752 = vmatprep.subr.mxu0 0.0
    %1753 = vmatpush1.msra.mxu0 %v245
    %1754 = vmatprep.subr.mxu0 0.0
    %1755 = vmatpush2.msra.mxu0 0.0
    %1756 = vmatprep.subr.mxu0 0.0
    %1757 = vmatpush2.msra.mxu0 0.0
    %1758 = vmatprep.subr.mxu0 0.0
    %1759 = vmatpush2.msra.mxu0 0.0
    %1760 = vmatprep.subr.mxu0 0.0
    %1761 = vmatpush2.msra.mxu0 0.0
    %1762 = vmatprep.subr.mxu0 0.0
    %1763 = vmatpush2.msra.mxu0 0.0
    %1764 = vmatprep.subr.mxu0 0.0
    %1765 = vmatpush2.msra.mxu0 0.0
    %1766 = vmatprep.subr.mxu0 0.0
    %1767 = vmatpush2.msra.mxu0 0.0
    %1768 = vmatprep.subr.mxu0 0.0
    %1769 = vmatpush2.msra.mxu0 0.0
    %1770 = vmatprep.subr.mxu0 0.0
    %1771 = vmatpush2.msra.mxu0 0.0
    %1772 = vmatprep.subr.mxu0 0.0
    %1773 = vmatpush2.msra.mxu0 0.0
    %1774 = vmatprep.subr.mxu0 0.0
    %1775 = vmatpush2.msra.mxu0 0.0
    %1776 = vmatprep.subr.mxu0 0.0
    %1777 = vmatpush2.msra.mxu0 0.0
    %1778 = vmatprep.subr.mxu0 0.0
    %1779 = vmatpush2.msra.mxu0 0.0
    %1780 = vmatprep.subr.mxu0 0.0
    %1781 = vmatpush2.msra.mxu0 0.0
    %1782 = vmatprep.subr.mxu0 0.0
    %1783 = vmatpush2.msra.mxu0 0.0
    %1784 = vmatprep.subr.mxu0 0.0
    %1785 = vmatpush2.msra.mxu0 0.0
    %1786 = vmatprep.mubr.f32.mxu0 0.0
    %1787 = vmatmul.mubr.f32.gmra.mxu0 %v1720
    %v1788 = vpop.f32.mrf.mxu0
    %v1789 = vadd.f32 0.0, %v1788
    %v1790 = vpop.f32.mrf.mxu0
    %1791 = vdwg.mxu0
    %v1792 = vadd.f32 %v1298, %v1789
    %v1793 = vxor.u32 %v1792, 2147483648
    %v1794 = vmul.f32 %v1793, 1.442695
    %v1795 = vpow.pop %v1794
    %v1796 = vadd.f32 %v1795, 1.0
    %v1797 = vrcp.pop %v1796
    %v1798 = vmul.f32 1.0, %v1797
    %v1799 = vtanh.pop %v1792
    %v1801 = vrot.slane %v1709, 6
    %v1803 = vmul.f32 %v1798, %v1801
    %1805 = vrot.lane.b32.xlu0 %v1799, 64
    %v1806 = vpop.permute.xlu0 %1805
    %v1808 = vmul.f32 %v1798, %v1806
    %1810 = vrot.lane.b32.xlu0 %v1808, 32
    %v1811 = vpop.permute.xlu0 %1810
    %v1813 = vadd.f32 %v1803, %v1811
    %v1814 = vtanh.pop %v1813
    %1816 = vrot.lane.b32.xlu0 %v1814, 64
    %v1817 = vpop.permute.xlu0 %1816
    %v1819 = vmul.f32 %v1798, %v1817
    %1821 = vrot.lane.b32.xlu0 %v1819, 32
    %v1822 = vpop.permute.xlu0 %1821
    %v1823 = vsel %vm359, %v1822, 0
    %1825 = vmatprep.subr.mxu0 0.0
    %1826 = vmatpush1.msra.mxu0 0.0
    %1827 = vmatprep.subr.mxu0 0.0
    %1828 = vmatpush1.msra.mxu0 0.0
    %1829 = vmatprep.subr.mxu0 0.0
    %1830 = vmatpush1.msra.mxu0 0.0
    %1831 = vmatprep.subr.mxu0 0.0
    %1832 = vmatpush1.msra.mxu0 0.0
    %1833 = vmatprep.subr.mxu0 0.0
    %1834 = vmatpush1.msra.mxu0 0.0
    %1835 = vmatprep.subr.mxu0 0.0
    %1836 = vmatpush1.msra.mxu0 0.0
    %1837 = vmatprep.subr.mxu0 0.0
    %1838 = vmatpush1.msra.mxu0 0.0
    %1839 = vmatprep.subr.mxu0 0.0
    %1840 = vmatpush1.msra.mxu0 0.0
    %1841 = vmatprep.subr.mxu0 0.0
    %1842 = vmatpush1.msra.mxu0 0.0
    %1843 = vmatprep.subr.mxu0 0.0
    %1844 = vmatpush1.msra.mxu0 0.0
    %1845 = vmatprep.subr.mxu0 0.0
    %1846 = vmatpush1.msra.mxu0 0.0
    %1847 = vmatprep.subr.mxu0 0.0
    %1848 = vmatpush1.msra.mxu0 0.0
    %1849 = vmatprep.subr.mxu0 0.0
    %1850 = vmatpush1.msra.mxu0 %v248
    %1851 = vmatprep.subr.mxu0 0.0
    %1852 = vmatpush1.msra.mxu0 %v247
    %1853 = vmatprep.subr.mxu0 0.0
    %1854 = vmatpush1.msra.mxu0 %v246
    %1855 = vmatprep.subr.mxu0 0.0
    %1856 = vmatpush1.msra.mxu0 %v245
    %1857 = vmatprep.subr.mxu0 0.0
    %1858 = vmatpush2.msra.mxu0 0.0
    %1859 = vmatprep.subr.mxu0 0.0
    %1860 = vmatpush2.msra.mxu0 0.0
    %1861 = vmatprep.subr.mxu0 0.0
    %1862 = vmatpush2.msra.mxu0 0.0
    %1863 = vmatprep.subr.mxu0 0.0
    %1864 = vmatpush2.msra.mxu0 0.0
    %1865 = vmatprep.subr.mxu0 0.0
    %1866 = vmatpush2.msra.mxu0 0.0
    %1867 = vmatprep.subr.mxu0 0.0
    %1868 = vmatpush2.msra.mxu0 0.0
    %1869 = vmatprep.subr.mxu0 0.0
    %1870 = vmatpush2.msra.mxu0 0.0
    %1871 = vmatprep.subr.mxu0 0.0
    %1872 = vmatpush2.msra.mxu0 0.0
    %1873 = vmatprep.subr.mxu0 0.0
    %1874 = vmatpush2.msra.mxu0 0.0
    %1875 = vmatprep.subr.mxu0 0.0
    %1876 = vmatpush2.msra.mxu0 0.0
    %1877 = vmatprep.subr.mxu0 0.0
    %1878 = vmatpush2.msra.mxu0 0.0
    %1879 = vmatprep.subr.mxu0 0.0
    %1880 = vmatpush2.msra.mxu0 0.0
    %1881 = vmatprep.subr.mxu0 0.0
    %1882 = vmatpush2.msra.mxu0 0.0
    %1883 = vmatprep.subr.mxu0 0.0
    %1884 = vmatpush2.msra.mxu0 0.0
    %1885 = vmatprep.subr.mxu0 0.0
    %1886 = vmatpush2.msra.mxu0 0.0
    %1887 = vmatprep.subr.mxu0 0.0
    %1888 = vmatpush2.msra.mxu0 0.0
    %1889 = vmatprep.mubr.f32.mxu0 0.0
    %1890 = vmatmul.mubr.f32.gmra.mxu0 %v1823
    %v1891 = vpop.f32.mrf.mxu0
    %v1892 = vadd.f32 0.0, %v1891
    %v1893 = vpop.f32.mrf.mxu0
    %1894 = vdwg.mxu0
    %v1896 = vrot.slane %v1892, 6
    %v1898 = vadd.f32 %v1298, %v1896
    %v1899 = vxor.u32 %v1898, 2147483648
    %v1900 = vmul.f32 %v1899, 1.442695
    %v1901 = vpow.pop %v1900
    %v1902 = vadd.f32 %v1901, 1.0
    %v1903 = vrcp.pop %v1902
    %v1904 = vmul.f32 1.0, %v1903
    %v1905 = vtanh.pop %v1898
    %v1907 = vrot.slane %v1813, 6
    %v1909 = vmul.f32 %v1904, %v1907
    %1911 = vrot.lane.b32.xlu0 %v1905, 64
    %v1912 = vpop.permute.xlu0 %1911
    %v1914 = vmul.f32 %v1904, %v1912
    %1916 = vrot.lane.b32.xlu0 %v1914, 32
    %v1917 = vpop.permute.xlu0 %1916
    %v1919 = vadd.f32 %v1909, %v1917
    %v1920 = vtanh.pop %v1919
    %1922 = vrot.lane.b32.xlu0 %v1920, 64
    %v1923 = vpop.permute.xlu0 %1922
    %v1925 = vmul.f32 %v1904, %v1923
    %v1927 = vrot.slane %v1925, 2
    %1928 = vrot.lane.b32.xlu0 %v1927, 32
    %v1929 = vpop.permute.xlu0 %1928
    %v1930 = vsel %vm359, %v1929, 0
    %1932 = vmatprep.subr.mxu0 0.0
    %1933 = vmatpush1.msra.mxu0 0.0
    %1934 = vmatprep.subr.mxu0 0.0
    %1935 = vmatpush1.msra.mxu0 0.0
    %1936 = vmatprep.subr.mxu0 0.0
    %1937 = vmatpush1.msra.mxu0 0.0
    %1938 = vmatprep.subr.mxu0 0.0
    %1939 = vmatpush1.msra.mxu0 0.0
    %1940 = vmatprep.subr.mxu0 0.0
    %1941 = vmatpush1.msra.mxu0 0.0
    %1942 = vmatprep.subr.mxu0 0.0
    %1943 = vmatpush1.msra.mxu0 0.0
    %1944 = vmatprep.subr.mxu0 0.0
    %1945 = vmatpush1.msra.mxu0 0.0
    %1946 = vmatprep.subr.mxu0 0.0
    %1947 = vmatpush1.msra.mxu0 0.0
    %1948 = vmatprep.subr.mxu0 0.0
    %1949 = vmatpush1.msra.mxu0 0.0
    %1950 = vmatprep.subr.mxu0 0.0
    %1951 = vmatpush1.msra.mxu0 0.0
    %1952 = vmatprep.subr.mxu0 0.0
    %1953 = vmatpush1.msra.mxu0 0.0
    %1954 = vmatprep.subr.mxu0 0.0
    %1955 = vmatpush1.msra.mxu0 0.0
    %1956 = vmatprep.subr.mxu0 0.0
    %1957 = vmatpush1.msra.mxu0 %v248
    %1958 = vmatprep.subr.mxu0 0.0
    %1959 = vmatpush1.msra.mxu0 %v247
    %1960 = vmatprep.subr.mxu0 0.0
    %1961 = vmatpush1.msra.mxu0 %v246
    %1962 = vmatprep.subr.mxu0 0.0
    %1963 = vmatpush1.msra.mxu0 %v245
    %1964 = vmatprep.subr.mxu0 0.0
    %1965 = vmatpush2.msra.mxu0 0.0
    %1966 = vmatprep.subr.mxu0 0.0
    %1967 = vmatpush2.msra.mxu0 0.0
    %1968 = vmatprep.subr.mxu0 0.0
    %1969 = vmatpush2.msra.mxu0 0.0
    %1970 = vmatprep.subr.mxu0 0.0
    %1971 = vmatpush2.msra.mxu0 0.0
    %1972 = vmatprep.subr.mxu0 0.0
    %1973 = vmatpush2.msra.mxu0 0.0
    %1974 = vmatprep.subr.mxu0 0.0
    %1975 = vmatpush2.msra.mxu0 0.0
    %1976 = vmatprep.subr.mxu0 0.0
    %1977 = vmatpush2.msra.mxu0 0.0
    %1978 = vmatprep.subr.mxu0 0.0
    %1979 = vmatpush2.msra.mxu0 0.0
    %1980 = vmatprep.subr.mxu0 0.0
    %1981 = vmatpush2.msra.mxu0 0.0
    %1982 = vmatprep.subr.mxu0 0.0
    %1983 = vmatpush2.msra.mxu0 0.0
    %1984 = vmatprep.subr.mxu0 0.0
    %1985 = vmatpush2.msra.mxu0 0.0
    %1986 = vmatprep.subr.mxu0 0.0
    %1987 = vmatpush2.msra.mxu0 0.0
    %1988 = vmatprep.subr.mxu0 0.0
    %1989 = vmatpush2.msra.mxu0 0.0
    %1990 = vmatprep.subr.mxu0 0.0
    %1991 = vmatpush2.msra.mxu0 0.0
    %1992 = vmatprep.subr.mxu0 0.0
    %1993 = vmatpush2.msra.mxu0 0.0
    %1994 = vmatprep.subr.mxu0 0.0
    %1995 = vmatpush2.msra.mxu0 0.0
    %1996 = vmatprep.mubr.f32.mxu0 0.0
    %1997 = vmatmul.mubr.f32.gmra.mxu0 %v1930
    %v1998 = vpop.f32.mrf.mxu0
    %v1999 = vadd.f32 0.0, %v1998
    %v2000 = vpop.f32.mrf.mxu0
    %2001 = vdwg.mxu0
    %v2003 = vrot.slane %v1999, 4
    %v2005 = vadd.f32 %v1298, %v2003
    %v2006 = vxor.u32 %v2005, 2147483648
    %v2007 = vmul.f32 %v2006, 1.442695
    %v2008 = vpow.pop %v2007
    %v2009 = vadd.f32 %v2008, 1.0
    %v2010 = vrcp.pop %v2009
    %v2011 = vmul.f32 1.0, %v2010
    %v2012 = vtanh.pop %v2005
    %v2014 = vrot.slane %v1919, 6
    %v2016 = vmul.f32 %v2011, %v2014
    %2018 = vrot.lane.b32.xlu0 %v2012, 64
    %v2019 = vpop.permute.xlu0 %2018
    %v2021 = vmul.f32 %v2011, %v2019
    %2023 = vrot.lane.b32.xlu0 %v2021, 32
    %v2024 = vpop.permute.xlu0 %2023
    %v2026 = vadd.f32 %v2016, %v2024
    %v2027 = vtanh.pop %v2026
    %2029 = vrot.lane.b32.xlu0 %v2027, 64
    %v2030 = vpop.permute.xlu0 %2029
    %v2032 = vmul.f32 %v2011, %v2030
    %v2034 = vrot.slane %v2032, 4
    %2035 = vrot.lane.b32.xlu0 %v2034, 32
    %v2036 = vpop.permute.xlu0 %2035
    %v2037 = vsel %vm359, %v2036, 0
    %2039 = vmatprep.subr.mxu0 0.0
    %2040 = vmatpush1.msra.mxu0 0.0
    %2041 = vmatprep.subr.mxu0 0.0
    %2042 = vmatpush1.msra.mxu0 0.0
    %2043 = vmatprep.subr.mxu0 0.0
    %2044 = vmatpush1.msra.mxu0 0.0
    %2045 = vmatprep.subr.mxu0 0.0
    %2046 = vmatpush1.msra.mxu0 0.0
    %2047 = vmatprep.subr.mxu0 0.0
    %2048 = vmatpush1.msra.mxu0 0.0
    %2049 = vmatprep.subr.mxu0 0.0
    %2050 = vmatpush1.msra.mxu0 0.0
    %2051 = vmatprep.subr.mxu0 0.0
    %2052 = vmatpush1.msra.mxu0 0.0
    %2053 = vmatprep.subr.mxu0 0.0
    %2054 = vmatpush1.msra.mxu0 0.0
    %2055 = vmatprep.subr.mxu0 0.0
    %2056 = vmatpush1.msra.mxu0 0.0
    %2057 = vmatprep.subr.mxu0 0.0
    %2058 = vmatpush1.msra.mxu0 0.0
    %2059 = vmatprep.subr.mxu0 0.0
    %2060 = vmatpush1.msra.mxu0 0.0
    %2061 = vmatprep.subr.mxu0 0.0
    %2062 = vmatpush1.msra.mxu0 0.0
    %2063 = vmatprep.subr.mxu0 0.0
    %2064 = vmatpush1.msra.mxu0 %v248
    %2065 = vmatprep.subr.mxu0 0.0
    %2066 = vmatpush1.msra.mxu0 %v247
    %2067 = vmatprep.subr.mxu0 0.0
    %2068 = vmatpush1.msra.mxu0 %v246
    %2069 = vmatprep.subr.mxu0 0.0
    %2070 = vmatpush1.msra.mxu0 %v245
    %2071 = vmatprep.subr.mxu0 0.0
    %2072 = vmatpush2.msra.mxu0 0.0
    %2073 = vmatprep.subr.mxu0 0.0
    %2074 = vmatpush2.msra.mxu0 0.0
    %2075 = vmatprep.subr.mxu0 0.0
    %2076 = vmatpush2.msra.mxu0 0.0
    %2077 = vmatprep.subr.mxu0 0.0
    %2078 = vmatpush2.msra.mxu0 0.0
    %2079 = vmatprep.subr.mxu0 0.0
    %2080 = vmatpush2.msra.mxu0 0.0
    %2081 = vmatprep.subr.mxu0 0.0
    %2082 = vmatpush2.msra.mxu0 0.0
    %2083 = vmatprep.subr.mxu0 0.0
    %2084 = vmatpush2.msra.mxu0 0.0
    %2085 = vmatprep.subr.mxu0 0.0
    %2086 = vmatpush2.msra.mxu0 0.0
    %2087 = vmatprep.subr.mxu0 0.0
    %2088 = vmatpush2.msra.mxu0 0.0
    %2089 = vmatprep.subr.mxu0 0.0
    %2090 = vmatpush2.msra.mxu0 0.0
    %2091 = vmatprep.subr.mxu0 0.0
    %2092 = vmatpush2.msra.mxu0 0.0
    %2093 = vmatprep.subr.mxu0 0.0
    %2094 = vmatpush2.msra.mxu0 0.0
    %2095 = vmatprep.subr.mxu0 0.0
    %2096 = vmatpush2.msra.mxu0 0.0
    %2097 = vmatprep.subr.mxu0 0.0
    %2098 = vmatpush2.msra.mxu0 0.0
    %2099 = vmatprep.subr.mxu0 0.0
    %2100 = vmatpush2.msra.mxu0 0.0
    %2101 = vmatprep.subr.mxu0 0.0
    %2102 = vmatpush2.msra.mxu0 0.0
    %2103 = vmatprep.mubr.f32.mxu0 0.0
    %2104 = vmatmul.mubr.f32.gmra.mxu0 %v2037
    %v2105 = vpop.f32.mrf.mxu0
    %v2106 = vadd.f32 0.0, %v2105
    %v2107 = vpop.f32.mrf.mxu0
    %2108 = vdwg.mxu0
    %v2110 = vrot.slane %v2106, 2
    %v2112 = vadd.f32 %v1298, %v2110
    %v2113 = vxor.u32 %v2112, 2147483648
    %v2114 = vmul.f32 %v2113, 1.442695
    %v2115 = vpow.pop %v2114
    %v2116 = vadd.f32 %v2115, 1.0
    %v2117 = vrcp.pop %v2116
    %v2118 = vmul.f32 1.0, %v2117
    %v2119 = vtanh.pop %v2112
    %v2121 = vrot.slane %v2026, 6
    %v2123 = vmul.f32 %v2118, %v2121
    %2125 = vrot.lane.b32.xlu0 %v2119, 64
    %v2126 = vpop.permute.xlu0 %2125
    %v2128 = vmul.f32 %v2118, %v2126
    %2130 = vrot.lane.b32.xlu0 %v2128, 32
    %v2131 = vpop.permute.xlu0 %2130
    %v2133 = vadd.f32 %v2123, %v2131
    %v2134 = vtanh.pop %v2133
    %2136 = vrot.lane.b32.xlu0 %v2134, 64
    %v2137 = vpop.permute.xlu0 %2136
    %v2139 = vmul.f32 %v2118, %v2137
    %2141 = vrot.lane.b32.xlu0 %v1201, 36
    %v2142 = vpop.permute.xlu0 %2141
    %v2144 = vsel %vm273, %v266, %v2142
    %v2146 = vlaneseq
    %v2147 = vshrl.u32 %v2146, 7
    %v2148 = vsub.s32 0, %v2147
    %v2149 = vrot.slane %v255, %v2148
    %v2152 = vrot.slane %v2144, 6
    %vm2153 = vcmask 293888
    %v2154 = vsel %vm2153, %v2152, 0
    %v2157 = vsel %vm280, %v254, 0
    %2159 = vmatprep.subr.mxu0 0.0
    %2160 = vmatpush1.msra.mxu0 0.0
    %2161 = vmatprep.subr.mxu0 0.0
    %2162 = vmatpush1.msra.mxu0 0.0
    %2163 = vmatprep.subr.mxu0 0.0
    %2164 = vmatpush1.msra.mxu0 0.0
    %2165 = vmatprep.subr.mxu0 0.0
    %2166 = vmatpush1.msra.mxu0 0.0
    %2167 = vmatprep.subr.mxu0 0.0
    %2168 = vmatpush1.msra.mxu0 0.0
    %2169 = vmatprep.subr.mxu0 0.0
    %2170 = vmatpush1.msra.mxu0 0.0
    %2171 = vmatprep.subr.mxu0 0.0
    %2172 = vmatpush1.msra.mxu0 0.0
    %2173 = vmatprep.subr.mxu0 0.0
    %2174 = vmatpush1.msra.mxu0 0.0
    %2175 = vmatprep.subr.mxu0 0.0
    %2176 = vmatpush1.msra.mxu0 0.0
    %2177 = vmatprep.subr.mxu0 0.0
    %2178 = vmatpush1.msra.mxu0 0.0
    %2179 = vmatprep.subr.mxu0 0.0
    %2180 = vmatpush1.msra.mxu0 0.0
    %2181 = vmatprep.subr.mxu0 0.0
    %2182 = vmatpush1.msra.mxu0 %v2157
    %2183 = vmatprep.subr.mxu0 0.0
    %2184 = vmatpush1.msra.mxu0 %v253
    %2185 = vmatprep.subr.mxu0 0.0
    %2186 = vmatpush1.msra.mxu0 %v252
    %2187 = vmatprep.subr.mxu0 0.0
    %2188 = vmatpush1.msra.mxu0 %v251
    %2189 = vmatprep.subr.mxu0 0.0
    %2190 = vmatpush1.msra.mxu0 %v250
    %2191 = vmatprep.subr.mxu0 0.0
    %2192 = vmatpush2.msra.mxu0 0.0
    %2193 = vmatprep.subr.mxu0 0.0
    %2194 = vmatpush2.msra.mxu0 0.0
    %2195 = vmatprep.subr.mxu0 0.0
    %2196 = vmatpush2.msra.mxu0 0.0
    %2197 = vmatprep.subr.mxu0 0.0
    %2198 = vmatpush2.msra.mxu0 0.0
    %2199 = vmatprep.subr.mxu0 0.0
    %2200 = vmatpush2.msra.mxu0 0.0
    %2201 = vmatprep.subr.mxu0 0.0
    %2202 = vmatpush2.msra.mxu0 0.0
    %2203 = vmatprep.subr.mxu0 0.0
    %2204 = vmatpush2.msra.mxu0 0.0
    %2205 = vmatprep.subr.mxu0 0.0
    %2206 = vmatpush2.msra.mxu0 0.0
    %2207 = vmatprep.subr.mxu0 0.0
    %2208 = vmatpush2.msra.mxu0 0.0
    %2209 = vmatprep.subr.mxu0 0.0
    %2210 = vmatpush2.msra.mxu0 0.0
    %2211 = vmatprep.subr.mxu0 0.0
    %2212 = vmatpush2.msra.mxu0 0.0
    %2213 = vmatprep.subr.mxu0 0.0
    %2214 = vmatpush2.msra.mxu0 0.0
    %2215 = vmatprep.subr.mxu0 0.0
    %2216 = vmatpush2.msra.mxu0 0.0
    %2217 = vmatprep.subr.mxu0 0.0
    %2218 = vmatpush2.msra.mxu0 0.0
    %2219 = vmatprep.subr.mxu0 0.0
    %2220 = vmatpush2.msra.mxu0 0.0
    %2221 = vmatprep.subr.mxu0 0.0
    %2222 = vmatpush2.msra.mxu0 0.0
    %2223 = vmatprep.mubr.f32.mxu0 0.0
    %2224 = vmatmul.mubr.f32.gmra.mxu0 %v2154
    %v2225 = vpop.f32.mrf.mxu0
    %v2226 = vadd.f32 %v2149, %v2225
    %v2227 = vpop.f32.mrf.mxu0
    %2228 = vdwg.mxu0
    %v2229 = vxor.u32 %v2226, 2147483648
    %v2230 = vmul.f32 %v2229, 1.442695
    %v2231 = vpow.pop %v2230
    %v2232 = vadd.f32 %v2231, 1.0
    %v2233 = vrcp.pop %v2232
    %v2234 = vmul.f32 1.0, %v2233
    %v2235 = vtanh.pop %v2226
    %v2237 = vrot.slane %v1195, 6
    %v2239 = vmul.f32 %v2234, %v2237
    %2241 = vrot.lane.b32.xlu0 %v2235, 64
    %v2242 = vpop.permute.xlu0 %2241
    %v2244 = vmul.f32 %v2234, %v2242
    %2246 = vrot.lane.b32.xlu0 %v2244, 32
    %v2247 = vpop.permute.xlu0 %2246
    %v2249 = vadd.f32 %v2239, %v2247
    %v2250 = vtanh.pop %v2249
    %2252 = vrot.lane.b32.xlu0 %v2250, 64
    %v2253 = vpop.permute.xlu0 %2252
    %v2255 = vmul.f32 %v2234, %v2253
    %2257 = vrot.lane.b32.xlu0 %v2255, 32
    %v2258 = vpop.permute.xlu0 %2257
    %v2261 = vrot.slane %v2139, 6
    %2262 = vrot.lane.b32.xlu0 %v2261, 64
    %v2263 = vpop.permute.xlu0 %2262
    %v2265 = vsel %vm359, %v2258, %v2263
    %v2267 = vlaneseq
    %v2268 = vshrl.u32 %v2267, 7
    %v2269 = vsub.s32 0, %v2268
    %v2270 = vrot.slane %v264, %v2269
    %vm2272 = vcmask 523264
    %v2274 = vsel %vm2272, %v2265, 0
    %2276 = vmatprep.subr.mxu0 0.0
    %2277 = vmatpush1.msra.mxu0 0.0
    %2278 = vmatprep.subr.mxu0 0.0
    %2279 = vmatpush1.msra.mxu0 0.0
    %2280 = vmatprep.subr.mxu0 0.0
    %2281 = vmatpush1.msra.mxu0 0.0
    %2282 = vmatprep.subr.mxu0 0.0
    %2283 = vmatpush1.msra.mxu0 0.0
    %2284 = vmatprep.subr.mxu0 0.0
    %2285 = vmatpush1.msra.mxu0 0.0
    %2286 = vmatprep.subr.mxu0 0.0
    %2287 = vmatpush1.msra.mxu0 0.0
    %2288 = vmatprep.subr.mxu0 0.0
    %2289 = vmatpush1.msra.mxu0 0.0
    %2290 = vmatprep.subr.mxu0 0.0
    %2291 = vmatpush1.msra.mxu0 0.0
    %2292 = vmatprep.subr.mxu0 0.0
    %2293 = vmatpush1.msra.mxu0 %v263
    %2294 = vmatprep.subr.mxu0 0.0
    %2295 = vmatpush1.msra.mxu0 %v262
    %2296 = vmatprep.subr.mxu0 0.0
    %2297 = vmatpush1.msra.mxu0 %v261
    %2298 = vmatprep.subr.mxu0 0.0
    %2299 = vmatpush1.msra.mxu0 %v260
    %2300 = vmatprep.subr.mxu0 0.0
    %2301 = vmatpush1.msra.mxu0 %v259
    %2302 = vmatprep.subr.mxu0 0.0
    %2303 = vmatpush1.msra.mxu0 %v258
    %2304 = vmatprep.subr.mxu0 0.0
    %2305 = vmatpush1.msra.mxu0 %v257
    %2306 = vmatprep.subr.mxu0 0.0
    %2307 = vmatpush1.msra.mxu0 %v256
    %2308 = vmatprep.subr.mxu0 0.0
    %2309 = vmatpush2.msra.mxu0 0.0
    %2310 = vmatprep.subr.mxu0 0.0
    %2311 = vmatpush2.msra.mxu0 0.0
    %2312 = vmatprep.subr.mxu0 0.0
    %2313 = vmatpush2.msra.mxu0 0.0
    %2314 = vmatprep.subr.mxu0 0.0
    %2315 = vmatpush2.msra.mxu0 0.0
    %2316 = vmatprep.subr.mxu0 0.0
    %2317 = vmatpush2.msra.mxu0 0.0
    %2318 = vmatprep.subr.mxu0 0.0
    %2319 = vmatpush2.msra.mxu0 0.0
    %2320 = vmatprep.subr.mxu0 0.0
    %2321 = vmatpush2.msra.mxu0 0.0
    %2322 = vmatprep.subr.mxu0 0.0
    %2323 = vmatpush2.msra.mxu0 0.0
    %2324 = vmatprep.subr.mxu0 0.0
    %2325 = vmatpush2.msra.mxu0 0.0
    %2326 = vmatprep.subr.mxu0 0.0
    %2327 = vmatpush2.msra.mxu0 0.0
    %2328 = vmatprep.subr.mxu0 0.0
    %2329 = vmatpush2.msra.mxu0 0.0
    %2330 = vmatprep.subr.mxu0 0.0
    %2331 = vmatpush2.msra.mxu0 0.0
    %2332 = vmatprep.subr.mxu0 0.0
    %2333 = vmatpush2.msra.mxu0 0.0
    %2334 = vmatprep.subr.mxu0 0.0
    %2335 = vmatpush2.msra.mxu0 0.0
    %2336 = vmatprep.subr.mxu0 0.0
    %2337 = vmatpush2.msra.mxu0 0.0
    %2338 = vmatprep.subr.mxu0 0.0
    %2339 = vmatpush2.msra.mxu0 0.0
    %2340 = vmatprep.mubr.f32.mxu0 0.0
    %2341 = vmatmul.mubr.f32.gmra.mxu0 %v2274
    %v2342 = vpop.f32.mrf.mxu0
    %v2343 = vadd.f32 %v2270, %v2342
    %v2344 = vpop.f32.mrf.mxu0
    %2345 = vdwg.mxu0
    %v2346 = vxor.u32 %v2343, 2147483648
    %v2347 = vmul.f32 %v2346, 1.442695
    %v2348 = vpow.pop %v2347
    %v2349 = vadd.f32 %v2348, 1.0
    %v2350 = vrcp.pop %v2349
    %v2351 = vmul.f32 1.0, %v2350
    %v2352 = vtanh.pop %v2343
    %v2354 = vrot.slane %v2133, 6
    %v2356 = vmul.f32 %v2351, %v2354
    %2358 = vrot.lane.b32.xlu0 %v2352, 64
    %v2359 = vpop.permute.xlu0 %2358
    %v2361 = vmul.f32 %v2351, %v2359
    %2363 = vrot.lane.b32.xlu0 %v2361, 32
    %v2364 = vpop.permute.xlu0 %2363
    %v2366 = vadd.f32 %v2356, %v2364
    %v2367 = vtanh.pop %v2366
    %2369 = vrot.lane.b32.xlu0 %v2367, 64
    %v2370 = vpop.permute.xlu0 %2369
    %v2372 = vmul.f32 %v2351, %v2370
    %v2374 = vlaneseq
    %v2375 = vshrl.u32 %v2374, 7
    %v2376 = vsub.s32 0, %v2375
    %v2377 = vrot.slane %v205, %v2376
    %2380 = vrot.lane.b32.xlu0 %v2372, 32
    %v2381 = vpop.permute.xlu0 %2380
    %v2382 = vsel %vm359, %v2381, 0
    %2384 = vmatprep.subr.mxu0 0.0
    %2385 = vmatpush1.msra.mxu0 0.0
    %2386 = vmatprep.subr.mxu0 0.0
    %2387 = vmatpush1.msra.mxu0 0.0
    %2388 = vmatprep.subr.mxu0 0.0
    %2389 = vmatpush1.msra.mxu0 0.0
    %2390 = vmatprep.subr.mxu0 0.0
    %2391 = vmatpush1.msra.mxu0 0.0
    %2392 = vmatprep.subr.mxu0 0.0
    %2393 = vmatpush1.msra.mxu0 0.0
    %2394 = vmatprep.subr.mxu0 0.0
    %2395 = vmatpush1.msra.mxu0 0.0
    %2396 = vmatprep.subr.mxu0 0.0
    %2397 = vmatpush1.msra.mxu0 0.0
    %2398 = vmatprep.subr.mxu0 0.0
    %2399 = vmatpush1.msra.mxu0 0.0
    %2400 = vmatprep.subr.mxu0 0.0
    %2401 = vmatpush1.msra.mxu0 0.0
    %2402 = vmatprep.subr.mxu0 0.0
    %2403 = vmatpush1.msra.mxu0 0.0
    %2404 = vmatprep.subr.mxu0 0.0
    %2405 = vmatpush1.msra.mxu0 0.0
    %2406 = vmatprep.subr.mxu0 0.0
    %2407 = vmatpush1.msra.mxu0 0.0
    %2408 = vmatprep.subr.mxu0 0.0
    %2409 = vmatpush1.msra.mxu0 %v204
    %2410 = vmatprep.subr.mxu0 0.0
    %2411 = vmatpush1.msra.mxu0 %v203
    %2412 = vmatprep.subr.mxu0 0.0
    %2413 = vmatpush1.msra.mxu0 %v202
    %2414 = vmatprep.subr.mxu0 0.0
    %2415 = vmatpush1.msra.mxu0 %v201
    %2416 = vmatprep.subr.mxu0 0.0
    %2417 = vmatpush2.msra.mxu0 0.0
    %2418 = vmatprep.subr.mxu0 0.0
    %2419 = vmatpush2.msra.mxu0 0.0
    %2420 = vmatprep.subr.mxu0 0.0
    %2421 = vmatpush2.msra.mxu0 0.0
    %2422 = vmatprep.subr.mxu0 0.0
    %2423 = vmatpush2.msra.mxu0 0.0
    %2424 = vmatprep.subr.mxu0 0.0
    %2425 = vmatpush2.msra.mxu0 0.0
    %2426 = vmatprep.subr.mxu0 0.0
    %2427 = vmatpush2.msra.mxu0 0.0
    %2428 = vmatprep.subr.mxu0 0.0
    %2429 = vmatpush2.msra.mxu0 0.0
    %2430 = vmatprep.subr.mxu0 0.0
    %2431 = vmatpush2.msra.mxu0 0.0
    %2432 = vmatprep.subr.mxu0 0.0
    %2433 = vmatpush2.msra.mxu0 0.0
    %2434 = vmatprep.subr.mxu0 0.0
    %2435 = vmatpush2.msra.mxu0 0.0
    %2436 = vmatprep.subr.mxu0 0.0
    %2437 = vmatpush2.msra.mxu0 0.0
    %2438 = vmatprep.subr.mxu0 0.0
    %2439 = vmatpush2.msra.mxu0 0.0
    %2440 = vmatprep.subr.mxu0 0.0
    %2441 = vmatpush2.msra.mxu0 0.0
    %2442 = vmatprep.subr.mxu0 0.0
    %2443 = vmatpush2.msra.mxu0 0.0
    %2444 = vmatprep.subr.mxu0 0.0
    %2445 = vmatpush2.msra.mxu0 0.0
    %2446 = vmatprep.subr.mxu0 0.0
    %2447 = vmatpush2.msra.mxu0 0.0
    %2448 = vmatprep.mubr.f32.mxu0 0.0
    %2449 = vmatmul.mubr.f32.gmra.mxu0 %v2382
    %v2450 = vpop.f32.mrf.mxu0
    %v2451 = vadd.f32 %v2377, %v2450
    %v2452 = vpop.f32.mrf.mxu0
    %2453 = vdwg.mxu0
    %vm2454 = vcmp.gt.f32.partialorder %v2451, 0.0
    %v2455 = vmul.f32 %v2451, 0.01
    %v2456 = vsel %vm2454, %v2451, %v2455
    %v2458 = vlaneseq
    %v2459 = vshrl.u32 %v2458, 7
    %v2460 = vsub.s32 0, %v2459
    %v2461 = vrot.slane %v210, %v2460
    %v2464 = vsel %vm359, %v2456, 0
    %2466 = vmatprep.subr.mxu0 0.0
    %2467 = vmatpush1.msra.mxu0 0.0
    %2468 = vmatprep.subr.mxu0 0.0
    %2469 = vmatpush1.msra.mxu0 0.0
    %2470 = vmatprep.subr.mxu0 0.0
    %2471 = vmatpush1.msra.mxu0 0.0
    %2472 = vmatprep.subr.mxu0 0.0
    %2473 = vmatpush1.msra.mxu0 0.0
    %2474 = vmatprep.subr.mxu0 0.0
    %2475 = vmatpush1.msra.mxu0 0.0
    %2476 = vmatprep.subr.mxu0 0.0
    %2477 = vmatpush1.msra.mxu0 0.0
    %2478 = vmatprep.subr.mxu0 0.0
    %2479 = vmatpush1.msra.mxu0 0.0
    %2480 = vmatprep.subr.mxu0 0.0
    %2481 = vmatpush1.msra.mxu0 0.0
    %2482 = vmatprep.subr.mxu0 0.0
    %2483 = vmatpush1.msra.mxu0 0.0
    %2484 = vmatprep.subr.mxu0 0.0
    %2485 = vmatpush1.msra.mxu0 0.0
    %2486 = vmatprep.subr.mxu0 0.0
    %2487 = vmatpush1.msra.mxu0 0.0
    %2488 = vmatprep.subr.mxu0 0.0
    %2489 = vmatpush1.msra.mxu0 0.0
    %2490 = vmatprep.subr.mxu0 0.0
    %2491 = vmatpush1.msra.mxu0 %v209
    %2492 = vmatprep.subr.mxu0 0.0
    %2493 = vmatpush1.msra.mxu0 %v208
    %2494 = vmatprep.subr.mxu0 0.0
    %2495 = vmatpush1.msra.mxu0 %v207
    %2496 = vmatprep.subr.mxu0 0.0
    %2497 = vmatpush1.msra.mxu0 %v206
    %2498 = vmatprep.subr.mxu0 0.0
    %2499 = vmatpush2.msra.mxu0 0.0
    %2500 = vmatprep.subr.mxu0 0.0
    %2501 = vmatpush2.msra.mxu0 0.0
    %2502 = vmatprep.subr.mxu0 0.0
    %2503 = vmatpush2.msra.mxu0 0.0
    %2504 = vmatprep.subr.mxu0 0.0
    %2505 = vmatpush2.msra.mxu0 0.0
    %2506 = vmatprep.subr.mxu0 0.0
    %2507 = vmatpush2.msra.mxu0 0.0
    %2508 = vmatprep.subr.mxu0 0.0
    %2509 = vmatpush2.msra.mxu0 0.0
    %2510 = vmatprep.subr.mxu0 0.0
    %2511 = vmatpush2.msra.mxu0 0.0
    %2512 = vmatprep.subr.mxu0 0.0
    %2513 = vmatpush2.msra.mxu0 0.0
    %2514 = vmatprep.subr.mxu0 0.0
    %2515 = vmatpush2.msra.mxu0 0.0
    %2516 = vmatprep.subr.mxu0 0.0
    %2517 = vmatpush2.msra.mxu0 0.0
    %2518 = vmatprep.subr.mxu0 0.0
    %2519 = vmatpush2.msra.mxu0 0.0
    %2520 = vmatprep.subr.mxu0 0.0
    %2521 = vmatpush2.msra.mxu0 0.0
    %2522 = vmatprep.subr.mxu0 0.0
    %2523 = vmatpush2.msra.mxu0 0.0
    %2524 = vmatprep.subr.mxu0 0.0
    %2525 = vmatpush2.msra.mxu0 0.0
    %2526 = vmatprep.subr.mxu0 0.0
    %2527 = vmatpush2.msra.mxu0 0.0
    %2528 = vmatprep.subr.mxu0 0.0
    %2529 = vmatpush2.msra.mxu0 0.0
    %2530 = vmatprep.mubr.f32.mxu0 0.0
    %2531 = vmatmul.mubr.f32.gmra.mxu0 %v2464
    %v2532 = vpop.f32.mrf.mxu0
    %v2533 = vadd.f32 %v2461, %v2532
    %v2534 = vpop.f32.mrf.mxu0
    %2535 = vdwg.mxu0
    %2537 = vrot.lane.b32.xlu0 %v2533, 96
    %v2538 = vpop.permute.xlu0 %2537
    %v2539 = vsel %vm359, %v2533, 0
    %v2541 = vsel %vm359, %v2538, 0
    %2543 = vmatprep.subr.mxu0 0.0
    %2544 = vmatpush1.xpose.msra.mxu0 0.0
    %2545 = vmatprep.subr.mxu0 0.0
    %2546 = vmatpush1.xpose.msra.mxu0 0.0
    %2547 = vmatprep.subr.mxu0 0.0
    %2548 = vmatpush1.xpose.msra.mxu0 0.0
    %2549 = vmatprep.subr.mxu0 0.0
    %2550 = vmatpush1.xpose.msra.mxu0 0.0
    %2551 = vmatprep.subr.mxu0 0.0
    %2552 = vmatpush1.xpose.msra.mxu0 0.0
    %2553 = vmatprep.subr.mxu0 0.0
    %2554 = vmatpush1.xpose.msra.mxu0 0.0
    %2555 = vmatprep.subr.mxu0 0.0
    %2556 = vmatpush1.xpose.msra.mxu0 0.0
    %2557 = vmatprep.subr.mxu0 0.0
    %2558 = vmatpush1.xpose.msra.mxu0 0.0
    %2559 = vmatprep.subr.mxu0 0.0
    %2560 = vmatpush1.xpose.msra.mxu0 0.0
    %2561 = vmatprep.subr.mxu0 0.0
    %2562 = vmatpush1.xpose.msra.mxu0 0.0
    %2563 = vmatprep.subr.mxu0 0.0
    %2564 = vmatpush1.xpose.msra.mxu0 0.0
    %2565 = vmatprep.subr.mxu0 0.0
    %2566 = vmatpush1.xpose.msra.mxu0 0.0
    %2567 = vmatprep.subr.mxu0 0.0
    %2568 = vmatpush1.xpose.msra.mxu0 0.0
    %2569 = vmatprep.subr.mxu0 0.0
    %2570 = vmatpush1.xpose.msra.mxu0 0.0
    %2571 = vmatprep.subr.mxu0 0.0
    %2572 = vmatpush1.xpose.msra.mxu0 0.0
    %2573 = vmatprep.subr.mxu0 0.0
    %2574 = vmatpush1.xpose.msra.mxu0 %v2541
    %2575 = vmatprep.subr.mxu0 0.0
    %2576 = vmatpush2.xpose.msra.mxu0 0.0
    %2577 = vmatprep.subr.mxu0 0.0
    %2578 = vmatpush2.xpose.msra.mxu0 0.0
    %2579 = vmatprep.subr.mxu0 0.0
    %2580 = vmatpush2.xpose.msra.mxu0 0.0
    %2581 = vmatprep.subr.mxu0 0.0
    %2582 = vmatpush2.xpose.msra.mxu0 0.0
    %2583 = vmatprep.subr.mxu0 0.0
    %2584 = vmatpush2.xpose.msra.mxu0 0.0
    %2585 = vmatprep.subr.mxu0 0.0
    %2586 = vmatpush2.xpose.msra.mxu0 0.0
    %2587 = vmatprep.subr.mxu0 0.0
    %2588 = vmatpush2.xpose.msra.mxu0 0.0
    %2589 = vmatprep.subr.mxu0 0.0
    %2590 = vmatpush2.xpose.msra.mxu0 0.0
    %2591 = vmatprep.subr.mxu0 0.0
    %2592 = vmatpush2.xpose.msra.mxu0 0.0
    %2593 = vmatprep.subr.mxu0 0.0
    %2594 = vmatpush2.xpose.msra.mxu0 0.0
    %2595 = vmatprep.subr.mxu0 0.0
    %2596 = vmatpush2.xpose.msra.mxu0 0.0
    %2597 = vmatprep.subr.mxu0 0.0
    %2598 = vmatpush2.xpose.msra.mxu0 0.0
    %2599 = vmatprep.subr.mxu0 0.0
    %2600 = vmatpush2.xpose.msra.mxu0 0.0
    %2601 = vmatprep.subr.mxu0 0.0
    %2602 = vmatpush2.xpose.msra.mxu0 0.0
    %2603 = vmatprep.subr.mxu0 0.0
    %2604 = vmatpush2.xpose.msra.mxu0 0.0
    %2605 = vmatprep.subr.mxu0 0.0
    %2606 = vmatpush2.xpose.msra.mxu0 0.0
    %2607 = vmatprep.mubr.f32.mxu0 0.0
    %2608 = vmatmul.mubr.f32.gmra.mxu0 %v2539
    %v2609 = vpop.f32.mrf.mxu0
    %v2610 = vadd.f32 0.0, %v2609
    %v2611 = vpop.f32.mrf.mxu0
    %2612 = vdwg.mxu0
    %vm2613 = vcmask 9216
    %v2614 = vsel %vm2613, %v2610, -inf
    %2615 = vmax.xlane.f32.xlu0 %v2614
    %v2616 = vpop.xlane.xlu0 %2615
    %v2617 = vsub.f32 %v2610, %v2616
    %v2618 = vmul.f32 %v2617, 1.442695
    %v2619 = vpow.pop %v2618
    %v2620 = vsel %vm2613, %v2619, 0.0
    %2621 = vadd.xlane.f32.xlu0 %v2620
    %v2622 = vpop.xlane.xlu0 %2621
    %v2623 = vrcp.pop %v2622
    %v2624 = vmul.f32 %v2619, %v2623
    %2625 = vrot.lane.b32.xlu0 %v2533, 64
    %v2626 = vpop.permute.xlu0 %2625
    %vm2627 = vcmask 15360
    %v2629 = vsel %vm2627, %v2624, 0
    %v2631 = vsel %vm1202, %v2626, 0
    %2633 = vmatprep.subr.mxu0 0.0
    %2634 = vmatpush1.msra.mxu0 0.0
    %2635 = vmatprep.subr.mxu0 0.0
    %2636 = vmatpush1.msra.mxu0 0.0
    %2637 = vmatprep.subr.mxu0 0.0
    %2638 = vmatpush1.msra.mxu0 0.0
    %2639 = vmatprep.subr.mxu0 0.0
    %2640 = vmatpush1.msra.mxu0 0.0
    %2641 = vmatprep.subr.mxu0 0.0
    %2642 = vmatpush1.msra.mxu0 0.0
    %2643 = vmatprep.subr.mxu0 0.0
    %2644 = vmatpush1.msra.mxu0 0.0
    %2645 = vmatprep.subr.mxu0 0.0
    %2646 = vmatpush1.msra.mxu0 0.0
    %2647 = vmatprep.subr.mxu0 0.0
    %2648 = vmatpush1.msra.mxu0 0.0
    %2649 = vmatprep.subr.mxu0 0.0
    %2650 = vmatpush1.msra.mxu0 0.0
    %2651 = vmatprep.subr.mxu0 0.0
    %2652 = vmatpush1.msra.mxu0 0.0
    %2653 = vmatprep.subr.mxu0 0.0
    %2654 = vmatpush1.msra.mxu0 0.0
    %2655 = vmatprep.subr.mxu0 0.0
    %2656 = vmatpush1.msra.mxu0 0.0
    %2657 = vmatprep.subr.mxu0 0.0
    %2658 = vmatpush1.msra.mxu0 0.0
    %2659 = vmatprep.subr.mxu0 0.0
    %2660 = vmatpush1.msra.mxu0 0.0
    %2661 = vmatprep.subr.mxu0 0.0
    %2662 = vmatpush1.msra.mxu0 0.0
    %2663 = vmatprep.subr.mxu0 0.0
    %2664 = vmatpush1.msra.mxu0 %v2631
    %2665 = vmatprep.subr.mxu0 0.0
    %2666 = vmatpush2.msra.mxu0 0.0
    %2667 = vmatprep.subr.mxu0 0.0
    %2668 = vmatpush2.msra.mxu0 0.0
    %2669 = vmatprep.subr.mxu0 0.0
    %2670 = vmatpush2.msra.mxu0 0.0
    %2671 = vmatprep.subr.mxu0 0.0
    %2672 = vmatpush2.msra.mxu0 0.0
    %2673 = vmatprep.subr.mxu0 0.0
    %2674 = vmatpush2.msra.mxu0 0.0
    %2675 = vmatprep.subr.mxu0 0.0
    %2676 = vmatpush2.msra.mxu0 0.0
    %2677 = vmatprep.subr.mxu0 0.0
    %2678 = vmatpush2.msra.mxu0 0.0
    %2679 = vmatprep.subr.mxu0 0.0
    %2680 = vmatpush2.msra.mxu0 0.0
    %2681 = vmatprep.subr.mxu0 0.0
    %2682 = vmatpush2.msra.mxu0 0.0
    %2683 = vmatprep.subr.mxu0 0.0
    %2684 = vmatpush2.msra.mxu0 0.0
    %2685 = vmatprep.subr.mxu0 0.0
    %2686 = vmatpush2.msra.mxu0 0.0
    %2687 = vmatprep.subr.mxu0 0.0
    %2688 = vmatpush2.msra.mxu0 0.0
    %2689 = vmatprep.subr.mxu0 0.0
    %2690 = vmatpush2.msra.mxu0 0.0
    %2691 = vmatprep.subr.mxu0 0.0
    %2692 = vmatpush2.msra.mxu0 0.0
    %2693 = vmatprep.subr.mxu0 0.0
    %2694 = vmatpush2.msra.mxu0 0.0
    %2695 = vmatprep.subr.mxu0 0.0
    %2696 = vmatpush2.msra.mxu0 0.0
    %2697 = vmatprep.mubr.f32.mxu0 0.0
    %2698 = vmatmul.mubr.f32.gmra.mxu0 %v2629
    %v2699 = vpop.f32.mrf.mxu0
    %v2700 = vadd.f32 0.0, %v2699
    %v2701 = vpop.f32.mrf.mxu0
    %2702 = vdwg.mxu0
    %v2704 = vlaneseq
    %v2705 = vshrl.u32 %v2704, 7
    %v2706 = vsub.s32 0, %v2705
    %v2707 = vrot.slane %v215, %v2706
    %v2710 = vsel %vm359, %v2700, 0
    %2712 = vmatprep.subr.mxu0 0.0
    %2713 = vmatpush1.msra.mxu0 0.0
    %2714 = vmatprep.subr.mxu0 0.0
    %2715 = vmatpush1.msra.mxu0 0.0
    %2716 = vmatprep.subr.mxu0 0.0
    %2717 = vmatpush1.msra.mxu0 0.0
    %2718 = vmatprep.subr.mxu0 0.0
    %2719 = vmatpush1.msra.mxu0 0.0
    %2720 = vmatprep.subr.mxu0 0.0
    %2721 = vmatpush1.msra.mxu0 0.0
    %2722 = vmatprep.subr.mxu0 0.0
    %2723 = vmatpush1.msra.mxu0 0.0
    %2724 = vmatprep.subr.mxu0 0.0
    %2725 = vmatpush1.msra.mxu0 0.0
    %2726 = vmatprep.subr.mxu0 0.0
    %2727 = vmatpush1.msra.mxu0 0.0
    %2728 = vmatprep.subr.mxu0 0.0
    %2729 = vmatpush1.msra.mxu0 0.0
    %2730 = vmatprep.subr.mxu0 0.0
    %2731 = vmatpush1.msra.mxu0 0.0
    %2732 = vmatprep.subr.mxu0 0.0
    %2733 = vmatpush1.msra.mxu0 0.0
    %2734 = vmatprep.subr.mxu0 0.0
    %2735 = vmatpush1.msra.mxu0 0.0
    %2736 = vmatprep.subr.mxu0 0.0
    %2737 = vmatpush1.msra.mxu0 %v214
    %2738 = vmatprep.subr.mxu0 0.0
    %2739 = vmatpush1.msra.mxu0 %v213
    %2740 = vmatprep.subr.mxu0 0.0
    %2741 = vmatpush1.msra.mxu0 %v212
    %2742 = vmatprep.subr.mxu0 0.0
    %2743 = vmatpush1.msra.mxu0 %v211
    %2744 = vmatprep.subr.mxu0 0.0
    %2745 = vmatpush2.msra.mxu0 0.0
    %2746 = vmatprep.subr.mxu0 0.0
    %2747 = vmatpush2.msra.mxu0 0.0
    %2748 = vmatprep.subr.mxu0 0.0
    %2749 = vmatpush2.msra.mxu0 0.0
    %2750 = vmatprep.subr.mxu0 0.0
    %2751 = vmatpush2.msra.mxu0 0.0
    %2752 = vmatprep.subr.mxu0 0.0
    %2753 = vmatpush2.msra.mxu0 0.0
    %2754 = vmatprep.subr.mxu0 0.0
    %2755 = vmatpush2.msra.mxu0 0.0
    %2756 = vmatprep.subr.mxu0 0.0
    %2757 = vmatpush2.msra.mxu0 0.0
    %2758 = vmatprep.subr.mxu0 0.0
    %2759 = vmatpush2.msra.mxu0 0.0
    %2760 = vmatprep.subr.mxu0 0.0
    %2761 = vmatpush2.msra.mxu0 0.0
    %2762 = vmatprep.subr.mxu0 0.0
    %2763 = vmatpush2.msra.mxu0 0.0
    %2764 = vmatprep.subr.mxu0 0.0
    %2765 = vmatpush2.msra.mxu0 0.0
    %2766 = vmatprep.subr.mxu0 0.0
    %2767 = vmatpush2.msra.mxu0 0.0
    %2768 = vmatprep.subr.mxu0 0.0
    %2769 = vmatpush2.msra.mxu0 0.0
    %2770 = vmatprep.subr.mxu0 0.0
    %2771 = vmatpush2.msra.mxu0 0.0
    %2772 = vmatprep.subr.mxu0 0.0
    %2773 = vmatpush2.msra.mxu0 0.0
    %2774 = vmatprep.subr.mxu0 0.0
    %2775 = vmatpush2.msra.mxu0 0.0
    %2776 = vmatprep.mubr.f32.mxu0 0.0
    %2777 = vmatmul.mubr.f32.gmra.mxu0 %v2710
    %v2778 = vpop.f32.mrf.mxu0
    %v2779 = vadd.f32 %v2707, %v2778
    %v2780 = vpop.f32.mrf.mxu0
    %2781 = vdwg.mxu0
    %v2783 = vlaneseq
    %v2784 = vshrl.u32 %v2783, 7
    %v2785 = vsub.s32 0, %v2784
    %v2786 = vrot.slane %v220, %v2785
    %v2789 = vsel %vm359, %v2779, 0
    %2791 = vmatprep.subr.mxu0 0.0
    %2792 = vmatpush1.msra.mxu0 0.0
    %2793 = vmatprep.subr.mxu0 0.0
    %2794 = vmatpush1.msra.mxu0 0.0
    %2795 = vmatprep.subr.mxu0 0.0
    %2796 = vmatpush1.msra.mxu0 0.0
    %2797 = vmatprep.subr.mxu0 0.0
    %2798 = vmatpush1.msra.mxu0 0.0
    %2799 = vmatprep.subr.mxu0 0.0
    %2800 = vmatpush1.msra.mxu0 0.0
    %2801 = vmatprep.subr.mxu0 0.0
    %2802 = vmatpush1.msra.mxu0 0.0
    %2803 = vmatprep.subr.mxu0 0.0
    %2804 = vmatpush1.msra.mxu0 0.0
    %2805 = vmatprep.subr.mxu0 0.0
    %2806 = vmatpush1.msra.mxu0 0.0
    %2807 = vmatprep.subr.mxu0 0.0
    %2808 = vmatpush1.msra.mxu0 0.0
    %2809 = vmatprep.subr.mxu0 0.0
    %2810 = vmatpush1.msra.mxu0 0.0
    %2811 = vmatprep.subr.mxu0 0.0
    %2812 = vmatpush1.msra.mxu0 0.0
    %2813 = vmatprep.subr.mxu0 0.0
    %2814 = vmatpush1.msra.mxu0 0.0
    %2815 = vmatprep.subr.mxu0 0.0
    %2816 = vmatpush1.msra.mxu0 %v219
    %2817 = vmatprep.subr.mxu0 0.0
    %2818 = vmatpush1.msra.mxu0 %v218
    %2819 = vmatprep.subr.mxu0 0.0
    %2820 = vmatpush1.msra.mxu0 %v217
    %2821 = vmatprep.subr.mxu0 0.0
    %2822 = vmatpush1.msra.mxu0 %v216
    %2823 = vmatprep.subr.mxu0 0.0
    %2824 = vmatpush2.msra.mxu0 0.0
    %2825 = vmatprep.subr.mxu0 0.0
    %2826 = vmatpush2.msra.mxu0 0.0
    %2827 = vmatprep.subr.mxu0 0.0
    %2828 = vmatpush2.msra.mxu0 0.0
    %2829 = vmatprep.subr.mxu0 0.0
    %2830 = vmatpush2.msra.mxu0 0.0
    %2831 = vmatprep.subr.mxu0 0.0
    %2832 = vmatpush2.msra.mxu0 0.0
    %2833 = vmatprep.subr.mxu0 0.0
    %2834 = vmatpush2.msra.mxu0 0.0
    %2835 = vmatprep.subr.mxu0 0.0
    %2836 = vmatpush2.msra.mxu0 0.0
    %2837 = vmatprep.subr.mxu0 0.0
    %2838 = vmatpush2.msra.mxu0 0.0
    %2839 = vmatprep.subr.mxu0 0.0
    %2840 = vmatpush2.msra.mxu0 0.0
    %2841 = vmatprep.subr.mxu0 0.0
    %2842 = vmatpush2.msra.mxu0 0.0
    %2843 = vmatprep.subr.mxu0 0.0
    %2844 = vmatpush2.msra.mxu0 0.0
    %2845 = vmatprep.subr.mxu0 0.0
    %2846 = vmatpush2.msra.mxu0 0.0
    %2847 = vmatprep.subr.mxu0 0.0
    %2848 = vmatpush2.msra.mxu0 0.0
    %2849 = vmatprep.subr.mxu0 0.0
    %2850 = vmatpush2.msra.mxu0 0.0
    %2851 = vmatprep.subr.mxu0 0.0
    %2852 = vmatpush2.msra.mxu0 0.0
    %2853 = vmatprep.subr.mxu0 0.0
    %2854 = vmatpush2.msra.mxu0 0.0
    %2855 = vmatprep.mubr.f32.mxu0 0.0
    %2856 = vmatmul.mubr.f32.gmra.mxu0 %v2789
    %v2857 = vpop.f32.mrf.mxu0
    %v2858 = vadd.f32 %v2786, %v2857
    %v2859 = vpop.f32.mrf.mxu0
    %2860 = vdwg.mxu0
    %v2861 = vmax.f32 %v2858, 0.0
    %v2863 = vlaneseq
    %v2864 = vshrl.u32 %v2863, 7
    %v2865 = vsub.s32 0, %v2864
    %v2866 = vrot.slane %v229, %v2865
    %v2869 = vsel %vm2272, %v2861, 0
    %2871 = vmatprep.subr.mxu0 0.0
    %2872 = vmatpush1.msra.mxu0 0.0
    %2873 = vmatprep.subr.mxu0 0.0
    %2874 = vmatpush1.msra.mxu0 0.0
    %2875 = vmatprep.subr.mxu0 0.0
    %2876 = vmatpush1.msra.mxu0 0.0
    %2877 = vmatprep.subr.mxu0 0.0
    %2878 = vmatpush1.msra.mxu0 0.0
    %2879 = vmatprep.subr.mxu0 0.0
    %2880 = vmatpush1.msra.mxu0 0.0
    %2881 = vmatprep.subr.mxu0 0.0
    %2882 = vmatpush1.msra.mxu0 0.0
    %2883 = vmatprep.subr.mxu0 0.0
    %2884 = vmatpush1.msra.mxu0 0.0
    %2885 = vmatprep.subr.mxu0 0.0
    %2886 = vmatpush1.msra.mxu0 0.0
    %2887 = vmatprep.subr.mxu0 0.0
    %2888 = vmatpush1.msra.mxu0 %v228
    %2889 = vmatprep.subr.mxu0 0.0
    %2890 = vmatpush1.msra.mxu0 %v227
    %2891 = vmatprep.subr.mxu0 0.0
    %2892 = vmatpush1.msra.mxu0 %v226
    %2893 = vmatprep.subr.mxu0 0.0
    %2894 = vmatpush1.msra.mxu0 %v225
    %2895 = vmatprep.subr.mxu0 0.0
    %2896 = vmatpush1.msra.mxu0 %v224
    %2897 = vmatprep.subr.mxu0 0.0
    %2898 = vmatpush1.msra.mxu0 %v223
    %2899 = vmatprep.subr.mxu0 0.0
    %2900 = vmatpush1.msra.mxu0 %v222
    %2901 = vmatprep.subr.mxu0 0.0
    %2902 = vmatpush1.msra.mxu0 %v221
    %2903 = vmatprep.subr.mxu0 0.0
    %2904 = vmatpush2.msra.mxu0 0.0
    %2905 = vmatprep.subr.mxu0 0.0
    %2906 = vmatpush2.msra.mxu0 0.0
    %2907 = vmatprep.subr.mxu0 0.0
    %2908 = vmatpush2.msra.mxu0 0.0
    %2909 = vmatprep.subr.mxu0 0.0
    %2910 = vmatpush2.msra.mxu0 0.0
    %2911 = vmatprep.subr.mxu0 0.0
    %2912 = vmatpush2.msra.mxu0 0.0
    %2913 = vmatprep.subr.mxu0 0.0
    %2914 = vmatpush2.msra.mxu0 0.0
    %2915 = vmatprep.subr.mxu0 0.0
    %2916 = vmatpush2.msra.mxu0 0.0
    %2917 = vmatprep.subr.mxu0 0.0
    %2918 = vmatpush2.msra.mxu0 0.0
    %2919 = vmatprep.subr.mxu0 0.0
    %2920 = vmatpush2.msra.mxu0 0.0
    %2921 = vmatprep.subr.mxu0 0.0
    %2922 = vmatpush2.msra.mxu0 0.0
    %2923 = vmatprep.subr.mxu0 0.0
    %2924 = vmatpush2.msra.mxu0 0.0
    %2925 = vmatprep.subr.mxu0 0.0
    %2926 = vmatpush2.msra.mxu0 0.0
    %2927 = vmatprep.subr.mxu0 0.0
    %2928 = vmatpush2.msra.mxu0 0.0
    %2929 = vmatprep.subr.mxu0 0.0
    %2930 = vmatpush2.msra.mxu0 0.0
    %2931 = vmatprep.subr.mxu0 0.0
    %2932 = vmatpush2.msra.mxu0 0.0
    %2933 = vmatprep.subr.mxu0 0.0
    %2934 = vmatpush2.msra.mxu0 0.0
    %2935 = vmatprep.mubr.f32.mxu0 0.0
    %2936 = vmatmul.mubr.f32.gmra.mxu0 %v2869
    %v2937 = vpop.f32.mrf.mxu0
    %v2938 = vadd.f32 %v2866, %v2937
    %v2939 = vpop.f32.mrf.mxu0
    %2940 = vdwg.mxu0
    %v2941 = vmax.f32 %v2938, 0.0
    %v2943 = vlaneseq
    %v2944 = vshrl.u32 %v2943, 7
    %v2945 = vsub.s32 0, %v2944
    %v2946 = vrot.slane %v234, %v2945
    %v2949 = vsel %vm359, %v2941, 0
    %2951 = vmatprep.subr.mxu0 0.0
    %2952 = vmatpush1.msra.mxu0 0.0
    %2953 = vmatprep.subr.mxu0 0.0
    %2954 = vmatpush1.msra.mxu0 0.0
    %2955 = vmatprep.subr.mxu0 0.0
    %2956 = vmatpush1.msra.mxu0 0.0
    %2957 = vmatprep.subr.mxu0 0.0
    %2958 = vmatpush1.msra.mxu0 0.0
    %2959 = vmatprep.subr.mxu0 0.0
    %2960 = vmatpush1.msra.mxu0 0.0
    %2961 = vmatprep.subr.mxu0 0.0
    %2962 = vmatpush1.msra.mxu0 0.0
    %2963 = vmatprep.subr.mxu0 0.0
    %2964 = vmatpush1.msra.mxu0 0.0
    %2965 = vmatprep.subr.mxu0 0.0
    %2966 = vmatpush1.msra.mxu0 0.0
    %2967 = vmatprep.subr.mxu0 0.0
    %2968 = vmatpush1.msra.mxu0 0.0
    %2969 = vmatprep.subr.mxu0 0.0
    %2970 = vmatpush1.msra.mxu0 0.0
    %2971 = vmatprep.subr.mxu0 0.0
    %2972 = vmatpush1.msra.mxu0 0.0
    %2973 = vmatprep.subr.mxu0 0.0
    %2974 = vmatpush1.msra.mxu0 0.0
    %2975 = vmatprep.subr.mxu0 0.0
    %2976 = vmatpush1.msra.mxu0 %v233
    %2977 = vmatprep.subr.mxu0 0.0
    %2978 = vmatpush1.msra.mxu0 %v232
    %2979 = vmatprep.subr.mxu0 0.0
    %2980 = vmatpush1.msra.mxu0 %v231
    %2981 = vmatprep.subr.mxu0 0.0
    %2982 = vmatpush1.msra.mxu0 %v230
    %2983 = vmatprep.subr.mxu0 0.0
    %2984 = vmatpush2.msra.mxu0 0.0
    %2985 = vmatprep.subr.mxu0 0.0
    %2986 = vmatpush2.msra.mxu0 0.0
    %2987 = vmatprep.subr.mxu0 0.0
    %2988 = vmatpush2.msra.mxu0 0.0
    %2989 = vmatprep.subr.mxu0 0.0
    %2990 = vmatpush2.msra.mxu0 0.0
    %2991 = vmatprep.subr.mxu0 0.0
    %2992 = vmatpush2.msra.mxu0 0.0
    %2993 = vmatprep.subr.mxu0 0.0
    %2994 = vmatpush2.msra.mxu0 0.0
    %2995 = vmatprep.subr.mxu0 0.0
    %2996 = vmatpush2.msra.mxu0 0.0
    %2997 = vmatprep.subr.mxu0 0.0
    %2998 = vmatpush2.msra.mxu0 0.0
    %2999 = vmatprep.subr.mxu0 0.0
    %3000 = vmatpush2.msra.mxu0 0.0
    %3001 = vmatprep.subr.mxu0 0.0
    %3002 = vmatpush2.msra.mxu0 0.0
    %3003 = vmatprep.subr.mxu0 0.0
    %3004 = vmatpush2.msra.mxu0 0.0
    %3005 = vmatprep.subr.mxu0 0.0
    %3006 = vmatpush2.msra.mxu0 0.0
    %3007 = vmatprep.subr.mxu0 0.0
    %3008 = vmatpush2.msra.mxu0 0.0
    %3009 = vmatprep.subr.mxu0 0.0
    %3010 = vmatpush2.msra.mxu0 0.0
    %3011 = vmatprep.subr.mxu0 0.0
    %3012 = vmatpush2.msra.mxu0 0.0
    %3013 = vmatprep.subr.mxu0 0.0
    %3014 = vmatpush2.msra.mxu0 0.0
    %3015 = vmatprep.mubr.f32.mxu0 0.0
    %3016 = vmatmul.mubr.f32.gmra.mxu0 %v2949
    %v3017 = vpop.f32.mrf.mxu0
    %v3018 = vadd.f32 %v2946, %v3017
    %v3019 = vpop.f32.mrf.mxu0
    %3020 = vdwg.mxu0
    %v3021 = vmax.f32 %v3018, 0.0
    %3022 = vrot.lane.b32.xlu0 %v2255, 36
    %v3023 = vpop.permute.xlu0 %3022
    %v3025 = vsel %vm273, %v3021, %v3023
    %v3027 = vsel %vm2153, %v3025, 0
    %3029 = vmatprep.subr.mxu0 0.0
    %3030 = vmatpush1.msra.mxu0 0.0
    %3031 = vmatprep.subr.mxu0 0.0
    %3032 = vmatpush1.msra.mxu0 0.0
    %3033 = vmatprep.subr.mxu0 0.0
    %3034 = vmatpush1.msra.mxu0 0.0
    %3035 = vmatprep.subr.mxu0 0.0
    %3036 = vmatpush1.msra.mxu0 0.0
    %3037 = vmatprep.subr.mxu0 0.0
    %3038 = vmatpush1.msra.mxu0 0.0
    %3039 = vmatprep.subr.mxu0 0.0
    %3040 = vmatpush1.msra.mxu0 0.0
    %3041 = vmatprep.subr.mxu0 0.0
    %3042 = vmatpush1.msra.mxu0 0.0
    %3043 = vmatprep.subr.mxu0 0.0
    %3044 = vmatpush1.msra.mxu0 0.0
    %3045 = vmatprep.subr.mxu0 0.0
    %3046 = vmatpush1.msra.mxu0 0.0
    %3047 = vmatprep.subr.mxu0 0.0
    %3048 = vmatpush1.msra.mxu0 0.0
    %3049 = vmatprep.subr.mxu0 0.0
    %3050 = vmatpush1.msra.mxu0 0.0
    %3051 = vmatprep.subr.mxu0 0.0
    %3052 = vmatpush1.msra.mxu0 %v2157
    %3053 = vmatprep.subr.mxu0 0.0
    %3054 = vmatpush1.msra.mxu0 %v253
    %3055 = vmatprep.subr.mxu0 0.0
    %3056 = vmatpush1.msra.mxu0 %v252
    %3057 = vmatprep.subr.mxu0 0.0
    %3058 = vmatpush1.msra.mxu0 %v251
    %3059 = vmatprep.subr.mxu0 0.0
    %3060 = vmatpush1.msra.mxu0 %v250
    %3061 = vmatprep.subr.mxu0 0.0
    %3062 = vmatpush2.msra.mxu0 0.0
    %3063 = vmatprep.subr.mxu0 0.0
    %3064 = vmatpush2.msra.mxu0 0.0
    %3065 = vmatprep.subr.mxu0 0.0
    %3066 = vmatpush2.msra.mxu0 0.0
    %3067 = vmatprep.subr.mxu0 0.0
    %3068 = vmatpush2.msra.mxu0 0.0
    %3069 = vmatprep.subr.mxu0 0.0
    %3070 = vmatpush2.msra.mxu0 0.0
    %3071 = vmatprep.subr.mxu0 0.0
    %3072 = vmatpush2.msra.mxu0 0.0
    %3073 = vmatprep.subr.mxu0 0.0
    %3074 = vmatpush2.msra.mxu0 0.0
    %3075 = vmatprep.subr.mxu0 0.0
    %3076 = vmatpush2.msra.mxu0 0.0
    %3077 = vmatprep.subr.mxu0 0.0
    %3078 = vmatpush2.msra.mxu0 0.0
    %3079 = vmatprep.subr.mxu0 0.0
    %3080 = vmatpush2.msra.mxu0 0.0
    %3081 = vmatprep.subr.mxu0 0.0
    %3082 = vmatpush2.msra.mxu0 0.0
    %3083 = vmatprep.subr.mxu0 0.0
    %3084 = vmatpush2.msra.mxu0 0.0
    %3085 = vmatprep.subr.mxu0 0.0
    %3086 = vmatpush2.msra.mxu0 0.0
    %3087 = vmatprep.subr.mxu0 0.0
    %3088 = vmatpush2.msra.mxu0 0.0
    %3089 = vmatprep.subr.mxu0 0.0
    %3090 = vmatpush2.msra.mxu0 0.0
    %3091 = vmatprep.subr.mxu0 0.0
    %3092 = vmatpush2.msra.mxu0 0.0
    %3093 = vmatprep.mubr.f32.mxu0 0.0
    %3094 = vmatmul.mubr.f32.gmra.mxu0 %v3027
    %v3095 = vpop.f32.mrf.mxu0
    %v3096 = vadd.f32 %v2149, %v3095
    %v3097 = vpop.f32.mrf.mxu0
    %3098 = vdwg.mxu0
    %v3099 = vxor.u32 %v3096, 2147483648
    %v3100 = vmul.f32 %v3099, 1.442695
    %v3101 = vpow.pop %v3100
    %v3102 = vadd.f32 %v3101, 1.0
    %v3103 = vrcp.pop %v3102
    %v3104 = vmul.f32 1.0, %v3103
    %v3105 = vtanh.pop %v3096
    %v3106 = vmul.f32 %v3104, %v2249
    %3108 = vrot.lane.b32.xlu0 %v3105, 64
    %v3109 = vpop.permute.xlu0 %3108
    %v3111 = vmul.f32 %v3104, %v3109
    %3113 = vrot.lane.b32.xlu0 %v3111, 32
    %v3114 = vpop.permute.xlu0 %3113
    %v3116 = vadd.f32 %v3106, %v3114
    %v3117 = vtanh.pop %v3116
    %3119 = vrot.lane.b32.xlu0 %v3117, 64
    %v3120 = vpop.permute.xlu0 %3119
    %v3122 = vmul.f32 %v3104, %v3120
    %3124 = vrot.lane.b32.xlu0 %v3122, 32
    %v3125 = vpop.permute.xlu0 %3124
    %3127 = vrot.lane.b32.xlu0 %v2372, 64
    %v3128 = vpop.permute.xlu0 %3127
    %v3130 = vsel %vm359, %v3125, %v3128
    %v3132 = vsel %vm2272, %v3130, 0
    %3134 = vmatprep.subr.mxu0 0.0
    %3135 = vmatpush1.msra.mxu0 0.0
    %3136 = vmatprep.subr.mxu0 0.0
    %3137 = vmatpush1.msra.mxu0 0.0
    %3138 = vmatprep.subr.mxu0 0.0
    %3139 = vmatpush1.msra.mxu0 0.0
    %3140 = vmatprep.subr.mxu0 0.0
    %3141 = vmatpush1.msra.mxu0 0.0
    %3142 = vmatprep.subr.mxu0 0.0
    %3143 = vmatpush1.msra.mxu0 0.0
    %3144 = vmatprep.subr.mxu0 0.0
    %3145 = vmatpush1.msra.mxu0 0.0
    %3146 = vmatprep.subr.mxu0 0.0
    %3147 = vmatpush1.msra.mxu0 0.0
    %3148 = vmatprep.subr.mxu0 0.0
    %3149 = vmatpush1.msra.mxu0 0.0
    %3150 = vmatprep.subr.mxu0 0.0
    %3151 = vmatpush1.msra.mxu0 %v263
    %3152 = vmatprep.subr.mxu0 0.0
    %3153 = vmatpush1.msra.mxu0 %v262
    %3154 = vmatprep.subr.mxu0 0.0
    %3155 = vmatpush1.msra.mxu0 %v261
    %3156 = vmatprep.subr.mxu0 0.0
    %3157 = vmatpush1.msra.mxu0 %v260
    %3158 = vmatprep.subr.mxu0 0.0
    %3159 = vmatpush1.msra.mxu0 %v259
    %3160 = vmatprep.subr.mxu0 0.0
    %3161 = vmatpush1.msra.mxu0 %v258
    %3162 = vmatprep.subr.mxu0 0.0
    %3163 = vmatpush1.msra.mxu0 %v257
    %3164 = vmatprep.subr.mxu0 0.0
    %3165 = vmatpush1.msra.mxu0 %v256
    %3166 = vmatprep.subr.mxu0 0.0
    %3167 = vmatpush2.msra.mxu0 0.0
    %3168 = vmatprep.subr.mxu0 0.0
    %3169 = vmatpush2.msra.mxu0 0.0
    %3170 = vmatprep.subr.mxu0 0.0
    %3171 = vmatpush2.msra.mxu0 0.0
    %3172 = vmatprep.subr.mxu0 0.0
    %3173 = vmatpush2.msra.mxu0 0.0
    %3174 = vmatprep.subr.mxu0 0.0
    %3175 = vmatpush2.msra.mxu0 0.0
    %3176 = vmatprep.subr.mxu0 0.0
    %3177 = vmatpush2.msra.mxu0 0.0
    %3178 = vmatprep.subr.mxu0 0.0
    %3179 = vmatpush2.msra.mxu0 0.0
    %3180 = vmatprep.subr.mxu0 0.0
    %3181 = vmatpush2.msra.mxu0 0.0
    %3182 = vmatprep.subr.mxu0 0.0
    %3183 = vmatpush2.msra.mxu0 0.0
    %3184 = vmatprep.subr.mxu0 0.0
    %3185 = vmatpush2.msra.mxu0 0.0
    %3186 = vmatprep.subr.mxu0 0.0
    %3187 = vmatpush2.msra.mxu0 0.0
    %3188 = vmatprep.subr.mxu0 0.0
    %3189 = vmatpush2.msra.mxu0 0.0
    %3190 = vmatprep.subr.mxu0 0.0
    %3191 = vmatpush2.msra.mxu0 0.0
    %3192 = vmatprep.subr.mxu0 0.0
    %3193 = vmatpush2.msra.mxu0 0.0
    %3194 = vmatprep.subr.mxu0 0.0
    %3195 = vmatpush2.msra.mxu0 0.0
    %3196 = vmatprep.subr.mxu0 0.0
    %3197 = vmatpush2.msra.mxu0 0.0
    %3198 = vmatprep.mubr.f32.mxu0 0.0
    %3199 = vmatmul.mubr.f32.gmra.mxu0 %v3132
    %v3200 = vpop.f32.mrf.mxu0
    %v3201 = vadd.f32 %v2270, %v3200
    %v3202 = vpop.f32.mrf.mxu0
    %3203 = vdwg.mxu0
    %v3204 = vxor.u32 %v3201, 2147483648
    %v3205 = vmul.f32 %v3204, 1.442695
    %v3206 = vpow.pop %v3205
    %v3207 = vadd.f32 %v3206, 1.0
    %v3208 = vrcp.pop %v3207
    %v3209 = vmul.f32 1.0, %v3208
    %v3210 = vtanh.pop %v3201
    %v3211 = vmul.f32 %v3209, %v2366
    %3213 = vrot.lane.b32.xlu0 %v3210, 64
    %v3214 = vpop.permute.xlu0 %3213
    %v3216 = vmul.f32 %v3209, %v3214
    %3218 = vrot.lane.b32.xlu0 %v3216, 32
    %v3219 = vpop.permute.xlu0 %3218
    %v3221 = vadd.f32 %v3211, %v3219
    %v3222 = vtanh.pop %v3221
    %3224 = vrot.lane.b32.xlu0 %v3222, 64
    %v3225 = vpop.permute.xlu0 %3224
    %v3227 = vmul.f32 %v3209, %v3225
    %3229 = vrot.lane.b32.xlu0 %v3227, 32
    %v3230 = vpop.permute.xlu0 %3229
    %v3231 = vsel %vm359, %v3230, 0
    %3233 = vmatprep.subr.mxu0 0.0
    %3234 = vmatpush1.msra.mxu0 0.0
    %3235 = vmatprep.subr.mxu0 0.0
    %3236 = vmatpush1.msra.mxu0 0.0
    %3237 = vmatprep.subr.mxu0 0.0
    %3238 = vmatpush1.msra.mxu0 0.0
    %3239 = vmatprep.subr.mxu0 0.0
    %3240 = vmatpush1.msra.mxu0 0.0
    %3241 = vmatprep.subr.mxu0 0.0
    %3242 = vmatpush1.msra.mxu0 0.0
    %3243 = vmatprep.subr.mxu0 0.0
    %3244 = vmatpush1.msra.mxu0 0.0
    %3245 = vmatprep.subr.mxu0 0.0
    %3246 = vmatpush1.msra.mxu0 0.0
    %3247 = vmatprep.subr.mxu0 0.0
    %3248 = vmatpush1.msra.mxu0 0.0
    %3249 = vmatprep.subr.mxu0 0.0
    %3250 = vmatpush1.msra.mxu0 0.0
    %3251 = vmatprep.subr.mxu0 0.0
    %3252 = vmatpush1.msra.mxu0 0.0
    %3253 = vmatprep.subr.mxu0 0.0
    %3254 = vmatpush1.msra.mxu0 0.0
    %3255 = vmatprep.subr.mxu0 0.0
    %3256 = vmatpush1.msra.mxu0 0.0
    %3257 = vmatprep.subr.mxu0 0.0
    %3258 = vmatpush1.msra.mxu0 %v204
    %3259 = vmatprep.subr.mxu0 0.0
    %3260 = vmatpush1.msra.mxu0 %v203
    %3261 = vmatprep.subr.mxu0 0.0
    %3262 = vmatpush1.msra.mxu0 %v202
    %3263 = vmatprep.subr.mxu0 0.0
    %3264 = vmatpush1.msra.mxu0 %v201
    %3265 = vmatprep.subr.mxu0 0.0
    %3266 = vmatpush2.msra.mxu0 0.0
    %3267 = vmatprep.subr.mxu0 0.0
    %3268 = vmatpush2.msra.mxu0 0.0
    %3269 = vmatprep.subr.mxu0 0.0
    %3270 = vmatpush2.msra.mxu0 0.0
    %3271 = vmatprep.subr.mxu0 0.0
    %3272 = vmatpush2.msra.mxu0 0.0
    %3273 = vmatprep.subr.mxu0 0.0
    %3274 = vmatpush2.msra.mxu0 0.0
    %3275 = vmatprep.subr.mxu0 0.0
    %3276 = vmatpush2.msra.mxu0 0.0
    %3277 = vmatprep.subr.mxu0 0.0
    %3278 = vmatpush2.msra.mxu0 0.0
    %3279 = vmatprep.subr.mxu0 0.0
    %3280 = vmatpush2.msra.mxu0 0.0
    %3281 = vmatprep.subr.mxu0 0.0
    %3282 = vmatpush2.msra.mxu0 0.0
    %3283 = vmatprep.subr.mxu0 0.0
    %3284 = vmatpush2.msra.mxu0 0.0
    %3285 = vmatprep.subr.mxu0 0.0
    %3286 = vmatpush2.msra.mxu0 0.0
    %3287 = vmatprep.subr.mxu0 0.0
    %3288 = vmatpush2.msra.mxu0 0.0
    %3289 = vmatprep.subr.mxu0 0.0
    %3290 = vmatpush2.msra.mxu0 0.0
    %3291 = vmatprep.subr.mxu0 0.0
    %3292 = vmatpush2.msra.mxu0 0.0
    %3293 = vmatprep.subr.mxu0 0.0
    %3294 = vmatpush2.msra.mxu0 0.0
    %3295 = vmatprep.subr.mxu0 0.0
    %3296 = vmatpush2.msra.mxu0 0.0
    %3297 = vmatprep.mubr.f32.mxu0 0.0
    %3298 = vmatmul.mubr.f32.gmra.mxu0 %v3231
    %v3299 = vpop.f32.mrf.mxu0
    %v3300 = vadd.f32 %v2377, %v3299
    %v3301 = vpop.f32.mrf.mxu0
    %3302 = vdwg.mxu0
    %vm3303 = vcmp.gt.f32.partialorder %v3300, 0.0
    %v3304 = vmul.f32 %v3300, 0.01
    %v3305 = vsel %vm3303, %v3300, %v3304
    %v3307 = vsel %vm359, %v3305, 0
    %3309 = vmatprep.subr.mxu0 0.0
    %3310 = vmatpush1.msra.mxu0 0.0
    %3311 = vmatprep.subr.mxu0 0.0
    %3312 = vmatpush1.msra.mxu0 0.0
    %3313 = vmatprep.subr.mxu0 0.0
    %3314 = vmatpush1.msra.mxu0 0.0
    %3315 = vmatprep.subr.mxu0 0.0
    %3316 = vmatpush1.msra.mxu0 0.0
    %3317 = vmatprep.subr.mxu0 0.0
    %3318 = vmatpush1.msra.mxu0 0.0
    %3319 = vmatprep.subr.mxu0 0.0
    %3320 = vmatpush1.msra.mxu0 0.0
    %3321 = vmatprep.subr.mxu0 0.0
    %3322 = vmatpush1.msra.mxu0 0.0
    %3323 = vmatprep.subr.mxu0 0.0
    %3324 = vmatpush1.msra.mxu0 0.0
    %3325 = vmatprep.subr.mxu0 0.0
    %3326 = vmatpush1.msra.mxu0 0.0
    %3327 = vmatprep.subr.mxu0 0.0
    %3328 = vmatpush1.msra.mxu0 0.0
    %3329 = vmatprep.subr.mxu0 0.0
    %3330 = vmatpush1.msra.mxu0 0.0
    %3331 = vmatprep.subr.mxu0 0.0
    %3332 = vmatpush1.msra.mxu0 0.0
    %3333 = vmatprep.subr.mxu0 0.0
    %3334 = vmatpush1.msra.mxu0 %v209
    %3335 = vmatprep.subr.mxu0 0.0
    %3336 = vmatpush1.msra.mxu0 %v208
    %3337 = vmatprep.subr.mxu0 0.0
    %3338 = vmatpush1.msra.mxu0 %v207
    %3339 = vmatprep.subr.mxu0 0.0
    %3340 = vmatpush1.msra.mxu0 %v206
    %3341 = vmatprep.subr.mxu0 0.0
    %3342 = vmatpush2.msra.mxu0 0.0
    %3343 = vmatprep.subr.mxu0 0.0
    %3344 = vmatpush2.msra.mxu0 0.0
    %3345 = vmatprep.subr.mxu0 0.0
    %3346 = vmatpush2.msra.mxu0 0.0
    %3347 = vmatprep.subr.mxu0 0.0
    %3348 = vmatpush2.msra.mxu0 0.0
    %3349 = vmatprep.subr.mxu0 0.0
    %3350 = vmatpush2.msra.mxu0 0.0
    %3351 = vmatprep.subr.mxu0 0.0
    %3352 = vmatpush2.msra.mxu0 0.0
    %3353 = vmatprep.subr.mxu0 0.0
    %3354 = vmatpush2.msra.mxu0 0.0
    %3355 = vmatprep.subr.mxu0 0.0
    %3356 = vmatpush2.msra.mxu0 0.0
    %3357 = vmatprep.subr.mxu0 0.0
    %3358 = vmatpush2.msra.mxu0 0.0
    %3359 = vmatprep.subr.mxu0 0.0
    %3360 = vmatpush2.msra.mxu0 0.0
    %3361 = vmatprep.subr.mxu0 0.0
    %3362 = vmatpush2.msra.mxu0 0.0
    %3363 = vmatprep.subr.mxu0 0.0
    %3364 = vmatpush2.msra.mxu0 0.0
    %3365 = vmatprep.subr.mxu0 0.0
    %3366 = vmatpush2.msra.mxu0 0.0
    %3367 = vmatprep.subr.mxu0 0.0
    %3368 = vmatpush2.msra.mxu0 0.0
    %3369 = vmatprep.subr.mxu0 0.0
    %3370 = vmatpush2.msra.mxu0 0.0
    %3371 = vmatprep.subr.mxu0 0.0
    %3372 = vmatpush2.msra.mxu0 0.0
    %3373 = vmatprep.mubr.f32.mxu0 0.0
    %3374 = vmatmul.mubr.f32.gmra.mxu0 %v3307
    %v3375 = vpop.f32.mrf.mxu0
    %v3376 = vadd.f32 %v2461, %v3375
    %v3377 = vpop.f32.mrf.mxu0
    %3378 = vdwg.mxu0
    %3380 = vrot.lane.b32.xlu0 %v3376, 96
    %v3381 = vpop.permute.xlu0 %3380
    %v3382 = vsel %vm359, %v3376, 0
    %v3384 = vsel %vm359, %v3381, 0
    %3386 = vmatprep.subr.mxu0 0.0
    %3387 = vmatpush1.xpose.msra.mxu0 0.0
    %3388 = vmatprep.subr.mxu0 0.0
    %3389 = vmatpush1.xpose.msra.mxu0 0.0
    %3390 = vmatprep.subr.mxu0 0.0
    %3391 = vmatpush1.xpose.msra.mxu0 0.0
    %3392 = vmatprep.subr.mxu0 0.0
    %3393 = vmatpush1.xpose.msra.mxu0 0.0
    %3394 = vmatprep.subr.mxu0 0.0
    %3395 = vmatpush1.xpose.msra.mxu0 0.0
    %3396 = vmatprep.subr.mxu0 0.0
    %3397 = vmatpush1.xpose.msra.mxu0 0.0
    %3398 = vmatprep.subr.mxu0 0.0
    %3399 = vmatpush1.xpose.msra.mxu0 0.0
    %3400 = vmatprep.subr.mxu0 0.0
    %3401 = vmatpush1.xpose.msra.mxu0 0.0
    %3402 = vmatprep.subr.mxu0 0.0
    %3403 = vmatpush1.xpose.msra.mxu0 0.0
    %3404 = vmatprep.subr.mxu0 0.0
    %3405 = vmatpush1.xpose.msra.mxu0 0.0
    %3406 = vmatprep.subr.mxu0 0.0
    %3407 = vmatpush1.xpose.msra.mxu0 0.0
    %3408 = vmatprep.subr.mxu0 0.0
    %3409 = vmatpush1.xpose.msra.mxu0 0.0
    %3410 = vmatprep.subr.mxu0 0.0
    %3411 = vmatpush1.xpose.msra.mxu0 0.0
    %3412 = vmatprep.subr.mxu0 0.0
    %3413 = vmatpush1.xpose.msra.mxu0 0.0
    %3414 = vmatprep.subr.mxu0 0.0
    %3415 = vmatpush1.xpose.msra.mxu0 0.0
    %3416 = vmatprep.subr.mxu0 0.0
    %3417 = vmatpush1.xpose.msra.mxu0 %v3384
    %3418 = vmatprep.subr.mxu0 0.0
    %3419 = vmatpush2.xpose.msra.mxu0 0.0
    %3420 = vmatprep.subr.mxu0 0.0
    %3421 = vmatpush2.xpose.msra.mxu0 0.0
    %3422 = vmatprep.subr.mxu0 0.0
    %3423 = vmatpush2.xpose.msra.mxu0 0.0
    %3424 = vmatprep.subr.mxu0 0.0
    %3425 = vmatpush2.xpose.msra.mxu0 0.0
    %3426 = vmatprep.subr.mxu0 0.0
    %3427 = vmatpush2.xpose.msra.mxu0 0.0
    %3428 = vmatprep.subr.mxu0 0.0
    %3429 = vmatpush2.xpose.msra.mxu0 0.0
    %3430 = vmatprep.subr.mxu0 0.0
    %3431 = vmatpush2.xpose.msra.mxu0 0.0
    %3432 = vmatprep.subr.mxu0 0.0
    %3433 = vmatpush2.xpose.msra.mxu0 0.0
    %3434 = vmatprep.subr.mxu0 0.0
    %3435 = vmatpush2.xpose.msra.mxu0 0.0
    %3436 = vmatprep.subr.mxu0 0.0
    %3437 = vmatpush2.xpose.msra.mxu0 0.0
    %3438 = vmatprep.subr.mxu0 0.0
    %3439 = vmatpush2.xpose.msra.mxu0 0.0
    %3440 = vmatprep.subr.mxu0 0.0
    %3441 = vmatpush2.xpose.msra.mxu0 0.0
    %3442 = vmatprep.subr.mxu0 0.0
    %3443 = vmatpush2.xpose.msra.mxu0 0.0
    %3444 = vmatprep.subr.mxu0 0.0
    %3445 = vmatpush2.xpose.msra.mxu0 0.0
    %3446 = vmatprep.subr.mxu0 0.0
    %3447 = vmatpush2.xpose.msra.mxu0 0.0
    %3448 = vmatprep.subr.mxu0 0.0
    %3449 = vmatpush2.xpose.msra.mxu0 0.0
    %3450 = vmatprep.mubr.f32.mxu0 0.0
    %3451 = vmatmul.mubr.f32.gmra.mxu0 %v3382
    %v3452 = vpop.f32.mrf.mxu0
    %v3453 = vadd.f32 0.0, %v3452
    %v3454 = vpop.f32.mrf.mxu0
    %3455 = vdwg.mxu0
    %v3456 = vsel %vm2613, %v3453, -inf
    %3457 = vmax.xlane.f32.xlu0 %v3456
    %v3458 = vpop.xlane.xlu0 %3457
    %v3459 = vsub.f32 %v3453, %v3458
    %v3460 = vmul.f32 %v3459, 1.442695
    %v3461 = vpow.pop %v3460
    %v3462 = vsel %vm2613, %v3461, 0.0
    %3463 = vadd.xlane.f32.xlu0 %v3462
    %v3464 = vpop.xlane.xlu0 %3463
    %v3465 = vrcp.pop %v3464
    %v3466 = vmul.f32 %v3461, %v3465
    %3467 = vrot.lane.b32.xlu0 %v3376, 64
    %v3468 = vpop.permute.xlu0 %3467
    %v3470 = vsel %vm2627, %v3466, 0
    %v3472 = vsel %vm1202, %v3468, 0
    %3474 = vmatprep.subr.mxu0 0.0
    %3475 = vmatpush1.msra.mxu0 0.0
    %3476 = vmatprep.subr.mxu0 0.0
    %3477 = vmatpush1.msra.mxu0 0.0
    %3478 = vmatprep.subr.mxu0 0.0
    %3479 = vmatpush1.msra.mxu0 0.0
    %3480 = vmatprep.subr.mxu0 0.0
    %3481 = vmatpush1.msra.mxu0 0.0
    %3482 = vmatprep.subr.mxu0 0.0
    %3483 = vmatpush1.msra.mxu0 0.0
    %3484 = vmatprep.subr.mxu0 0.0
    %3485 = vmatpush1.msra.mxu0 0.0
    %3486 = vmatprep.subr.mxu0 0.0
    %3487 = vmatpush1.msra.mxu0 0.0
    %3488 = vmatprep.subr.mxu0 0.0
    %3489 = vmatpush1.msra.mxu0 0.0
    %3490 = vmatprep.subr.mxu0 0.0
    %3491 = vmatpush1.msra.mxu0 0.0
    %3492 = vmatprep.subr.mxu0 0.0
    %3493 = vmatpush1.msra.mxu0 0.0
    %3494 = vmatprep.subr.mxu0 0.0
    %3495 = vmatpush1.msra.mxu0 0.0
    %3496 = vmatprep.subr.mxu0 0.0
    %3497 = vmatpush1.msra.mxu0 0.0
    %3498 = vmatprep.subr.mxu0 0.0
    %3499 = vmatpush1.msra.mxu0 0.0
    %3500 = vmatprep.subr.mxu0 0.0
    %3501 = vmatpush1.msra.mxu0 0.0
    %3502 = vmatprep.subr.mxu0 0.0
    %3503 = vmatpush1.msra.mxu0 0.0
    %3504 = vmatprep.subr.mxu0 0.0
    %3505 = vmatpush1.msra.mxu0 %v3472
    %3506 = vmatprep.subr.mxu0 0.0
    %3507 = vmatpush2.msra.mxu0 0.0
    %3508 = vmatprep.subr.mxu0 0.0
    %3509 = vmatpush2.msra.mxu0 0.0
    %3510 = vmatprep.subr.mxu0 0.0
    %3511 = vmatpush2.msra.mxu0 0.0
    %3512 = vmatprep.subr.mxu0 0.0
    %3513 = vmatpush2.msra.mxu0 0.0
    %3514 = vmatprep.subr.mxu0 0.0
    %3515 = vmatpush2.msra.mxu0 0.0
    %3516 = vmatprep.subr.mxu0 0.0
    %3517 = vmatpush2.msra.mxu0 0.0
    %3518 = vmatprep.subr.mxu0 0.0
    %3519 = vmatpush2.msra.mxu0 0.0
    %3520 = vmatprep.subr.mxu0 0.0
    %3521 = vmatpush2.msra.mxu0 0.0
    %3522 = vmatprep.subr.mxu0 0.0
    %3523 = vmatpush2.msra.mxu0 0.0
    %3524 = vmatprep.subr.mxu0 0.0
    %3525 = vmatpush2.msra.mxu0 0.0
    %3526 = vmatprep.subr.mxu0 0.0
    %3527 = vmatpush2.msra.mxu0 0.0
    %3528 = vmatprep.subr.mxu0 0.0
    %3529 = vmatpush2.msra.mxu0 0.0
    %3530 = vmatprep.subr.mxu0 0.0
    %3531 = vmatpush2.msra.mxu0 0.0
    %3532 = vmatprep.subr.mxu0 0.0
    %3533 = vmatpush2.msra.mxu0 0.0
    %3534 = vmatprep.subr.mxu0 0.0
    %3535 = vmatpush2.msra.mxu0 0.0
    %3536 = vmatprep.subr.mxu0 0.0
    %3537 = vmatpush2.msra.mxu0 0.0
    %3538 = vmatprep.mubr.f32.mxu0 0.0
    %3539 = vmatmul.mubr.f32.gmra.mxu0 %v3470
    %v3540 = vpop.f32.mrf.mxu0
    %v3541 = vadd.f32 0.0, %v3540
    %v3542 = vpop.f32.mrf.mxu0
    %3543 = vdwg.mxu0
    %v3545 = vsel %vm359, %v3541, 0
    %3547 = vmatprep.subr.mxu0 0.0
    %3548 = vmatpush1.msra.mxu0 0.0
    %3549 = vmatprep.subr.mxu0 0.0
    %3550 = vmatpush1.msra.mxu0 0.0
    %3551 = vmatprep.subr.mxu0 0.0
    %3552 = vmatpush1.msra.mxu0 0.0
    %3553 = vmatprep.subr.mxu0 0.0
    %3554 = vmatpush1.msra.mxu0 0.0
    %3555 = vmatprep.subr.mxu0 0.0
    %3556 = vmatpush1.msra.mxu0 0.0
    %3557 = vmatprep.subr.mxu0 0.0
    %3558 = vmatpush1.msra.mxu0 0.0
    %3559 = vmatprep.subr.mxu0 0.0
    %3560 = vmatpush1.msra.mxu0 0.0
    %3561 = vmatprep.subr.mxu0 0.0
    %3562 = vmatpush1.msra.mxu0 0.0
    %3563 = vmatprep.subr.mxu0 0.0
    %3564 = vmatpush1.msra.mxu0 0.0
    %3565 = vmatprep.subr.mxu0 0.0
    %3566 = vmatpush1.msra.mxu0 0.0
    %3567 = vmatprep.subr.mxu0 0.0
    %3568 = vmatpush1.msra.mxu0 0.0
    %3569 = vmatprep.subr.mxu0 0.0
    %3570 = vmatpush1.msra.mxu0 0.0
    %3571 = vmatprep.subr.mxu0 0.0
    %3572 = vmatpush1.msra.mxu0 %v214
    %3573 = vmatprep.subr.mxu0 0.0
    %3574 = vmatpush1.msra.mxu0 %v213
    %3575 = vmatprep.subr.mxu0 0.0
    %3576 = vmatpush1.msra.mxu0 %v212
    %3577 = vmatprep.subr.mxu0 0.0
    %3578 = vmatpush1.msra.mxu0 %v211
    %3579 = vmatprep.subr.mxu0 0.0
    %3580 = vmatpush2.msra.mxu0 0.0
    %3581 = vmatprep.subr.mxu0 0.0
    %3582 = vmatpush2.msra.mxu0 0.0
    %3583 = vmatprep.subr.mxu0 0.0
    %3584 = vmatpush2.msra.mxu0 0.0
    %3585 = vmatprep.subr.mxu0 0.0
    %3586 = vmatpush2.msra.mxu0 0.0
    %3587 = vmatprep.subr.mxu0 0.0
    %3588 = vmatpush2.msra.mxu0 0.0
    %3589 = vmatprep.subr.mxu0 0.0
    %3590 = vmatpush2.msra.mxu0 0.0
    %3591 = vmatprep.subr.mxu0 0.0
    %3592 = vmatpush2.msra.mxu0 0.0
    %3593 = vmatprep.subr.mxu0 0.0
    %3594 = vmatpush2.msra.mxu0 0.0
    %3595 = vmatprep.subr.mxu0 0.0
    %3596 = vmatpush2.msra.mxu0 0.0
    %3597 = vmatprep.subr.mxu0 0.0
    %3598 = vmatpush2.msra.mxu0 0.0
    %3599 = vmatprep.subr.mxu0 0.0
    %3600 = vmatpush2.msra.mxu0 0.0
    %3601 = vmatprep.subr.mxu0 0.0
    %3602 = vmatpush2.msra.mxu0 0.0
    %3603 = vmatprep.subr.mxu0 0.0
    %3604 = vmatpush2.msra.mxu0 0.0
    %3605 = vmatprep.subr.mxu0 0.0
    %3606 = vmatpush2.msra.mxu0 0.0
    %3607 = vmatprep.subr.mxu0 0.0
    %3608 = vmatpush2.msra.mxu0 0.0
    %3609 = vmatprep.subr.mxu0 0.0
    %3610 = vmatpush2.msra.mxu0 0.0
    %3611 = vmatprep.mubr.f32.mxu0 0.0
    %3612 = vmatmul.mubr.f32.gmra.mxu0 %v3545
    %v3613 = vpop.f32.mrf.mxu0
    %v3614 = vadd.f32 %v2707, %v3613
    %v3615 = vpop.f32.mrf.mxu0
    %3616 = vdwg.mxu0
    %v3618 = vsel %vm359, %v3614, 0
    %3620 = vmatprep.subr.mxu0 0.0
    %3621 = vmatpush1.msra.mxu0 0.0
    %3622 = vmatprep.subr.mxu0 0.0
    %3623 = vmatpush1.msra.mxu0 0.0
    %3624 = vmatprep.subr.mxu0 0.0
    %3625 = vmatpush1.msra.mxu0 0.0
    %3626 = vmatprep.subr.mxu0 0.0
    %3627 = vmatpush1.msra.mxu0 0.0
    %3628 = vmatprep.subr.mxu0 0.0
    %3629 = vmatpush1.msra.mxu0 0.0
    %3630 = vmatprep.subr.mxu0 0.0
    %3631 = vmatpush1.msra.mxu0 0.0
    %3632 = vmatprep.subr.mxu0 0.0
    %3633 = vmatpush1.msra.mxu0 0.0
    %3634 = vmatprep.subr.mxu0 0.0
    %3635 = vmatpush1.msra.mxu0 0.0
    %3636 = vmatprep.subr.mxu0 0.0
    %3637 = vmatpush1.msra.mxu0 0.0
    %3638 = vmatprep.subr.mxu0 0.0
    %3639 = vmatpush1.msra.mxu0 0.0
    %3640 = vmatprep.subr.mxu0 0.0
    %3641 = vmatpush1.msra.mxu0 0.0
    %3642 = vmatprep.subr.mxu0 0.0
    %3643 = vmatpush1.msra.mxu0 0.0
    %3644 = vmatprep.subr.mxu0 0.0
    %3645 = vmatpush1.msra.mxu0 %v219
    %3646 = vmatprep.subr.mxu0 0.0
    %3647 = vmatpush1.msra.mxu0 %v218
    %3648 = vmatprep.subr.mxu0 0.0
    %3649 = vmatpush1.msra.mxu0 %v217
    %3650 = vmatprep.subr.mxu0 0.0
    %3651 = vmatpush1.msra.mxu0 %v216
    %3652 = vmatprep.subr.mxu0 0.0
    %3653 = vmatpush2.msra.mxu0 0.0
    %3654 = vmatprep.subr.mxu0 0.0
    %3655 = vmatpush2.msra.mxu0 0.0
    %3656 = vmatprep.subr.mxu0 0.0
    %3657 = vmatpush2.msra.mxu0 0.0
    %3658 = vmatprep.subr.mxu0 0.0
    %3659 = vmatpush2.msra.mxu0 0.0
    %3660 = vmatprep.subr.mxu0 0.0
    %3661 = vmatpush2.msra.mxu0 0.0
    %3662 = vmatprep.subr.mxu0 0.0
    %3663 = vmatpush2.msra.mxu0 0.0
    %3664 = vmatprep.subr.mxu0 0.0
    %3665 = vmatpush2.msra.mxu0 0.0
    %3666 = vmatprep.subr.mxu0 0.0
    %3667 = vmatpush2.msra.mxu0 0.0
    %3668 = vmatprep.subr.mxu0 0.0
    %3669 = vmatpush2.msra.mxu0 0.0
    %3670 = vmatprep.subr.mxu0 0.0
    %3671 = vmatpush2.msra.mxu0 0.0
    %3672 = vmatprep.subr.mxu0 0.0
    %3673 = vmatpush2.msra.mxu0 0.0
    %3674 = vmatprep.subr.mxu0 0.0
    %3675 = vmatpush2.msra.mxu0 0.0
    %3676 = vmatprep.subr.mxu0 0.0
    %3677 = vmatpush2.msra.mxu0 0.0
    %3678 = vmatprep.subr.mxu0 0.0
    %3679 = vmatpush2.msra.mxu0 0.0
    %3680 = vmatprep.subr.mxu0 0.0
    %3681 = vmatpush2.msra.mxu0 0.0
    %3682 = vmatprep.subr.mxu0 0.0
    %3683 = vmatpush2.msra.mxu0 0.0
    %3684 = vmatprep.mubr.f32.mxu0 0.0
    %3685 = vmatmul.mubr.f32.gmra.mxu0 %v3618
    %v3686 = vpop.f32.mrf.mxu0
    %v3687 = vadd.f32 %v2786, %v3686
    %v3688 = vpop.f32.mrf.mxu0
    %3689 = vdwg.mxu0
    %v3690 = vmax.f32 %v3687, 0.0
    %v3692 = vsel %vm2272, %v3690, 0
    %3694 = vmatprep.subr.mxu0 0.0
    %3695 = vmatpush1.msra.mxu0 0.0
    %3696 = vmatprep.subr.mxu0 0.0
    %3697 = vmatpush1.msra.mxu0 0.0
    %3698 = vmatprep.subr.mxu0 0.0
    %3699 = vmatpush1.msra.mxu0 0.0
    %3700 = vmatprep.subr.mxu0 0.0
    %3701 = vmatpush1.msra.mxu0 0.0
    %3702 = vmatprep.subr.mxu0 0.0
    %3703 = vmatpush1.msra.mxu0 0.0
    %3704 = vmatprep.subr.mxu0 0.0
    %3705 = vmatpush1.msra.mxu0 0.0
    %3706 = vmatprep.subr.mxu0 0.0
    %3707 = vmatpush1.msra.mxu0 0.0
    %3708 = vmatprep.subr.mxu0 0.0
    %3709 = vmatpush1.msra.mxu0 0.0
    %3710 = vmatprep.subr.mxu0 0.0
    %3711 = vmatpush1.msra.mxu0 %v228
    %3712 = vmatprep.subr.mxu0 0.0
    %3713 = vmatpush1.msra.mxu0 %v227
    %3714 = vmatprep.subr.mxu0 0.0
    %3715 = vmatpush1.msra.mxu0 %v226
    %3716 = vmatprep.subr.mxu0 0.0
    %3717 = vmatpush1.msra.mxu0 %v225
    %3718 = vmatprep.subr.mxu0 0.0
    %3719 = vmatpush1.msra.mxu0 %v224
    %3720 = vmatprep.subr.mxu0 0.0
    %3721 = vmatpush1.msra.mxu0 %v223
    %3722 = vmatprep.subr.mxu0 0.0
    %3723 = vmatpush1.msra.mxu0 %v222
    %3724 = vmatprep.subr.mxu0 0.0
    %3725 = vmatpush1.msra.mxu0 %v221
    %3726 = vmatprep.subr.mxu0 0.0
    %3727 = vmatpush2.msra.mxu0 0.0
    %3728 = vmatprep.subr.mxu0 0.0
    %3729 = vmatpush2.msra.mxu0 0.0
    %3730 = vmatprep.subr.mxu0 0.0
    %3731 = vmatpush2.msra.mxu0 0.0
    %3732 = vmatprep.subr.mxu0 0.0
    %3733 = vmatpush2.msra.mxu0 0.0
    %3734 = vmatprep.subr.mxu0 0.0
    %3735 = vmatpush2.msra.mxu0 0.0
    %3736 = vmatprep.subr.mxu0 0.0
    %3737 = vmatpush2.msra.mxu0 0.0
    %3738 = vmatprep.subr.mxu0 0.0
    %3739 = vmatpush2.msra.mxu0 0.0
    %3740 = vmatprep.subr.mxu0 0.0
    %3741 = vmatpush2.msra.mxu0 0.0
    %3742 = vmatprep.subr.mxu0 0.0
    %3743 = vmatpush2.msra.mxu0 0.0
    %3744 = vmatprep.subr.mxu0 0.0
    %3745 = vmatpush2.msra.mxu0 0.0
    %3746 = vmatprep.subr.mxu0 0.0
    %3747 = vmatpush2.msra.mxu0 0.0
    %3748 = vmatprep.subr.mxu0 0.0
    %3749 = vmatpush2.msra.mxu0 0.0
    %3750 = vmatprep.subr.mxu0 0.0
    %3751 = vmatpush2.msra.mxu0 0.0
    %3752 = vmatprep.subr.mxu0 0.0
    %3753 = vmatpush2.msra.mxu0 0.0
    %3754 = vmatprep.subr.mxu0 0.0
    %3755 = vmatpush2.msra.mxu0 0.0
    %3756 = vmatprep.subr.mxu0 0.0
    %3757 = vmatpush2.msra.mxu0 0.0
    %3758 = vmatprep.mubr.f32.mxu0 0.0
    %3759 = vmatmul.mubr.f32.gmra.mxu0 %v3692
    %v3760 = vpop.f32.mrf.mxu0
    %v3761 = vadd.f32 %v2866, %v3760
    %v3762 = vpop.f32.mrf.mxu0
    %3763 = vdwg.mxu0
    %v3764 = vmax.f32 %v3761, 0.0
    %v3766 = vsel %vm359, %v3764, 0
    %3768 = vmatprep.subr.mxu0 0.0
    %3769 = vmatpush1.msra.mxu0 0.0
    %3770 = vmatprep.subr.mxu0 0.0
    %3771 = vmatpush1.msra.mxu0 0.0
    %3772 = vmatprep.subr.mxu0 0.0
    %3773 = vmatpush1.msra.mxu0 0.0
    %3774 = vmatprep.subr.mxu0 0.0
    %3775 = vmatpush1.msra.mxu0 0.0
    %3776 = vmatprep.subr.mxu0 0.0
    %3777 = vmatpush1.msra.mxu0 0.0
    %3778 = vmatprep.subr.mxu0 0.0
    %3779 = vmatpush1.msra.mxu0 0.0
    %3780 = vmatprep.subr.mxu0 0.0
    %3781 = vmatpush1.msra.mxu0 0.0
    %3782 = vmatprep.subr.mxu0 0.0
    %3783 = vmatpush1.msra.mxu0 0.0
    %3784 = vmatprep.subr.mxu0 0.0
    %3785 = vmatpush1.msra.mxu0 0.0
    %3786 = vmatprep.subr.mxu0 0.0
    %3787 = vmatpush1.msra.mxu0 0.0
    %3788 = vmatprep.subr.mxu0 0.0
    %3789 = vmatpush1.msra.mxu0 0.0
    %3790 = vmatprep.subr.mxu0 0.0
    %3791 = vmatpush1.msra.mxu0 0.0
    %3792 = vmatprep.subr.mxu0 0.0
    %3793 = vmatpush1.msra.mxu0 %v233
    %3794 = vmatprep.subr.mxu0 0.0
    %3795 = vmatpush1.msra.mxu0 %v232
    %3796 = vmatprep.subr.mxu0 0.0
    %3797 = vmatpush1.msra.mxu0 %v231
    %3798 = vmatprep.subr.mxu0 0.0
    %3799 = vmatpush1.msra.mxu0 %v230
    %3800 = vmatprep.subr.mxu0 0.0
    %3801 = vmatpush2.msra.mxu0 0.0
    %3802 = vmatprep.subr.mxu0 0.0
    %3803 = vmatpush2.msra.mxu0 0.0
    %3804 = vmatprep.subr.mxu0 0.0
    %3805 = vmatpush2.msra.mxu0 0.0
    %3806 = vmatprep.subr.mxu0 0.0
    %3807 = vmatpush2.msra.mxu0 0.0
    %3808 = vmatprep.subr.mxu0 0.0
    %3809 = vmatpush2.msra.mxu0 0.0
    %3810 = vmatprep.subr.mxu0 0.0
    %3811 = vmatpush2.msra.mxu0 0.0
    %3812 = vmatprep.subr.mxu0 0.0
    %3813 = vmatpush2.msra.mxu0 0.0
    %3814 = vmatprep.subr.mxu0 0.0
    %3815 = vmatpush2.msra.mxu0 0.0
    %3816 = vmatprep.subr.mxu0 0.0
    %3817 = vmatpush2.msra.mxu0 0.0
    %3818 = vmatprep.subr.mxu0 0.0
    %3819 = vmatpush2.msra.mxu0 0.0
    %3820 = vmatprep.subr.mxu0 0.0
    %3821 = vmatpush2.msra.mxu0 0.0
    %3822 = vmatprep.subr.mxu0 0.0
    %3823 = vmatpush2.msra.mxu0 0.0
    %3824 = vmatprep.subr.mxu0 0.0
    %3825 = vmatpush2.msra.mxu0 0.0
    %3826 = vmatprep.subr.mxu0 0.0
    %3827 = vmatpush2.msra.mxu0 0.0
    %3828 = vmatprep.subr.mxu0 0.0
    %3829 = vmatpush2.msra.mxu0 0.0
    %3830 = vmatprep.subr.mxu0 0.0
    %3831 = vmatpush2.msra.mxu0 0.0
    %3832 = vmatprep.mubr.f32.mxu0 0.0
    %3833 = vmatmul.mubr.f32.gmra.mxu0 %v3766
    %v3834 = vpop.f32.mrf.mxu0
    %v3835 = vadd.f32 %v2946, %v3834
    %v3836 = vpop.f32.mrf.mxu0
    %3837 = vdwg.mxu0
    %v3838 = vmax.f32 %v3835, 0.0
    %3839 = vrot.lane.b32.xlu0 %v3122, 36
    %v3840 = vpop.permute.xlu0 %3839
    %v3842 = vsel %vm273, %v3838, %v3840
    %v3844 = vsel %vm2153, %v3842, 0
    %3846 = vmatprep.subr.mxu0 0.0
    %3847 = vmatpush1.msra.mxu0 0.0
    %3848 = vmatprep.subr.mxu0 0.0
    %3849 = vmatpush1.msra.mxu0 0.0
    %3850 = vmatprep.subr.mxu0 0.0
    %3851 = vmatpush1.msra.mxu0 0.0
    %3852 = vmatprep.subr.mxu0 0.0
    %3853 = vmatpush1.msra.mxu0 0.0
    %3854 = vmatprep.subr.mxu0 0.0
    %3855 = vmatpush1.msra.mxu0 0.0
    %3856 = vmatprep.subr.mxu0 0.0
    %3857 = vmatpush1.msra.mxu0 0.0
    %3858 = vmatprep.subr.mxu0 0.0
    %3859 = vmatpush1.msra.mxu0 0.0
    %3860 = vmatprep.subr.mxu0 0.0
    %3861 = vmatpush1.msra.mxu0 0.0
    %3862 = vmatprep.subr.mxu0 0.0
    %3863 = vmatpush1.msra.mxu0 0.0
    %3864 = vmatprep.subr.mxu0 0.0
    %3865 = vmatpush1.msra.mxu0 0.0
    %3866 = vmatprep.subr.mxu0 0.0
    %3867 = vmatpush1.msra.mxu0 0.0
    %3868 = vmatprep.subr.mxu0 0.0
    %3869 = vmatpush1.msra.mxu0 %v2157
    %3870 = vmatprep.subr.mxu0 0.0
    %3871 = vmatpush1.msra.mxu0 %v253
    %3872 = vmatprep.subr.mxu0 0.0
    %3873 = vmatpush1.msra.mxu0 %v252
    %3874 = vmatprep.subr.mxu0 0.0
    %3875 = vmatpush1.msra.mxu0 %v251
    %3876 = vmatprep.subr.mxu0 0.0
    %3877 = vmatpush1.msra.mxu0 %v250
    %3878 = vmatprep.subr.mxu0 0.0
    %3879 = vmatpush2.msra.mxu0 0.0
    %3880 = vmatprep.subr.mxu0 0.0
    %3881 = vmatpush2.msra.mxu0 0.0
    %3882 = vmatprep.subr.mxu0 0.0
    %3883 = vmatpush2.msra.mxu0 0.0
    %3884 = vmatprep.subr.mxu0 0.0
    %3885 = vmatpush2.msra.mxu0 0.0
    %3886 = vmatprep.subr.mxu0 0.0
    %3887 = vmatpush2.msra.mxu0 0.0
    %3888 = vmatprep.subr.mxu0 0.0
    %3889 = vmatpush2.msra.mxu0 0.0
    %3890 = vmatprep.subr.mxu0 0.0
    %3891 = vmatpush2.msra.mxu0 0.0
    %3892 = vmatprep.subr.mxu0 0.0
    %3893 = vmatpush2.msra.mxu0 0.0
    %3894 = vmatprep.subr.mxu0 0.0
    %3895 = vmatpush2.msra.mxu0 0.0
    %3896 = vmatprep.subr.mxu0 0.0
    %3897 = vmatpush2.msra.mxu0 0.0
    %3898 = vmatprep.subr.mxu0 0.0
    %3899 = vmatpush2.msra.mxu0 0.0
    %3900 = vmatprep.subr.mxu0 0.0
    %3901 = vmatpush2.msra.mxu0 0.0
    %3902 = vmatprep.subr.mxu0 0.0
    %3903 = vmatpush2.msra.mxu0 0.0
    %3904 = vmatprep.subr.mxu0 0.0
    %3905 = vmatpush2.msra.mxu0 0.0
    %3906 = vmatprep.subr.mxu0 0.0
    %3907 = vmatpush2.msra.mxu0 0.0
    %3908 = vmatprep.subr.mxu0 0.0
    %3909 = vmatpush2.msra.mxu0 0.0
    %3910 = vmatprep.mubr.f32.mxu0 0.0
    %3911 = vmatmul.mubr.f32.gmra.mxu0 %v3844
    %v3912 = vpop.f32.mrf.mxu0
    %v3913 = vadd.f32 %v2149, %v3912
    %v3914 = vpop.f32.mrf.mxu0
    %3915 = vdwg.mxu0
    %v3916 = vxor.u32 %v3913, 2147483648
    %v3917 = vmul.f32 %v3916, 1.442695
    %v3918 = vpow.pop %v3917
    %v3919 = vadd.f32 %v3918, 1.0
    %v3920 = vrcp.pop %v3919
    %v3921 = vmul.f32 1.0, %v3920
    %v3922 = vtanh.pop %v3913
    %v3923 = vmul.f32 %v3921, %v3116
    %3925 = vrot.lane.b32.xlu0 %v3922, 64
    %v3926 = vpop.permute.xlu0 %3925
    %v3928 = vmul.f32 %v3921, %v3926
    %3930 = vrot.lane.b32.xlu0 %v3928, 32
    %v3931 = vpop.permute.xlu0 %3930
    %v3933 = vadd.f32 %v3923, %v3931
    %v3934 = vtanh.pop %v3933
    %3936 = vrot.lane.b32.xlu0 %v3934, 64
    %v3937 = vpop.permute.xlu0 %3936
    %v3939 = vmul.f32 %v3921, %v3937
    %3941 = vrot.lane.b32.xlu0 %v3939, 32
    %v3942 = vpop.permute.xlu0 %3941
    %3944 = vrot.lane.b32.xlu0 %v3227, 64
    %v3945 = vpop.permute.xlu0 %3944
    %v3947 = vsel %vm359, %v3942, %v3945
    %v3949 = vsel %vm2272, %v3947, 0
    %3951 = vmatprep.subr.mxu0 0.0
    %3952 = vmatpush1.msra.mxu0 0.0
    %3953 = vmatprep.subr.mxu0 0.0
    %3954 = vmatpush1.msra.mxu0 0.0
    %3955 = vmatprep.subr.mxu0 0.0
    %3956 = vmatpush1.msra.mxu0 0.0
    %3957 = vmatprep.subr.mxu0 0.0
    %3958 = vmatpush1.msra.mxu0 0.0
    %3959 = vmatprep.subr.mxu0 0.0
    %3960 = vmatpush1.msra.mxu0 0.0
    %3961 = vmatprep.subr.mxu0 0.0
    %3962 = vmatpush1.msra.mxu0 0.0
    %3963 = vmatprep.subr.mxu0 0.0
    %3964 = vmatpush1.msra.mxu0 0.0
    %3965 = vmatprep.subr.mxu0 0.0
    %3966 = vmatpush1.msra.mxu0 0.0
    %3967 = vmatprep.subr.mxu0 0.0
    %3968 = vmatpush1.msra.mxu0 %v263
    %3969 = vmatprep.subr.mxu0 0.0
    %3970 = vmatpush1.msra.mxu0 %v262
    %3971 = vmatprep.subr.mxu0 0.0
    %3972 = vmatpush1.msra.mxu0 %v261
    %3973 = vmatprep.subr.mxu0 0.0
    %3974 = vmatpush1.msra.mxu0 %v260
    %3975 = vmatprep.subr.mxu0 0.0
    %3976 = vmatpush1.msra.mxu0 %v259
    %3977 = vmatprep.subr.mxu0 0.0
    %3978 = vmatpush1.msra.mxu0 %v258
    %3979 = vmatprep.subr.mxu0 0.0
    %3980 = vmatpush1.msra.mxu0 %v257
    %3981 = vmatprep.subr.mxu0 0.0
    %3982 = vmatpush1.msra.mxu0 %v256
    %3983 = vmatprep.subr.mxu0 0.0
    %3984 = vmatpush2.msra.mxu0 0.0
    %3985 = vmatprep.subr.mxu0 0.0
    %3986 = vmatpush2.msra.mxu0 0.0
    %3987 = vmatprep.subr.mxu0 0.0
    %3988 = vmatpush2.msra.mxu0 0.0
    %3989 = vmatprep.subr.mxu0 0.0
    %3990 = vmatpush2.msra.mxu0 0.0
    %3991 = vmatprep.subr.mxu0 0.0
    %3992 = vmatpush2.msra.mxu0 0.0
    %3993 = vmatprep.subr.mxu0 0.0
    %3994 = vmatpush2.msra.mxu0 0.0
    %3995 = vmatprep.subr.mxu0 0.0
    %3996 = vmatpush2.msra.mxu0 0.0
    %3997 = vmatprep.subr.mxu0 0.0
    %3998 = vmatpush2.msra.mxu0 0.0
    %3999 = vmatprep.subr.mxu0 0.0
    %4000 = vmatpush2.msra.mxu0 0.0
    %4001 = vmatprep.subr.mxu0 0.0
    %4002 = vmatpush2.msra.mxu0 0.0
    %4003 = vmatprep.subr.mxu0 0.0
    %4004 = vmatpush2.msra.mxu0 0.0
    %4005 = vmatprep.subr.mxu0 0.0
    %4006 = vmatpush2.msra.mxu0 0.0
    %4007 = vmatprep.subr.mxu0 0.0
    %4008 = vmatpush2.msra.mxu0 0.0
    %4009 = vmatprep.subr.mxu0 0.0
    %4010 = vmatpush2.msra.mxu0 0.0
    %4011 = vmatprep.subr.mxu0 0.0
    %4012 = vmatpush2.msra.mxu0 0.0
    %4013 = vmatprep.subr.mxu0 0.0
    %4014 = vmatpush2.msra.mxu0 0.0
    %4015 = vmatprep.mubr.f32.mxu0 0.0
    %4016 = vmatmul.mubr.f32.gmra.mxu0 %v3949
    %v4017 = vpop.f32.mrf.mxu0
    %v4018 = vadd.f32 %v2270, %v4017
    %v4019 = vpop.f32.mrf.mxu0
    %4020 = vdwg.mxu0
    %v4021 = vxor.u32 %v4018, 2147483648
    %v4022 = vmul.f32 %v4021, 1.442695
    %v4023 = vpow.pop %v4022
    %v4024 = vadd.f32 %v4023, 1.0
    %v4025 = vrcp.pop %v4024
    %v4026 = vmul.f32 1.0, %v4025
    %v4027 = vtanh.pop %v4018
    %v4028 = vmul.f32 %v4026, %v3221
    %4030 = vrot.lane.b32.xlu0 %v4027, 64
    %v4031 = vpop.permute.xlu0 %4030
    %v4033 = vmul.f32 %v4026, %v4031
    %4035 = vrot.lane.b32.xlu0 %v4033, 32
    %v4036 = vpop.permute.xlu0 %4035
    %v4038 = vadd.f32 %v4028, %v4036
    %v4039 = vtanh.pop %v4038
    %4041 = vrot.lane.b32.xlu0 %v4039, 64
    %v4042 = vpop.permute.xlu0 %4041
    %v4044 = vmul.f32 %v4026, %v4042
    %4046 = vrot.lane.b32.xlu0 %v4044, 32
    %v4047 = vpop.permute.xlu0 %4046
    %v4048 = vsel %vm359, %v4047, 0
    %4050 = vmatprep.subr.mxu0 0.0
    %4051 = vmatpush1.msra.mxu0 0.0
    %4052 = vmatprep.subr.mxu0 0.0
    %4053 = vmatpush1.msra.mxu0 0.0
    %4054 = vmatprep.subr.mxu0 0.0
    %4055 = vmatpush1.msra.mxu0 0.0
    %4056 = vmatprep.subr.mxu0 0.0
    %4057 = vmatpush1.msra.mxu0 0.0
    %4058 = vmatprep.subr.mxu0 0.0
    %4059 = vmatpush1.msra.mxu0 0.0
    %4060 = vmatprep.subr.mxu0 0.0
    %4061 = vmatpush1.msra.mxu0 0.0
    %4062 = vmatprep.subr.mxu0 0.0
    %4063 = vmatpush1.msra.mxu0 0.0
    %4064 = vmatprep.subr.mxu0 0.0
    %4065 = vmatpush1.msra.mxu0 0.0
    %4066 = vmatprep.subr.mxu0 0.0
    %4067 = vmatpush1.msra.mxu0 0.0
    %4068 = vmatprep.subr.mxu0 0.0
    %4069 = vmatpush1.msra.mxu0 0.0
    %4070 = vmatprep.subr.mxu0 0.0
    %4071 = vmatpush1.msra.mxu0 0.0
    %4072 = vmatprep.subr.mxu0 0.0
    %4073 = vmatpush1.msra.mxu0 0.0
    %4074 = vmatprep.subr.mxu0 0.0
    %4075 = vmatpush1.msra.mxu0 %v204
    %4076 = vmatprep.subr.mxu0 0.0
    %4077 = vmatpush1.msra.mxu0 %v203
    %4078 = vmatprep.subr.mxu0 0.0
    %4079 = vmatpush1.msra.mxu0 %v202
    %4080 = vmatprep.subr.mxu0 0.0
    %4081 = vmatpush1.msra.mxu0 %v201
    %4082 = vmatprep.subr.mxu0 0.0
    %4083 = vmatpush2.msra.mxu0 0.0
    %4084 = vmatprep.subr.mxu0 0.0
    %4085 = vmatpush2.msra.mxu0 0.0
    %4086 = vmatprep.subr.mxu0 0.0
    %4087 = vmatpush2.msra.mxu0 0.0
    %4088 = vmatprep.subr.mxu0 0.0
    %4089 = vmatpush2.msra.mxu0 0.0
    %4090 = vmatprep.subr.mxu0 0.0
    %4091 = vmatpush2.msra.mxu0 0.0
    %4092 = vmatprep.subr.mxu0 0.0
    %4093 = vmatpush2.msra.mxu0 0.0
    %4094 = vmatprep.subr.mxu0 0.0
    %4095 = vmatpush2.msra.mxu0 0.0
    %4096 = vmatprep.subr.mxu0 0.0
    %4097 = vmatpush2.msra.mxu0 0.0
    %4098 = vmatprep.subr.mxu0 0.0
    %4099 = vmatpush2.msra.mxu0 0.0
    %4100 = vmatprep.subr.mxu0 0.0
    %4101 = vmatpush2.msra.mxu0 0.0
    %4102 = vmatprep.subr.mxu0 0.0
    %4103 = vmatpush2.msra.mxu0 0.0
    %4104 = vmatprep.subr.mxu0 0.0
    %4105 = vmatpush2.msra.mxu0 0.0
    %4106 = vmatprep.subr.mxu0 0.0
    %4107 = vmatpush2.msra.mxu0 0.0
    %4108 = vmatprep.subr.mxu0 0.0
    %4109 = vmatpush2.msra.mxu0 0.0
    %4110 = vmatprep.subr.mxu0 0.0
    %4111 = vmatpush2.msra.mxu0 0.0
    %4112 = vmatprep.subr.mxu0 0.0
    %4113 = vmatpush2.msra.mxu0 0.0
    %4114 = vmatprep.mubr.f32.mxu0 0.0
    %4115 = vmatmul.mubr.f32.gmra.mxu0 %v4048
    %v4116 = vpop.f32.mrf.mxu0
    %v4117 = vadd.f32 %v2377, %v4116
    %v4118 = vpop.f32.mrf.mxu0
    %4119 = vdwg.mxu0
    %vm4120 = vcmp.gt.f32.partialorder %v4117, 0.0
    %v4121 = vmul.f32 %v4117, 0.01
    %v4122 = vsel %vm4120, %v4117, %v4121
    %v4124 = vsel %vm359, %v4122, 0
    %4126 = vmatprep.subr.mxu0 0.0
    %4127 = vmatpush1.msra.mxu0 0.0
    %4128 = vmatprep.subr.mxu0 0.0
    %4129 = vmatpush1.msra.mxu0 0.0
    %4130 = vmatprep.subr.mxu0 0.0
    %4131 = vmatpush1.msra.mxu0 0.0
    %4132 = vmatprep.subr.mxu0 0.0
    %4133 = vmatpush1.msra.mxu0 0.0
    %4134 = vmatprep.subr.mxu0 0.0
    %4135 = vmatpush1.msra.mxu0 0.0
    %4136 = vmatprep.subr.mxu0 0.0
    %4137 = vmatpush1.msra.mxu0 0.0
    %4138 = vmatprep.subr.mxu0 0.0
    %4139 = vmatpush1.msra.mxu0 0.0
    %4140 = vmatprep.subr.mxu0 0.0
    %4141 = vmatpush1.msra.mxu0 0.0
    %4142 = vmatprep.subr.mxu0 0.0
    %4143 = vmatpush1.msra.mxu0 0.0
    %4144 = vmatprep.subr.mxu0 0.0
    %4145 = vmatpush1.msra.mxu0 0.0
    %4146 = vmatprep.subr.mxu0 0.0
    %4147 = vmatpush1.msra.mxu0 0.0
    %4148 = vmatprep.subr.mxu0 0.0
    %4149 = vmatpush1.msra.mxu0 0.0
    %4150 = vmatprep.subr.mxu0 0.0
    %4151 = vmatpush1.msra.mxu0 %v209
    %4152 = vmatprep.subr.mxu0 0.0
    %4153 = vmatpush1.msra.mxu0 %v208
    %4154 = vmatprep.subr.mxu0 0.0
    %4155 = vmatpush1.msra.mxu0 %v207
    %4156 = vmatprep.subr.mxu0 0.0
    %4157 = vmatpush1.msra.mxu0 %v206
    %4158 = vmatprep.subr.mxu0 0.0
    %4159 = vmatpush2.msra.mxu0 0.0
    %4160 = vmatprep.subr.mxu0 0.0
    %4161 = vmatpush2.msra.mxu0 0.0
    %4162 = vmatprep.subr.mxu0 0.0
    %4163 = vmatpush2.msra.mxu0 0.0
    %4164 = vmatprep.subr.mxu0 0.0
    %4165 = vmatpush2.msra.mxu0 0.0
    %4166 = vmatprep.subr.mxu0 0.0
    %4167 = vmatpush2.msra.mxu0 0.0
    %4168 = vmatprep.subr.mxu0 0.0
    %4169 = vmatpush2.msra.mxu0 0.0
    %4170 = vmatprep.subr.mxu0 0.0
    %4171 = vmatpush2.msra.mxu0 0.0
    %4172 = vmatprep.subr.mxu0 0.0
    %4173 = vmatpush2.msra.mxu0 0.0
    %4174 = vmatprep.subr.mxu0 0.0
    %4175 = vmatpush2.msra.mxu0 0.0
    %4176 = vmatprep.subr.mxu0 0.0
    %4177 = vmatpush2.msra.mxu0 0.0
    %4178 = vmatprep.subr.mxu0 0.0
    %4179 = vmatpush2.msra.mxu0 0.0
    %4180 = vmatprep.subr.mxu0 0.0
    %4181 = vmatpush2.msra.mxu0 0.0
    %4182 = vmatprep.subr.mxu0 0.0
    %4183 = vmatpush2.msra.mxu0 0.0
    %4184 = vmatprep.subr.mxu0 0.0
    %4185 = vmatpush2.msra.mxu0 0.0
    %4186 = vmatprep.subr.mxu0 0.0
    %4187 = vmatpush2.msra.mxu0 0.0
    %4188 = vmatprep.subr.mxu0 0.0
    %4189 = vmatpush2.msra.mxu0 0.0
    %4190 = vmatprep.mubr.f32.mxu0 0.0
    %4191 = vmatmul.mubr.f32.gmra.mxu0 %v4124
    %v4192 = vpop.f32.mrf.mxu0
    %v4193 = vadd.f32 %v2461, %v4192
    %v4194 = vpop.f32.mrf.mxu0
    %4195 = vdwg.mxu0
    %4197 = vrot.lane.b32.xlu0 %v4193, 96
    %v4198 = vpop.permute.xlu0 %4197
    %v4199 = vsel %vm359, %v4193, 0
    %v4201 = vsel %vm359, %v4198, 0
    %4203 = vmatprep.subr.mxu0 0.0
    %4204 = vmatpush1.xpose.msra.mxu0 0.0
    %4205 = vmatprep.subr.mxu0 0.0
    %4206 = vmatpush1.xpose.msra.mxu0 0.0
    %4207 = vmatprep.subr.mxu0 0.0
    %4208 = vmatpush1.xpose.msra.mxu0 0.0
    %4209 = vmatprep.subr.mxu0 0.0
    %4210 = vmatpush1.xpose.msra.mxu0 0.0
    %4211 = vmatprep.subr.mxu0 0.0
    %4212 = vmatpush1.xpose.msra.mxu0 0.0
    %4213 = vmatprep.subr.mxu0 0.0
    %4214 = vmatpush1.xpose.msra.mxu0 0.0
    %4215 = vmatprep.subr.mxu0 0.0
    %4216 = vmatpush1.xpose.msra.mxu0 0.0
    %4217 = vmatprep.subr.mxu0 0.0
    %4218 = vmatpush1.xpose.msra.mxu0 0.0
    %4219 = vmatprep.subr.mxu0 0.0
    %4220 = vmatpush1.xpose.msra.mxu0 0.0
    %4221 = vmatprep.subr.mxu0 0.0
    %4222 = vmatpush1.xpose.msra.mxu0 0.0
    %4223 = vmatprep.subr.mxu0 0.0
    %4224 = vmatpush1.xpose.msra.mxu0 0.0
    %4225 = vmatprep.subr.mxu0 0.0
    %4226 = vmatpush1.xpose.msra.mxu0 0.0
    %4227 = vmatprep.subr.mxu0 0.0
    %4228 = vmatpush1.xpose.msra.mxu0 0.0
    %4229 = vmatprep.subr.mxu0 0.0
    %4230 = vmatpush1.xpose.msra.mxu0 0.0
    %4231 = vmatprep.subr.mxu0 0.0
    %4232 = vmatpush1.xpose.msra.mxu0 0.0
    %4233 = vmatprep.subr.mxu0 0.0
    %4234 = vmatpush1.xpose.msra.mxu0 %v4201
    %4235 = vmatprep.subr.mxu0 0.0
    %4236 = vmatpush2.xpose.msra.mxu0 0.0
    %4237 = vmatprep.subr.mxu0 0.0
    %4238 = vmatpush2.xpose.msra.mxu0 0.0
    %4239 = vmatprep.subr.mxu0 0.0
    %4240 = vmatpush2.xpose.msra.mxu0 0.0
    %4241 = vmatprep.subr.mxu0 0.0
    %4242 = vmatpush2.xpose.msra.mxu0 0.0
    %4243 = vmatprep.subr.mxu0 0.0
    %4244 = vmatpush2.xpose.msra.mxu0 0.0
    %4245 = vmatprep.subr.mxu0 0.0
    %4246 = vmatpush2.xpose.msra.mxu0 0.0
    %4247 = vmatprep.subr.mxu0 0.0
    %4248 = vmatpush2.xpose.msra.mxu0 0.0
    %4249 = vmatprep.subr.mxu0 0.0
    %4250 = vmatpush2.xpose.msra.mxu0 0.0
    %4251 = vmatprep.subr.mxu0 0.0
    %4252 = vmatpush2.xpose.msra.mxu0 0.0
    %4253 = vmatprep.subr.mxu0 0.0
    %4254 = vmatpush2.xpose.msra.mxu0 0.0
    %4255 = vmatprep.subr.mxu0 0.0
    %4256 = vmatpush2.xpose.msra.mxu0 0.0
    %4257 = vmatprep.subr.mxu0 0.0
    %4258 = vmatpush2.xpose.msra.mxu0 0.0
    %4259 = vmatprep.subr.mxu0 0.0
    %4260 = vmatpush2.xpose.msra.mxu0 0.0
    %4261 = vmatprep.subr.mxu0 0.0
    %4262 = vmatpush2.xpose.msra.mxu0 0.0
    %4263 = vmatprep.subr.mxu0 0.0
    %4264 = vmatpush2.xpose.msra.mxu0 0.0
    %4265 = vmatprep.subr.mxu0 0.0
    %4266 = vmatpush2.xpose.msra.mxu0 0.0
    %4267 = vmatprep.mubr.f32.mxu0 0.0
    %4268 = vmatmul.mubr.f32.gmra.mxu0 %v4199
    %v4269 = vpop.f32.mrf.mxu0
    %v4270 = vadd.f32 0.0, %v4269
    %v4271 = vpop.f32.mrf.mxu0
    %4272 = vdwg.mxu0
    %v4273 = vsel %vm2613, %v4270, -inf
    %4274 = vmax.xlane.f32.xlu0 %v4273
    %v4275 = vpop.xlane.xlu0 %4274
    %v4276 = vsub.f32 %v4270, %v4275
    %v4277 = vmul.f32 %v4276, 1.442695
    %v4278 = vpow.pop %v4277
    %v4279 = vsel %vm2613, %v4278, 0.0
    %4280 = vadd.xlane.f32.xlu0 %v4279
    %v4281 = vpop.xlane.xlu0 %4280
    %v4282 = vrcp.pop %v4281
    %v4283 = vmul.f32 %v4278, %v4282
    %4284 = vrot.lane.b32.xlu0 %v4193, 64
    %v4285 = vpop.permute.xlu0 %4284
    %v4287 = vsel %vm2627, %v4283, 0
    %v4289 = vsel %vm1202, %v4285, 0
    %4291 = vmatprep.subr.mxu0 0.0
    %4292 = vmatpush1.msra.mxu0 0.0
    %4293 = vmatprep.subr.mxu0 0.0
    %4294 = vmatpush1.msra.mxu0 0.0
    %4295 = vmatprep.subr.mxu0 0.0
    %4296 = vmatpush1.msra.mxu0 0.0
    %4297 = vmatprep.subr.mxu0 0.0
    %4298 = vmatpush1.msra.mxu0 0.0
    %4299 = vmatprep.subr.mxu0 0.0
    %4300 = vmatpush1.msra.mxu0 0.0
    %4301 = vmatprep.subr.mxu0 0.0
    %4302 = vmatpush1.msra.mxu0 0.0
    %4303 = vmatprep.subr.mxu0 0.0
    %4304 = vmatpush1.msra.mxu0 0.0
    %4305 = vmatprep.subr.mxu0 0.0
    %4306 = vmatpush1.msra.mxu0 0.0
    %4307 = vmatprep.subr.mxu0 0.0
    %4308 = vmatpush1.msra.mxu0 0.0
    %4309 = vmatprep.subr.mxu0 0.0
    %4310 = vmatpush1.msra.mxu0 0.0
    %4311 = vmatprep.subr.mxu0 0.0
    %4312 = vmatpush1.msra.mxu0 0.0
    %4313 = vmatprep.subr.mxu0 0.0
    %4314 = vmatpush1.msra.mxu0 0.0
    %4315 = vmatprep.subr.mxu0 0.0
    %4316 = vmatpush1.msra.mxu0 0.0
    %4317 = vmatprep.subr.mxu0 0.0
    %4318 = vmatpush1.msra.mxu0 0.0
    %4319 = vmatprep.subr.mxu0 0.0
    %4320 = vmatpush1.msra.mxu0 0.0
    %4321 = vmatprep.subr.mxu0 0.0
    %4322 = vmatpush1.msra.mxu0 %v4289
    %4323 = vmatprep.subr.mxu0 0.0
    %4324 = vmatpush2.msra.mxu0 0.0
    %4325 = vmatprep.subr.mxu0 0.0
    %4326 = vmatpush2.msra.mxu0 0.0
    %4327 = vmatprep.subr.mxu0 0.0
    %4328 = vmatpush2.msra.mxu0 0.0
    %4329 = vmatprep.subr.mxu0 0.0
    %4330 = vmatpush2.msra.mxu0 0.0
    %4331 = vmatprep.subr.mxu0 0.0
    %4332 = vmatpush2.msra.mxu0 0.0
    %4333 = vmatprep.subr.mxu0 0.0
    %4334 = vmatpush2.msra.mxu0 0.0
    %4335 = vmatprep.subr.mxu0 0.0
    %4336 = vmatpush2.msra.mxu0 0.0
    %4337 = vmatprep.subr.mxu0 0.0
    %4338 = vmatpush2.msra.mxu0 0.0
    %4339 = vmatprep.subr.mxu0 0.0
    %4340 = vmatpush2.msra.mxu0 0.0
    %4341 = vmatprep.subr.mxu0 0.0
    %4342 = vmatpush2.msra.mxu0 0.0
    %4343 = vmatprep.subr.mxu0 0.0
    %4344 = vmatpush2.msra.mxu0 0.0
    %4345 = vmatprep.subr.mxu0 0.0
    %4346 = vmatpush2.msra.mxu0 0.0
    %4347 = vmatprep.subr.mxu0 0.0
    %4348 = vmatpush2.msra.mxu0 0.0
    %4349 = vmatprep.subr.mxu0 0.0
    %4350 = vmatpush2.msra.mxu0 0.0
    %4351 = vmatprep.subr.mxu0 0.0
    %4352 = vmatpush2.msra.mxu0 0.0
    %4353 = vmatprep.subr.mxu0 0.0
    %4354 = vmatpush2.msra.mxu0 0.0
    %4355 = vmatprep.mubr.f32.mxu0 0.0
    %4356 = vmatmul.mubr.f32.gmra.mxu0 %v4287
    %v4357 = vpop.f32.mrf.mxu0
    %v4358 = vadd.f32 0.0, %v4357
    %v4359 = vpop.f32.mrf.mxu0
    %4360 = vdwg.mxu0
    %v4362 = vsel %vm359, %v4358, 0
    %4364 = vmatprep.subr.mxu0 0.0
    %4365 = vmatpush1.msra.mxu0 0.0
    %4366 = vmatprep.subr.mxu0 0.0
    %4367 = vmatpush1.msra.mxu0 0.0
    %4368 = vmatprep.subr.mxu0 0.0
    %4369 = vmatpush1.msra.mxu0 0.0
    %4370 = vmatprep.subr.mxu0 0.0
    %4371 = vmatpush1.msra.mxu0 0.0
    %4372 = vmatprep.subr.mxu0 0.0
    %4373 = vmatpush1.msra.mxu0 0.0
    %4374 = vmatprep.subr.mxu0 0.0
    %4375 = vmatpush1.msra.mxu0 0.0
    %4376 = vmatprep.subr.mxu0 0.0
    %4377 = vmatpush1.msra.mxu0 0.0
    %4378 = vmatprep.subr.mxu0 0.0
    %4379 = vmatpush1.msra.mxu0 0.0
    %4380 = vmatprep.subr.mxu0 0.0
    %4381 = vmatpush1.msra.mxu0 0.0
    %4382 = vmatprep.subr.mxu0 0.0
    %4383 = vmatpush1.msra.mxu0 0.0
    %4384 = vmatprep.subr.mxu0 0.0
    %4385 = vmatpush1.msra.mxu0 0.0
    %4386 = vmatprep.subr.mxu0 0.0
    %4387 = vmatpush1.msra.mxu0 0.0
    %4388 = vmatprep.subr.mxu0 0.0
    %4389 = vmatpush1.msra.mxu0 %v214
    %4390 = vmatprep.subr.mxu0 0.0
    %4391 = vmatpush1.msra.mxu0 %v213
    %4392 = vmatprep.subr.mxu0 0.0
    %4393 = vmatpush1.msra.mxu0 %v212
    %4394 = vmatprep.subr.mxu0 0.0
    %4395 = vmatpush1.msra.mxu0 %v211
    %4396 = vmatprep.subr.mxu0 0.0
    %4397 = vmatpush2.msra.mxu0 0.0
    %4398 = vmatprep.subr.mxu0 0.0
    %4399 = vmatpush2.msra.mxu0 0.0
    %4400 = vmatprep.subr.mxu0 0.0
    %4401 = vmatpush2.msra.mxu0 0.0
    %4402 = vmatprep.subr.mxu0 0.0
    %4403 = vmatpush2.msra.mxu0 0.0
    %4404 = vmatprep.subr.mxu0 0.0
    %4405 = vmatpush2.msra.mxu0 0.0
    %4406 = vmatprep.subr.mxu0 0.0
    %4407 = vmatpush2.msra.mxu0 0.0
    %4408 = vmatprep.subr.mxu0 0.0
    %4409 = vmatpush2.msra.mxu0 0.0
    %4410 = vmatprep.subr.mxu0 0.0
    %4411 = vmatpush2.msra.mxu0 0.0
    %4412 = vmatprep.subr.mxu0 0.0
    %4413 = vmatpush2.msra.mxu0 0.0
    %4414 = vmatprep.subr.mxu0 0.0
    %4415 = vmatpush2.msra.mxu0 0.0
    %4416 = vmatprep.subr.mxu0 0.0
    %4417 = vmatpush2.msra.mxu0 0.0
    %4418 = vmatprep.subr.mxu0 0.0
    %4419 = vmatpush2.msra.mxu0 0.0
    %4420 = vmatprep.subr.mxu0 0.0
    %4421 = vmatpush2.msra.mxu0 0.0
    %4422 = vmatprep.subr.mxu0 0.0
    %4423 = vmatpush2.msra.mxu0 0.0
    %4424 = vmatprep.subr.mxu0 0.0
    %4425 = vmatpush2.msra.mxu0 0.0
    %4426 = vmatprep.subr.mxu0 0.0
    %4427 = vmatpush2.msra.mxu0 0.0
    %4428 = vmatprep.mubr.f32.mxu0 0.0
    %4429 = vmatmul.mubr.f32.gmra.mxu0 %v4362
    %v4430 = vpop.f32.mrf.mxu0
    %v4431 = vadd.f32 %v2707, %v4430
    %v4432 = vpop.f32.mrf.mxu0
    %4433 = vdwg.mxu0
    %v4435 = vsel %vm359, %v4431, 0
    %4437 = vmatprep.subr.mxu0 0.0
    %4438 = vmatpush1.msra.mxu0 0.0
    %4439 = vmatprep.subr.mxu0 0.0
    %4440 = vmatpush1.msra.mxu0 0.0
    %4441 = vmatprep.subr.mxu0 0.0
    %4442 = vmatpush1.msra.mxu0 0.0
    %4443 = vmatprep.subr.mxu0 0.0
    %4444 = vmatpush1.msra.mxu0 0.0
    %4445 = vmatprep.subr.mxu0 0.0
    %4446 = vmatpush1.msra.mxu0 0.0
    %4447 = vmatprep.subr.mxu0 0.0
    %4448 = vmatpush1.msra.mxu0 0.0
    %4449 = vmatprep.subr.mxu0 0.0
    %4450 = vmatpush1.msra.mxu0 0.0
    %4451 = vmatprep.subr.mxu0 0.0
    %4452 = vmatpush1.msra.mxu0 0.0
    %4453 = vmatprep.subr.mxu0 0.0
    %4454 = vmatpush1.msra.mxu0 0.0
    %4455 = vmatprep.subr.mxu0 0.0
    %4456 = vmatpush1.msra.mxu0 0.0
    %4457 = vmatprep.subr.mxu0 0.0
    %4458 = vmatpush1.msra.mxu0 0.0
    %4459 = vmatprep.subr.mxu0 0.0
    %4460 = vmatpush1.msra.mxu0 0.0
    %4461 = vmatprep.subr.mxu0 0.0
    %4462 = vmatpush1.msra.mxu0 %v219
    %4463 = vmatprep.subr.mxu0 0.0
    %4464 = vmatpush1.msra.mxu0 %v218
    %4465 = vmatprep.subr.mxu0 0.0
    %4466 = vmatpush1.msra.mxu0 %v217
    %4467 = vmatprep.subr.mxu0 0.0
    %4468 = vmatpush1.msra.mxu0 %v216
    %4469 = vmatprep.subr.mxu0 0.0
    %4470 = vmatpush2.msra.mxu0 0.0
    %4471 = vmatprep.subr.mxu0 0.0
    %4472 = vmatpush2.msra.mxu0 0.0
    %4473 = vmatprep.subr.mxu0 0.0
    %4474 = vmatpush2.msra.mxu0 0.0
    %4475 = vmatprep.subr.mxu0 0.0
    %4476 = vmatpush2.msra.mxu0 0.0
    %4477 = vmatprep.subr.mxu0 0.0
    %4478 = vmatpush2.msra.mxu0 0.0
    %4479 = vmatprep.subr.mxu0 0.0
    %4480 = vmatpush2.msra.mxu0 0.0
    %4481 = vmatprep.subr.mxu0 0.0
    %4482 = vmatpush2.msra.mxu0 0.0
    %4483 = vmatprep.subr.mxu0 0.0
    %4484 = vmatpush2.msra.mxu0 0.0
    %4485 = vmatprep.subr.mxu0 0.0
    %4486 = vmatpush2.msra.mxu0 0.0
    %4487 = vmatprep.subr.mxu0 0.0
    %4488 = vmatpush2.msra.mxu0 0.0
    %4489 = vmatprep.subr.mxu0 0.0
    %4490 = vmatpush2.msra.mxu0 0.0
    %4491 = vmatprep.subr.mxu0 0.0
    %4492 = vmatpush2.msra.mxu0 0.0
    %4493 = vmatprep.subr.mxu0 0.0
    %4494 = vmatpush2.msra.mxu0 0.0
    %4495 = vmatprep.subr.mxu0 0.0
    %4496 = vmatpush2.msra.mxu0 0.0
    %4497 = vmatprep.subr.mxu0 0.0
    %4498 = vmatpush2.msra.mxu0 0.0
    %4499 = vmatprep.subr.mxu0 0.0
    %4500 = vmatpush2.msra.mxu0 0.0
    %4501 = vmatprep.mubr.f32.mxu0 0.0
    %4502 = vmatmul.mubr.f32.gmra.mxu0 %v4435
    %v4503 = vpop.f32.mrf.mxu0
    %v4504 = vadd.f32 %v2786, %v4503
    %v4505 = vpop.f32.mrf.mxu0
    %4506 = vdwg.mxu0
    %v4507 = vmax.f32 %v4504, 0.0
    %v4509 = vsel %vm2272, %v4507, 0
    %4511 = vmatprep.subr.mxu0 0.0
    %4512 = vmatpush1.msra.mxu0 0.0
    %4513 = vmatprep.subr.mxu0 0.0
    %4514 = vmatpush1.msra.mxu0 0.0
    %4515 = vmatprep.subr.mxu0 0.0
    %4516 = vmatpush1.msra.mxu0 0.0
    %4517 = vmatprep.subr.mxu0 0.0
    %4518 = vmatpush1.msra.mxu0 0.0
    %4519 = vmatprep.subr.mxu0 0.0
    %4520 = vmatpush1.msra.mxu0 0.0
    %4521 = vmatprep.subr.mxu0 0.0
    %4522 = vmatpush1.msra.mxu0 0.0
    %4523 = vmatprep.subr.mxu0 0.0
    %4524 = vmatpush1.msra.mxu0 0.0
    %4525 = vmatprep.subr.mxu0 0.0
    %4526 = vmatpush1.msra.mxu0 0.0
    %4527 = vmatprep.subr.mxu0 0.0
    %4528 = vmatpush1.msra.mxu0 %v228
    %4529 = vmatprep.subr.mxu0 0.0
    %4530 = vmatpush1.msra.mxu0 %v227
    %4531 = vmatprep.subr.mxu0 0.0
    %4532 = vmatpush1.msra.mxu0 %v226
    %4533 = vmatprep.subr.mxu0 0.0
    %4534 = vmatpush1.msra.mxu0 %v225
    %4535 = vmatprep.subr.mxu0 0.0
    %4536 = vmatpush1.msra.mxu0 %v224
    %4537 = vmatprep.subr.mxu0 0.0
    %4538 = vmatpush1.msra.mxu0 %v223
    %4539 = vmatprep.subr.mxu0 0.0
    %4540 = vmatpush1.msra.mxu0 %v222
    %4541 = vmatprep.subr.mxu0 0.0
    %4542 = vmatpush1.msra.mxu0 %v221
    %4543 = vmatprep.subr.mxu0 0.0
    %4544 = vmatpush2.msra.mxu0 0.0
    %4545 = vmatprep.subr.mxu0 0.0
    %4546 = vmatpush2.msra.mxu0 0.0
    %4547 = vmatprep.subr.mxu0 0.0
    %4548 = vmatpush2.msra.mxu0 0.0
    %4549 = vmatprep.subr.mxu0 0.0
    %4550 = vmatpush2.msra.mxu0 0.0
    %4551 = vmatprep.subr.mxu0 0.0
    %4552 = vmatpush2.msra.mxu0 0.0
    %4553 = vmatprep.subr.mxu0 0.0
    %4554 = vmatpush2.msra.mxu0 0.0
    %4555 = vmatprep.subr.mxu0 0.0
    %4556 = vmatpush2.msra.mxu0 0.0
    %4557 = vmatprep.subr.mxu0 0.0
    %4558 = vmatpush2.msra.mxu0 0.0
    %4559 = vmatprep.subr.mxu0 0.0
    %4560 = vmatpush2.msra.mxu0 0.0
    %4561 = vmatprep.subr.mxu0 0.0
    %4562 = vmatpush2.msra.mxu0 0.0
    %4563 = vmatprep.subr.mxu0 0.0
    %4564 = vmatpush2.msra.mxu0 0.0
    %4565 = vmatprep.subr.mxu0 0.0
    %4566 = vmatpush2.msra.mxu0 0.0
    %4567 = vmatprep.subr.mxu0 0.0
    %4568 = vmatpush2.msra.mxu0 0.0
    %4569 = vmatprep.subr.mxu0 0.0
    %4570 = vmatpush2.msra.mxu0 0.0
    %4571 = vmatprep.subr.mxu0 0.0
    %4572 = vmatpush2.msra.mxu0 0.0
    %4573 = vmatprep.subr.mxu0 0.0
    %4574 = vmatpush2.msra.mxu0 0.0
    %4575 = vmatprep.mubr.f32.mxu0 0.0
    %4576 = vmatmul.mubr.f32.gmra.mxu0 %v4509
    %v4577 = vpop.f32.mrf.mxu0
    %v4578 = vadd.f32 %v2866, %v4577
    %v4579 = vpop.f32.mrf.mxu0
    %4580 = vdwg.mxu0
    %v4581 = vmax.f32 %v4578, 0.0
    %v4583 = vsel %vm359, %v4581, 0
    %4585 = vmatprep.subr.mxu0 0.0
    %4586 = vmatpush1.msra.mxu0 0.0
    %4587 = vmatprep.subr.mxu0 0.0
    %4588 = vmatpush1.msra.mxu0 0.0
    %4589 = vmatprep.subr.mxu0 0.0
    %4590 = vmatpush1.msra.mxu0 0.0
    %4591 = vmatprep.subr.mxu0 0.0
    %4592 = vmatpush1.msra.mxu0 0.0
    %4593 = vmatprep.subr.mxu0 0.0
    %4594 = vmatpush1.msra.mxu0 0.0
    %4595 = vmatprep.subr.mxu0 0.0
    %4596 = vmatpush1.msra.mxu0 0.0
    %4597 = vmatprep.subr.mxu0 0.0
    %4598 = vmatpush1.msra.mxu0 0.0
    %4599 = vmatprep.subr.mxu0 0.0
    %4600 = vmatpush1.msra.mxu0 0.0
    %4601 = vmatprep.subr.mxu0 0.0
    %4602 = vmatpush1.msra.mxu0 0.0
    %4603 = vmatprep.subr.mxu0 0.0
    %4604 = vmatpush1.msra.mxu0 0.0
    %4605 = vmatprep.subr.mxu0 0.0
    %4606 = vmatpush1.msra.mxu0 0.0
    %4607 = vmatprep.subr.mxu0 0.0
    %4608 = vmatpush1.msra.mxu0 0.0
    %4609 = vmatprep.subr.mxu0 0.0
    %4610 = vmatpush1.msra.mxu0 %v233
    %4611 = vmatprep.subr.mxu0 0.0
    %4612 = vmatpush1.msra.mxu0 %v232
    %4613 = vmatprep.subr.mxu0 0.0
    %4614 = vmatpush1.msra.mxu0 %v231
    %4615 = vmatprep.subr.mxu0 0.0
    %4616 = vmatpush1.msra.mxu0 %v230
    %4617 = vmatprep.subr.mxu0 0.0
    %4618 = vmatpush2.msra.mxu0 0.0
    %4619 = vmatprep.subr.mxu0 0.0
    %4620 = vmatpush2.msra.mxu0 0.0
    %4621 = vmatprep.subr.mxu0 0.0
    %4622 = vmatpush2.msra.mxu0 0.0
    %4623 = vmatprep.subr.mxu0 0.0
    %4624 = vmatpush2.msra.mxu0 0.0
    %4625 = vmatprep.subr.mxu0 0.0
    %4626 = vmatpush2.msra.mxu0 0.0
    %4627 = vmatprep.subr.mxu0 0.0
    %4628 = vmatpush2.msra.mxu0 0.0
    %4629 = vmatprep.subr.mxu0 0.0
    %4630 = vmatpush2.msra.mxu0 0.0
    %4631 = vmatprep.subr.mxu0 0.0
    %4632 = vmatpush2.msra.mxu0 0.0
    %4633 = vmatprep.subr.mxu0 0.0
    %4634 = vmatpush2.msra.mxu0 0.0
    %4635 = vmatprep.subr.mxu0 0.0
    %4636 = vmatpush2.msra.mxu0 0.0
    %4637 = vmatprep.subr.mxu0 0.0
    %4638 = vmatpush2.msra.mxu0 0.0
    %4639 = vmatprep.subr.mxu0 0.0
    %4640 = vmatpush2.msra.mxu0 0.0
    %4641 = vmatprep.subr.mxu0 0.0
    %4642 = vmatpush2.msra.mxu0 0.0
    %4643 = vmatprep.subr.mxu0 0.0
    %4644 = vmatpush2.msra.mxu0 0.0
    %4645 = vmatprep.subr.mxu0 0.0
    %4646 = vmatpush2.msra.mxu0 0.0
    %4647 = vmatprep.subr.mxu0 0.0
    %4648 = vmatpush2.msra.mxu0 0.0
    %4649 = vmatprep.mubr.f32.mxu0 0.0
    %4650 = vmatmul.mubr.f32.gmra.mxu0 %v4583
    %v4651 = vpop.f32.mrf.mxu0
    %v4652 = vadd.f32 %v2946, %v4651
    %v4653 = vpop.f32.mrf.mxu0
    %4654 = vdwg.mxu0
    %v4655 = vmax.f32 %v4652, 0.0
    %4657 = vrot.lane.b32.xlu0 %v3838, 4
    %v4658 = vpop.permute.xlu0 %4657
    %4661 = vrot.lane.b32.xlu0 %v4655, 8
    %v4662 = vpop.permute.xlu0 %4661
    %v4664 = vsel %vm273, %v3021, %v4658
    %vm4665 = vcmask 64512
    %v4666 = vsel %vm4665, %v4664, %v4662
    %vm4667 = vcmask 91136
    %4668 = vst.msk [vmem:[#allocation19] sm:$0x3] %vm4667, %v4666
    // Predicated region
    $region134: #{tpu_custom_call.1} parent=1 // pred_check
      _
    $region135: #{tpu_custom_call.1} parent=1 // pred_check_branch
      %4670 = sbr.rel (0) target = $region137
    $region136: #{tpu_custom_call.1} parent=1 // pred_region
      %s4672 = ssub.s32 32, 32
      %4673 = vsyncadd [#allocation4], %s4672
      %s4675 = sshll.u32 [#allocation19], 4
      %s4676 = int_to_ptr.vmem [resolvable:$true] %s4675
      %4678 = dma.vmem_to_hbm [thread:$0]  %s4676, 32, %s23, [#allocation4]
    $region137: #{tpu_custom_call.1} parent=1 // pred_fallthru
      _
    // Predicated region
    $region138: #{tpu_custom_call.1} parent=1 // pred_check
      _
    $region139: #{tpu_custom_call.1} parent=1 // pred_check_branch
      %4680 = sbr.rel (0) target = $region141
    $region140: #{tpu_custom_call.1} parent=1 // pred_region
      %4681 = dma.done [#allocation4], 32
    $region141: #{tpu_custom_call.1} parent=1 // pred_fallthru
      _
    %4682 = vsyncpa [#allocation3], 1
    %4683 = vsyncpa [#allocation6], 1
    %4684 = vsyncpa [#allocation9], 1
    %4685 = vsyncpa [#allocation12], 1
    %4686 = vsyncpa [#allocation15], 1
    %4687 = vsyncpa [#allocation18], 1
    %4688 = vsyncpa [#allocation4], 1

</llo_original>
